<compile_context>
chip_gen: v6e
topology: v6e:2x2x1
jax: 0.10.0
libtpu: 0.0.40
codegen_flags: <defaults>
</compile_context>

<pallas_src>
import functools
import math

import jax
import jax.numpy as jnp
from jax import lax
from jax.experimental import pallas as pl
from jax.experimental.pallas import tpu as pltpu


def _round_up(x, m):
    return ((x + m - 1) // m) * m


def _cdiv(a, b):
    return (a + b - 1) // b


def _vmem_capacity_bytes():
    try:
        return int(getattr(pltpu.get_tpu_info(), "vmem_capacity_bytes", 64 * 2**20))
    except Exception:
        return 64 * 2**20


# ----------------------------------------------------------------------------
# Standalone elementwise uniform-affine fake-quantization kernel (tiled).
# Used only when the quant cannot be fused into the conv (zero_point outside
# [0, qmax], so fake_quant(0) != 0 and conv padding must stay un-quantized).
# ----------------------------------------------------------------------------
def _fake_quant_kernel(x_ref, o_ref, *, inv_delta, delta, zp, qmax):
    x = x_ref[...]
    # == (clip(round(x/d) + zp, 0, qmax) - zp) * d
    o_ref[...] = jnp.clip(jnp.round(x * inv_delta), -zp, qmax - zp) * delta


def fake_quant(x, delta, zero_point, n_levels, *, lane=512, max_rows=1024):
    orig_shape = x.shape
    flat = x.reshape(-1).astype(jnp.float32)
    n = flat.shape[0]
    n_pad = _round_up(max(n, 1), lane)
    rows = n_pad // lane
    row_block = min(max_rows, _round_up(rows, 8))
    rows_p = _round_up(rows, row_block)
    flat = jnp.pad(flat, (0, rows_p * lane - n))
    x2 = flat.reshape(rows_p, lane)

    kernel = functools.partial(
        _fake_quant_kernel,
        inv_delta=float(1.0 / delta), delta=float(delta),
        zp=float(zero_point), qmax=float(n_levels - 1))

    out = pl.pallas_call(
        kernel,
        out_shape=jax.ShapeDtypeStruct((rows_p, lane), jnp.float32),
        grid=(rows_p // row_block,),
        in_specs=[pl.BlockSpec((row_block, lane), lambda i: (i, 0))],
        out_specs=pl.BlockSpec((row_block, lane), lambda i: (i, 0)),
        compiler_params=pltpu.CompilerParams(
            dimension_semantics=("parallel",),
            vmem_limit_bytes=32 * 1024 * 1024),
    )(x2)
    return out.reshape(-1)[:n].reshape(orig_shape)


# ----------------------------------------------------------------------------
# Conv2d with the im2col fused into the kernel (tap-shift matmuls), optional
# fused activation fake-quant, bf16 MXU operands and f32 accumulation.
# ----------------------------------------------------------------------------
def _conv_taps_kernel(x_ref, w_ref, o_ref, xq_ref, *, Wp, band_rows, kh, kw,
                      n_bands, apply_quant, inv_delta, delta, zp, qmax):
    """One grid step = (image n, dense-output row band b, Cout tile c).

    x_ref  : (1, rows_total, Cin) f32  -- whole padded image, resident across b/c
    w_ref  : (kh*kw, Cin, tn)     bf16
    o_ref  : (1, band_rows, tn)   f32
    xq_ref : (band_rows+ovl, Cin) bf16 VMEM scratch (quantized/cast lhs rows)
    """
    ovl = (kh - 1) * Wp + (kw - 1)
    rows_in = band_rows + ovl
    if n_bands > 1:
        row0 = pl.multiple_of(pl.program_id(1) * band_rows, 8)
    else:
        row0 = 0

    x = x_ref[0, pl.ds(row0, rows_in), :]
    if apply_quant:
        # UniformAffineQuantizer quant->dequant, constants folded at compile time.
        # Valid on the zero padding because the caller guarantees fake_quant(0)==0.
        x = jnp.clip(jnp.round(x * inv_delta), -zp, qmax - zp) * delta
    xq_ref[...] = x.astype(jnp.bfloat16)      # quantize/cast once per step, not per tap

    acc = None
    for i in range(kh):
        for j in range(kw):
            a = xq_ref[pl.ds(i * Wp + j, band_rows), :]        # shifted tap operand
            t = jnp.dot(a, w_ref[i * kw + j],
                        preferred_element_type=jnp.float32)
            acc = t if acc is None else acc + t
    o_ref[0] = acc.astype(o_ref.dtype)


def conv2d_pallas(x, weight, bias, *, stride=1, padding=1,
                  apply_quant=False, delta=1.0, zero_point=0.0, n_levels=256):
    """Conv2d (dilation=1, groups=1).  Strided convs are computed densely and
    subsampled in the epilogue."""
    N, Cin, H, W = x.shape
    Cout, Cin_w, kh, kw = weight.shape
    assert Cin_w == Cin  # TODO(synk): groups != 1 / dilation != 1 not supported.
    s, p = int(stride), int(padding)
    Hp, Wp = H + 2 * p, W + 2 * p
    Hd, Wd = Hp - kh + 1, Wp - kw + 1            # dense (stride-1) output extent
    Ho, Wo = (Hp - kh) // s + 1, (Wp - kw) // s + 1
    assert Hd >= 1 and Wd >= 1

    # ---- Cout tiling: lane-dense; keep tn wide (lhs HBM re-reads scale with
    # Coutp/tn), shrink only when the padding waste gets large. ----
    Coutp = _round_up(Cout, 128)
    if Coutp <= 512:
        tn = Coutp
    else:
        tn = 128
        for cand in (512, 256):
            if _round_up(Cout, cand) - Cout <= max(cand // 4, int(0.15 * Cout)):
                tn = cand
                break
        Coutp = _round_up(Cout, tn)
    n_ct = Coutp // tn

    # ---- row-band tiling, gated by per-chip VMEM (v7x = 64 MiB, v5e/v6e = 128) ----
    cap = _vmem_capacity_bytes()
    budget = int(cap * 0.40)
    step = 8 // math.gcd(Wp, 8)                  # keeps band_rows % 8 == 0
    ovl = (kh - 1) * Wp + (kw - 1)
    cin_l = _round_up(Cin, 128)                  # VMEM lane padding

    def vmem_est(band_h):
        nb = _cdiv(Hd, band_h)
        rows_lhs = (nb * band_h + kh - 1 + (1 if kw > 1 else 0)) * Wp
        band_rows_ = band_h * Wp
        lhs = _round_up(rows_lhs, 8) * cin_l * 4 * 2           # f32, double-buffered
        wgt = kh * kw * _round_up(Cin, 8) * tn * 2 * 2         # bf16
        outb = _round_up(band_rows_, 8) * tn * 4 * 2           # f32
        tmp = 2 * band_rows_ * tn * 4 + (band_rows_ + ovl) * cin_l * 6
        return lhs + wgt + outb + tmp

    band_h = Hd
    while band_h > step and vmem_est(band_h) > budget:
        band_h = max(step, _round_up(band_h // 2, step))
    # v7x megacore: keep >= 2 parallel grid points so both TensorCores get work.
    if N * n_ct * _cdiv(Hd, band_h) < 2 and Hd >= 2 * step:
        band_h = _round_up(_cdiv(Hd, 2), step)
    if _cdiv(Hd, band_h) > 1:
        band_h = _round_up(band_h, step)
    n_bands = _cdiv(Hd, band_h)
    Hd_pad = n_bands * band_h
    band_rows = band_h * Wp
    # TODO(synk): very large single images (lhs block > VMEM budget) would need
    # manual DMA row-windows; not required for the shapes exercised here.

    # ---- prologue: one NCHW->NHWC transpose + spatial zero-pad (NO im2col) ----
    extra = (Hd_pad - Hd) + (1 if kw > 1 else 0)  # keeps all tap reads in-bounds
    xh = jnp.transpose(x.astype(jnp.float32), (0, 2, 3, 1))
    xp = jnp.pad(xh, ((0, 0), (p, p + extra), (p, p), (0, 0)))
    rows_total = (Hp + extra) * Wp
    xflat = xp.reshape(N, rows_total, Cin)        # free reshape (contiguous)

    # weight OIHW -> (kh*kw, Cin, Coutp) in bf16 (MXU operands), tap-major K order.
    wt = jnp.transpose(weight.astype(jnp.float32), (2, 3, 1, 0)).reshape(kh * kw, Cin, Cout)
    wt = jnp.pad(wt, ((0, 0), (0, 0), (0, Coutp - Cout))).astype(jnp.bfloat16)

    kernel = functools.partial(
        _conv_taps_kernel, Wp=Wp, band_rows=band_rows, kh=kh, kw=kw,
        n_bands=n_bands, apply_quant=apply_quant,
        inv_delta=float(1.0 / delta), delta=float(delta),
        zp=float(zero_point), qmax=float(n_levels - 1))

    out = pl.pallas_call(
        kernel,
        out_shape=jax.ShapeDtypeStruct((N, Hd_pad * Wp, Coutp), jnp.float32),
        grid=(N, n_bands, n_ct),
        in_specs=[
            pl.BlockSpec((1, rows_total, Cin), lambda n, b, c: (n, 0, 0)),
            pl.BlockSpec((kh * kw, Cin, tn), lambda n, b, c: (0, 0, c)),
        ],
        out_specs=pl.BlockSpec((1, band_rows, tn), lambda n, b, c: (n, b, c)),
        scratch_shapes=[pltpu.VMEM((band_rows + ovl, Cin), jnp.bfloat16)],
        compiler_params=pltpu.CompilerParams(
            dimension_semantics=("parallel", "parallel", "parallel"),
            vmem_limit_bytes=int(min(cap * 0.75, 100 * 2**20))),
    )(xflat, wt)

    # ---- epilogue (one fused XLA pass): crop garbage columns / padded rows,
    # subsample for stride, add bias, NHWC -> NCHW. ----
    out = out.reshape(N, Hd_pad, Wp, Coutp)
    out = out[:, :(Ho - 1) * s + 1:s, :(Wo - 1) * s + 1:s, :Cout]
    out = out + bias.astype(jnp.float32).reshape(1, 1, 1, Cout)
    # TODO(synk): callers that can consume NHWC could skip both layout transposes.
    return jnp.transpose(out, (0, 3, 1, 2))


def _forward_impl(x, weight, bias, *, stride, padding, quant_mode,
                  delta, zero_point, n_levels):
    # quant_mode: 0 = no act fake-quant
    #             1 = fake-quant fused into the conv kernel (fake_quant(0)==0)
    #             2 = standalone pre-pass (zp outside [0, qmax]: conv zero-padding
    #                 must stay un-quantized, matching PyTorch)
    if quant_mode == 2:
        x = fake_quant(x, delta, zero_point, n_levels)
    return conv2d_pallas(x, weight, bias, stride=stride, padding=padding,
                         apply_quant=(quant_mode == 1), delta=delta,
                         zero_point=zero_point, n_levels=n_levels)


# ----------------------------------------------------------------------------
# QuantModule equivalent
# ----------------------------------------------------------------------------
class QuantModulePallas:
    """Pallas analogue of QuantModule wrapping an nn.Conv2d."""

    def __init__(self, weight, bias, n_bits=8, stride=1, padding=1,
                 disable_act_quant=False):
        self.org_weight = jnp.asarray(weight, jnp.float32)
        Cout = self.org_weight.shape[0]
        self.org_bias = (jnp.zeros((Cout,), jnp.float32) if bias is None
                         else jnp.asarray(bias, jnp.float32))
        self.stride = int(stride)
        self.padding = int(padding)
        self.n_bits = n_bits
        self.n_levels = 2 ** n_bits            # asymmetric quantizer
        self.use_weight_quant = False          # reference forward always uses org_weight
        self.use_act_quant = False
        self.disable_act_quant = disable_act_quant
        self._act_inited = False
        self._delta = None
        self._zp = None
        self._fwd = None
        self._fwd_key = None
        # TODO(synk): dilation/groups, Conv1d/Linear fwd_func variants, the split!=0
        # dual act-quantizer path, se_module, leaf_param EMA calibration and the
        # 'mse' scale search are not exercised here.

    def set_quant_state(self, weight_quant=False, act_quant=False):
        self.use_weight_quant = weight_quant
        self.use_act_quant = act_quant

    def _init_act_scale(self, x):
        # UniformAffineQuantizer.init_quantization_scale, scale_method='max',
        # symmetric=False, channel_wise=False, always_zero=False.  Exactly like
        # the reference: delta from the RAW min/max (x.max().item()-x.min().item()),
        # zero_point from the zero-clamped x_min.  Single host round trip.
        stats = jax.device_get(jnp.stack([jnp.min(x), jnp.max(x)]))
        x_min_raw, x_max_raw = float(stats[0]), float(stats[1])
        x_min = min(x_min_raw, 0.0)
        delta = (x_max_raw - x_min_raw) / (self.n_levels - 1)
        if delta < 1e-8:
            delta = 1e-8
        self._delta = float(delta)
        self._zp = float(round(-x_min / delta))
        self._act_inited = True

    def __call__(self, x):
        do_quant = (not self.disable_act_quant) and self.use_act_quant
        if do_quant and not self._act_inited:
            self._init_act_scale(x)
        if do_quant:
            # fake_quant(0)==0 iff 0 <= zp <= n_levels-1: quantization then commutes
            # with the conv's spatial zero-padding and may be fused into the kernel.
            quant_mode = 1 if 0.0 <= self._zp <= self.n_levels - 1 else 2
            delta, zp = self._delta, self._zp
        else:
            quant_mode, delta, zp = 0, 1.0, 0.0

        key = (quant_mode, delta, zp)
        if self._fwd is None or self._fwd_key != key:
            self._fwd = jax.jit(functools.partial(
                _forward_impl, stride=self.stride, padding=self.padding,
                quant_mode=quant_mode, delta=delta, zero_point=zp,
                n_levels=self.n_levels))
            self._fwd_key = key

        out = self._fwd(x, self.org_weight, self.org_bias)
        # StraightThrough activation == identity; no se_module.
        return out


if __name__ == "__main__":
    key = jax.random.PRNGKey(0)
    k1, k2, k3 = jax.random.split(key, 3)

    N, Cin, H, W = 2, 4, 16, 16
    Cout, kh, kw = 8, 3, 3

    x = jax.random.normal(k1, (N, Cin, H, W), jnp.float32)
    weight = jax.random.normal(k2, (Cout, Cin, kh, kw), jnp.float32) * 0.1
    bias = jax.random.normal(k3, (Cout,), jnp.float32) * 0.1

    # ---- act-quant enabled, stride 1 (fused quant path) ----
    mod = QuantModulePallas(weight, bias, n_bits=8, stride=1, padding=1)
    mod.set_quant_state(weight_quant=False, act_quant=True)
    out = jax.block_until_ready(mod(x))
    assert out.shape == (N, Cout, H, W), out.shape

    d, zp = mod._delta, mod._zp
    inv_d = 1.0 / d
    xq = (jnp.clip(jnp.round(x * inv_d) + zp, 0.0, mod.n_levels - 1.0) - zp) * d

    # Reference matching the kernel's numerics (bf16 MXU operands, f32 accumulate).
    ref_bf16 = lax.conv_general_dilated(
        xq.astype(jnp.bfloat16), weight.astype(jnp.bfloat16), (1, 1),
        ((1, 1), (1, 1)), dimension_numbers=("NCHW", "OIHW", "NCHW"),
        preferred_element_type=jnp.float32) + bias.reshape(1, Cout, 1, 1)
    err = float(jnp.max(jnp.abs(out - ref_bf16)))
    assert err < 2e-3, err

    # Loose sanity check against the pure-f32 reference (bf16 weight cast only loss).
    ref_f32 = lax.conv_general_dilated(
        xq, weight, (1, 1), ((1, 1), (1, 1)),
        dimension_numbers=("NCHW", "OIHW", "NCHW")) + bias.reshape(1, Cout, 1, 1)
    assert float(jnp.max(jnp.abs(out - ref_f32))) < 5e-2

    # Standalone tiled fake-quant kernel (mode-2 path).
    fq = jax.block_until_ready(fake_quant(x, d, zp, mod.n_levels))
    assert float(jnp.max(jnp.abs(fq - xq))) < 1e-6

    # Second call reuses the cached jitted forward (no retrace / recalibration).
    out2 = jax.block_until_ready(mod(x))
    assert float(jnp.max(jnp.abs(out2 - out))) < 1e-6

    # ---- no act-quant, stride 2 (dense-compute + subsample epilogue path) ----
    mod2 = QuantModulePallas(weight, bias, n_bits=8, stride=2, padding=1)
    out_s2 = jax.block_until_ready(mod2(x))
    Ho2 = (H + 2 - kh) // 2 + 1
    assert out_s2.shape == (N, Cout, Ho2, Ho2), out_s2.shape
    ref_s2 = lax.conv_general_dilated(
        x.astype(jnp.bfloat16), weight.astype(jnp.bfloat16), (2, 2),
        ((1, 1), (1, 1)), dimension_numbers=("NCHW", "OIHW", "NCHW"),
        preferred_element_type=jnp.float32) + bias.reshape(1, Cout, 1, 1)
    assert float(jnp.max(jnp.abs(out_s2 - ref_s2))) < 2e-3

    print("KERNEL_OK")
</pallas_src>

<mosaic_0001>
module attributes {stable_mosaic.version = 11 : i64} {
  func.func @_conv_taps_kernel(%arg0: i32, %arg1: i32, %arg2: i32, %arg3: memref<1x342x4xf32, #tpu.memory_space<vmem>>, %arg4: memref<9x4x128xbf16, #tpu.memory_space<vmem>>, %arg5: memref<1x288x128xf32, #tpu.memory_space<vmem>>, %arg6: memref<326x4xbf16, #tpu.memory_space<vmem>>) attributes {dimension_semantics = [#tpu.dimension_semantics<parallel>, #tpu.dimension_semantics<parallel>, #tpu.dimension_semantics<parallel>], iteration_bounds = array<i64: 2, 1, 1>, scalar_prefetch = 0 : i64, scratch_operands = 1 : i64, tpu.core_type = #tpu.core_type<tc>, window_params = [{transform_indices = @transform_0, window_bounds = array<i64: 1, 342, 4>}, {transform_indices = @transform_1, window_bounds = array<i64: 9, 4, 128>}, {transform_indices = @transform_2, window_bounds = array<i64: 1, 288, 128>}]} {
    %c0 = arith.constant 0 : index
    %c0_0 = arith.constant 0 : index
    %c0_1 = arith.constant 0 : index
    %0 = vector.load %arg3[%c0, %c0_0, %c0_1] : memref<1x342x4xf32, #tpu.memory_space<vmem>>, vector<1x326x4xf32>
    %1 = vector.shape_cast %0 : vector<1x326x4xf32> to vector<326x4xf32>
    %cst = arith.constant 39.4981422 : f32
    %2 = vector.broadcast %cst : f32 to vector<326x4xf32>
    %3 = arith.mulf %1, %2 : vector<326x4xf32>
    %4 = math.roundeven %3 : vector<326x4xf32>
    %cst_2 = arith.constant -1.240000e+02 : f32
    %cst_3 = arith.constant 1.310000e+02 : f32
    %5 = vector.broadcast %cst_2 : f32 to vector<326x4xf32>
    %6 = arith.maximumf %5, %4 : vector<326x4xf32>
    %7 = vector.broadcast %cst_3 : f32 to vector<326x4xf32>
    %8 = arith.minimumf %7, %6 : vector<326x4xf32>
    %cst_4 = arith.constant 0.0253176466 : f32
    %9 = vector.broadcast %cst_4 : f32 to vector<326x4xf32>
    %10 = arith.mulf %8, %9 : vector<326x4xf32>
    %11 = arith.truncf %10 : vector<326x4xf32> to vector<326x4xbf16>
    %c0_5 = arith.constant 0 : index
    %c0_6 = arith.constant 0 : index
    %12 = vector.load %arg6[%c0_5, %c0_6] : memref<326x4xbf16, #tpu.memory_space<vmem>>, vector<326x4xbf16>
    tpu.vector_store %arg6[%c0_5, %c0_6], %11 {strides = array<i32>} : memref<326x4xbf16, #tpu.memory_space<vmem>>, vector<326x4xbf16>,
    %c0_7 = arith.constant 0 : index
    %c0_8 = arith.constant 0 : index
    %13 = vector.load %arg6[%c0_7, %c0_8] : memref<326x4xbf16, #tpu.memory_space<vmem>>, vector<288x4xbf16>
    %c0_9 = arith.constant 0 : index
    %c0_10 = arith.constant 0 : index
    %c0_11 = arith.constant 0 : index
    %14 = vector.load %arg4[%c0_9, %c0_10, %c0_11] : memref<9x4x128xbf16, #tpu.memory_space<vmem>>, vector<1x4x128xbf16>
    %15 = vector.shape_cast %14 : vector<1x4x128xbf16> to vector<4x128xbf16>
    %cst_12 = arith.constant dense<0.000000e+00> : vector<288x128xf32>
    %16 = tpu.matmul %13, %15, %cst_12 {dimension_numbers = #tpu.dot_dimension_numbers<[1], [0], [0], [1], [0, 0, 1, 1], [], []>} : vector<288x4xbf16>, vector<4x128xbf16>, vector<288x128xf32> -> vector<288x128xf32>
    %c1 = arith.constant 1 : index
    %c0_13 = arith.constant 0 : index
    %17 = vector.load %arg6[%c1, %c0_13] : memref<326x4xbf16, #tpu.memory_space<vmem>>, vector<288x4xbf16>
    %c1_14 = arith.constant 1 : index
    %c0_15 = arith.constant 0 : index
    %c0_16 = arith.constant 0 : index
    %18 = vector.load %arg4[%c1_14, %c0_15, %c0_16] : memref<9x4x128xbf16, #tpu.memory_space<vmem>>, vector<1x4x128xbf16>
    %19 = vector.shape_cast %18 : vector<1x4x128xbf16> to vector<4x128xbf16>
    %cst_17 = arith.constant dense<0.000000e+00> : vector<288x128xf32>
    %20 = tpu.matmul %17, %19, %cst_17 {dimension_numbers = #tpu.dot_dimension_numbers<[1], [0], [0], [1], [0, 0, 1, 1], [], []>} : vector<288x4xbf16>, vector<4x128xbf16>, vector<288x128xf32> -> vector<288x128xf32>
    %21 = arith.addf %16, %20 : vector<288x128xf32>
    %c2 = arith.constant 2 : index
    %c0_18 = arith.constant 0 : index
    %22 = vector.load %arg6[%c2, %c0_18] : memref<326x4xbf16, #tpu.memory_space<vmem>>, vector<288x4xbf16>
    %c2_19 = arith.constant 2 : index
    %c0_20 = arith.constant 0 : index
    %c0_21 = arith.constant 0 : index
    %23 = vector.load %arg4[%c2_19, %c0_20, %c0_21] : memref<9x4x128xbf16, #tpu.memory_space<vmem>>, vector<1x4x128xbf16>
    %24 = vector.shape_cast %23 : vector<1x4x128xbf16> to vector<4x128xbf16>
    %cst_22 = arith.constant dense<0.000000e+00> : vector<288x128xf32>
    %25 = tpu.matmul %22, %24, %cst_22 {dimension_numbers = #tpu.dot_dimension_numbers<[1], [0], [0], [1], [0, 0, 1, 1], [], []>} : vector<288x4xbf16>, vector<4x128xbf16>, vector<288x128xf32> -> vector<288x128xf32>
    %26 = arith.addf %21, %25 : vector<288x128xf32>
    %c18 = arith.constant 18 : index
    %c0_23 = arith.constant 0 : index
    %27 = vector.load %arg6[%c18, %c0_23] : memref<326x4xbf16, #tpu.memory_space<vmem>>, vector<288x4xbf16>
    %c3 = arith.constant 3 : index
    %c0_24 = arith.constant 0 : index
    %c0_25 = arith.constant 0 : index
    %28 = vector.load %arg4[%c3, %c0_24, %c0_25] : memref<9x4x128xbf16, #tpu.memory_space<vmem>>, vector<1x4x128xbf16>
    %29 = vector.shape_cast %28 : vector<1x4x128xbf16> to vector<4x128xbf16>
    %cst_26 = arith.constant dense<0.000000e+00> : vector<288x128xf32>
    %30 = tpu.matmul %27, %29, %cst_26 {dimension_numbers = #tpu.dot_dimension_numbers<[1], [0], [0], [1], [0, 0, 1, 1], [], []>} : vector<288x4xbf16>, vector<4x128xbf16>, vector<288x128xf32> -> vector<288x128xf32>
    %31 = arith.addf %26, %30 : vector<288x128xf32>
    %c19 = arith.constant 19 : index
    %c0_27 = arith.constant 0 : index
    %32 = vector.load %arg6[%c19, %c0_27] : memref<326x4xbf16, #tpu.memory_space<vmem>>, vector<288x4xbf16>
    %c4 = arith.constant 4 : index
    %c0_28 = arith.constant 0 : index
    %c0_29 = arith.constant 0 : index
    %33 = vector.load %arg4[%c4, %c0_28, %c0_29] : memref<9x4x128xbf16, #tpu.memory_space<vmem>>, vector<1x4x128xbf16>
    %34 = vector.shape_cast %33 : vector<1x4x128xbf16> to vector<4x128xbf16>
    %cst_30 = arith.constant dense<0.000000e+00> : vector<288x128xf32>
    %35 = tpu.matmul %32, %34, %cst_30 {dimension_numbers = #tpu.dot_dimension_numbers<[1], [0], [0], [1], [0, 0, 1, 1], [], []>} : vector<288x4xbf16>, vector<4x128xbf16>, vector<288x128xf32> -> vector<288x128xf32>
    %36 = arith.addf %31, %35 : vector<288x128xf32>
    %c20 = arith.constant 20 : index
    %c0_31 = arith.constant 0 : index
    %37 = vector.load %arg6[%c20, %c0_31] : memref<326x4xbf16, #tpu.memory_space<vmem>>, vector<288x4xbf16>
    %c5 = arith.constant 5 : index
    %c0_32 = arith.constant 0 : index
    %c0_33 = arith.constant 0 : index
    %38 = vector.load %arg4[%c5, %c0_32, %c0_33] : memref<9x4x128xbf16, #tpu.memory_space<vmem>>, vector<1x4x128xbf16>
    %39 = vector.shape_cast %38 : vector<1x4x128xbf16> to vector<4x128xbf16>
    %cst_34 = arith.constant dense<0.000000e+00> : vector<288x128xf32>
    %40 = tpu.matmul %37, %39, %cst_34 {dimension_numbers = #tpu.dot_dimension_numbers<[1], [0], [0], [1], [0, 0, 1, 1], [], []>} : vector<288x4xbf16>, vector<4x128xbf16>, vector<288x128xf32> -> vector<288x128xf32>
    %41 = arith.addf %36, %40 : vector<288x128xf32>
    %c36 = arith.constant 36 : index
    %c0_35 = arith.constant 0 : index
    %42 = vector.load %arg6[%c36, %c0_35] : memref<326x4xbf16, #tpu.memory_space<vmem>>, vector<288x4xbf16>
    %c6 = arith.constant 6 : index
    %c0_36 = arith.constant 0 : index
    %c0_37 = arith.constant 0 : index
    %43 = vector.load %arg4[%c6, %c0_36, %c0_37] : memref<9x4x128xbf16, #tpu.memory_space<vmem>>, vector<1x4x128xbf16>
    %44 = vector.shape_cast %43 : vector<1x4x128xbf16> to vector<4x128xbf16>
    %cst_38 = arith.constant dense<0.000000e+00> : vector<288x128xf32>
    %45 = tpu.matmul %42, %44, %cst_38 {dimension_numbers = #tpu.dot_dimension_numbers<[1], [0], [0], [1], [0, 0, 1, 1], [], []>} : vector<288x4xbf16>, vector<4x128xbf16>, vector<288x128xf32> -> vector<288x128xf32>
    %46 = arith.addf %41, %45 : vector<288x128xf32>
    %c37 = arith.constant 37 : index
    %c0_39 = arith.constant 0 : index
    %47 = vector.load %arg6[%c37, %c0_39] : memref<326x4xbf16, #tpu.memory_space<vmem>>, vector<288x4xbf16>
    %c7 = arith.constant 7 : index
    %c0_40 = arith.constant 0 : index
    %c0_41 = arith.constant 0 : index
    %48 = vector.load %arg4[%c7, %c0_40, %c0_41] : memref<9x4x128xbf16, #tpu.memory_space<vmem>>, vector<1x4x128xbf16>
    %49 = vector.shape_cast %48 : vector<1x4x128xbf16> to vector<4x128xbf16>
    %cst_42 = arith.constant dense<0.000000e+00> : vector<288x128xf32>
    %50 = tpu.matmul %47, %49, %cst_42 {dimension_numbers = #tpu.dot_dimension_numbers<[1], [0], [0], [1], [0, 0, 1, 1], [], []>} : vector<288x4xbf16>, vector<4x128xbf16>, vector<288x128xf32> -> vector<288x128xf32>
    %51 = arith.addf %46, %50 : vector<288x128xf32>
    %c38 = arith.constant 38 : index
    %c0_43 = arith.constant 0 : index
    %52 = vector.load %arg6[%c38, %c0_43] : memref<326x4xbf16, #tpu.memory_space<vmem>>, vector<288x4xbf16>
    %c8 = arith.constant 8 : index
    %c0_44 = arith.constant 0 : index
    %c0_45 = arith.constant 0 : index
    %53 = vector.load %arg4[%c8, %c0_44, %c0_45] : memref<9x4x128xbf16, #tpu.memory_space<vmem>>, vector<1x4x128xbf16>
    %54 = vector.shape_cast %53 : vector<1x4x128xbf16> to vector<4x128xbf16>
    %cst_46 = arith.constant dense<0.000000e+00> : vector<288x128xf32>
    %55 = tpu.matmul %52, %54, %cst_46 {dimension_numbers = #tpu.dot_dimension_numbers<[1], [0], [0], [1], [0, 0, 1, 1], [], []>} : vector<288x4xbf16>, vector<4x128xbf16>, vector<288x128xf32> -> vector<288x128xf32>
    %56 = arith.addf %51, %55 : vector<288x128xf32>
    %c0_47 = arith.constant 0 : index
    %c0_48 = arith.constant 0 : index
    %c0_49 = arith.constant 0 : index
    %57 = vector.load %arg5[%c0_47, %c0_48, %c0_49] : memref<1x288x128xf32, #tpu.memory_space<vmem>>, vector<1x288x128xf32>
    %58 = vector.shape_cast %57 : vector<1x288x128xf32> to vector<288x128xf32>
    %59 = vector.shape_cast %56 : vector<288x128xf32> to vector<1x288x128xf32>
    tpu.vector_store %arg5[%c0_47, %c0_48, %c0_49], %59 {strides = array<i32>} : memref<1x288x128xf32, #tpu.memory_space<vmem>>, vector<1x288x128xf32>,
    return
  }
  func.func @transform_0(%arg0: i32, %arg1: i32, %arg2: i32) -> (i32, i32, i32) {
    %c0_i32 = arith.constant 0 : i32
    %c0_i32_0 = arith.constant 0 : i32
    %c0_i32_1 = arith.constant 0 : i32
    return %arg0, %c0_i32, %c0_i32_0 : i32, i32, i32
  }
  func.func @transform_1(%arg0: i32, %arg1: i32, %arg2: i32) -> (i32, i32, i32) {
    %c0_i32 = arith.constant 0 : i32
    %c0_i32_0 = arith.constant 0 : i32
    %c0_i32_1 = arith.constant 0 : i32
    return %c0_i32, %c0_i32_0, %arg2 : i32, i32, i32
  }
  func.func @transform_2(%arg0: i32, %arg1: i32, %arg2: i32) -> (i32, i32, i32) {
    %c0_i32 = arith.constant 0 : i32
    return %arg0, %arg1, %arg2 : i32, i32, i32
  }
}

</mosaic_0001>

<llo_original>
// kernel: _forward_impl.1
$region0: #{_forward_impl.1}
  #allocation0 [shape = 'u32[]', space=smem, size = 0x4, offset = 0x4, fixed_abs, tag = 'smem constant byte address 0x4 - core index']
  #allocation1 [shape = 'u32[144,128]{1,0:T(1,128)}', space=vmem, size = 0x12000, scoped, tag = 'internal scratch']
  #allocation2 [shape = 'bf16[326,4]{1,0:T(8,128)(2,1)}', space=vmem, size = 0x14800, scoped, tag = 'scratch operand']
  %s0 = inlined_call_operand.vmem [shape: f32[2,342,4], index: 0, kind: input, shape index: {}]
  %s1 = inlined_call_operand.vmem [shape: bf16[9,4,128], index: 1, kind: input, shape index: {}]
  %s2 = inlined_call_operand.vmem [shape: f32[2,288,128], index: 2, kind: output, shape index: {}]
  %s3 = sld [smem:[#allocation0]]
  $region41: #{_forward_impl.1} parent=0
    _
  %s5 = ssub.s32 1, %s3
  %s6 = scalar_select 0, %s5, %s3
  loop: start=0, step=1, limit=4
  $region2: #{_forward_impl.1} parent=0 // loop_pre_header
    _
  $region3: #{_forward_impl.1} parent=0 // loop_header
    %s8 = sphi 0, %s12
    %p9 = scmp.ge.s32.totalorder %s8, 4
    %s15 = sphi 0, %s34
    %s16 = sphi 0, %s30
    %s17 = sphi 0, %s26
    %s18 = sphi 0, %s15
    %s19 = sphi 0, %s16
    %s20 = sphi 0, %s17
    %s21 = sphi 0, %s18
    %s22 = sphi 0, %s19
    %s23 = sphi 0, %s20
    %s37 = sphi 0, %s39
    %s40 = sphi 0, %s37
    %s41 = sphi 0, %s40
    %s57 = sphi 0, %s41
    %s63 = sphi 0, %s65
    %s66 = sphi 0, %s63
    %s67 = sphi 0, %s66
    %s83 = sphi 0, %s67
    %s93 = sphi 0, %s95
    %s96 = sphi 0, %s93
    %s97 = sphi 0, %s96
    %s113 = sphi 0, %s97
  $region4: #{_forward_impl.1} parent=0 // loop_header_branch
    %11 = sbr.rel (%p9) target = $region8
  $region5: #{_forward_impl.1} parent=0 // loop_body
    %s13 = ssub.s32 %s8, 1
    %s14 = ssub.s32 %s8, 2
    %s24 = sadd.s32 1, %s17
    %p25 = scmp.ge.s32.totalorder %s24, 1
    %s26 = scalar_select %p25, 0, %s24
    %s27 = sadd.s32 1, %s16
    %s28 = scalar_select %p25, %s27, %s16
    %p29 = scmp.ge.s32.totalorder %s28, 1
    %s30 = scalar_select %p29, 0, %s28
    %s31 = sadd.s32 1, %s15
    %s32 = scalar_select %p29, %s31, %s15
    %p33 = scmp.ge.s32.totalorder %s32, 2
    %s34 = scalar_select %p33, 0, %s32
    %s35 = ssub.s32 %s15, %s34
    %p36 = scmp.eq.s32.totalorder %s35, 0
    %s38 = sadd.s32 %s37, 1
    %s39 = scalar_select %p36, %s37, %s38
    %p42 = pneg %p36
    %p43 = scmp.eq.s32.totalorder %s8, 1
    %p44 = por %p42, %p43
    %p45 = scmp.ne.s32.totalorder %s37, %s40
    %p46 = scmp.eq.s32.totalorder %s8, 0
    %p47 = por %p45, %p46
    %p48 = scmp.ne.s32.totalorder %s37, %s40
    %p49 = scmp.eq.s32.totalorder %s13, 1
    %p50 = por %p48, %p49
    %p51 = scmp.ne.s32.totalorder %s40, %s41
    %p52 = scmp.eq.s32.totalorder %s13, 0
    %p53 = por %p51, %p52
    %p54 = scmp.ne.s32.totalorder %s40, %s41
    %p55 = scmp.eq.s32.totalorder %s14, 1
    %p56 = por %p54, %p55
    %p58 = scmp.ne.s32.totalorder %s41, %s57
    %p59 = scmp.eq.s32.totalorder %s14, 0
    %p60 = por %p58, %p59
    %s61 = ssub.s32 %s17, %s26
    %p62 = scmp.eq.s32.totalorder %s61, 0
    %s64 = sadd.s32 %s63, 1
    %s65 = scalar_select %p62, %s63, %s64
    %p68 = pneg %p62
    %p69 = scmp.eq.s32.totalorder %s8, 1
    %p70 = por %p68, %p69
    %p71 = scmp.ne.s32.totalorder %s63, %s66
    %p72 = scmp.eq.s32.totalorder %s8, 0
    %p73 = por %p71, %p72
    %p74 = scmp.ne.s32.totalorder %s63, %s66
    %p75 = scmp.eq.s32.totalorder %s13, 1
    %p76 = por %p74, %p75
    %p77 = scmp.ne.s32.totalorder %s66, %s67
    %p78 = scmp.eq.s32.totalorder %s13, 0
    %p79 = por %p77, %p78
    %p80 = scmp.ne.s32.totalorder %s66, %s67
    %p81 = scmp.eq.s32.totalorder %s14, 1
    %p82 = por %p80, %p81
    %p84 = scmp.ne.s32.totalorder %s67, %s83
    %p85 = scmp.eq.s32.totalorder %s14, 0
    %p86 = por %p84, %p85
    %s87 = ssub.s32 %s15, %s34
    %s88 = ssub.s32 %s16, %s30
    %s89 = sor.u32 %s87, %s88
    %s90 = ssub.s32 %s17, %s26
    %s91 = sor.u32 %s89, %s90
    %p92 = scmp.eq.s32.totalorder %s91, 0
    %s94 = sadd.s32 %s93, 1
    %s95 = scalar_select %p92, %s93, %s94
    %p98 = pneg %p92
    %p99 = scmp.eq.s32.totalorder %s8, 1
    %p100 = por %p98, %p99
    %p101 = scmp.ne.s32.totalorder %s93, %s96
    %p102 = scmp.eq.s32.totalorder %s8, 0
    %p103 = por %p101, %p102
    %p104 = scmp.ne.s32.totalorder %s93, %s96
    %p105 = scmp.eq.s32.totalorder %s13, 1
    %p106 = por %p104, %p105
    %p107 = scmp.ne.s32.totalorder %s96, %s97
    %p108 = scmp.eq.s32.totalorder %s13, 0
    %p109 = por %p107, %p108
    %p110 = scmp.ne.s32.totalorder %s96, %s97
    %p111 = scmp.eq.s32.totalorder %s14, 1
    %p112 = por %p110, %p111
    %p114 = scmp.ne.s32.totalorder %s97, %s113
    %p115 = scmp.eq.s32.totalorder %s14, 0
    %p116 = por %p114, %p115
    %p117 = scmp.le.s32.totalorder 1, %s8
    %p118 = scmp.lt.s32.totalorder %s8, 3
    %p119 = pnand %p117, %p118
    %p120 = pneg %p119
    // Predicated region
    $region9: #{_forward_impl.1} parent=5 // pred_check
      _
    $region10: #{_forward_impl.1} parent=5 // pred_check_branch
      %122 = sbr.rel (%p119) target = $region12
    $region11: #{_forward_impl.1} parent=5 // pred_region
      %s123 = ssub.s32 %s8, 1
      // Predicated region
      $region13: #{_forward_impl.1} parent=11 // pred_check
        %p124 = pneg %p79
      $region14: #{_forward_impl.1} parent=11 // pred_check_branch
        %126 = sbr.rel (%p124) target = $region16
      $region15: #{_forward_impl.1} parent=11 // pred_region
        %p127 = scmp.lt.s32.totalorder %s20, 0
        %s128 = scalar_select %p127, %s20, 0
        %s129 = smul.addr %s128, 2
        %s130 = scalar_lea.vmem %s1, %s129
      $region16: #{_forward_impl.1} parent=11 // pred_fallthru
        _
    $region12: #{_forward_impl.1} parent=5 // pred_fallthru
      _
    %p131 = scmp.lt.s32.totalorder %s8, 2
    // Predicated region
    $region17: #{_forward_impl.1} parent=5 // pred_check
      %p132 = pneg %p131
    $region18: #{_forward_impl.1} parent=5 // pred_check_branch
      %134 = sbr.rel (%p132) target = $region20
    $region19: #{_forward_impl.1} parent=5 // pred_region
      // Predicated region
      $region21: #{_forward_impl.1} parent=19 // pred_check
        %p135 = pneg %p47
      $region22: #{_forward_impl.1} parent=19 // pred_check_branch
        %137 = sbr.rel (%p135) target = $region24
      $region23: #{_forward_impl.1} parent=19 // pred_region
        %p138 = scmp.lt.s32.totalorder %s15, 1
        %s139 = scalar_select %p138, %s15, 1
        %s140 = smul.addr %s139, 43
        %s141 = smul.addr %s140, 8
        %s142 = scalar_lea.vmem %s0, %s141
      $region24: #{_forward_impl.1} parent=19 // pred_fallthru
        _
    $region20: #{_forward_impl.1} parent=5 // pred_fallthru
      _
    %p143 = scmp.le.s32.totalorder 1, %s8
    %p144 = scmp.lt.s32.totalorder %s8, 3
    %p145 = pnand %p143, %p144
    %p146 = pneg %p145
    // Predicated region
    $region25: #{_forward_impl.1} parent=5 // pred_check
      _
    $region26: #{_forward_impl.1} parent=5 // pred_check_branch
      %148 = sbr.rel (%p145) target = $region28
    $region27: #{_forward_impl.1} parent=5 // pred_region
      %s149 = ssub.s32 %s8, 1
      %p150 = scmp.lt.s32.totalorder %s18, 1
      %s151 = scalar_select %p150, %s18, 1
      %s152 = smul.addr %s151, 43
      %s153 = smul.addr %s152, 8
      %s154 = scalar_lea.vmem %s0, %s153
      %p155 = pneg %p53
      %p156 = pneg %p50
      %p157 = scmp.lt.s32.totalorder %s20, 0
      %s158 = scalar_select %p157, %s20, 0
      %s159 = smul.addr %s158, 2
      %s160 = scalar_lea.vmem %s1, %s159
      %p161 = pneg %p79
      %p162 = pneg %p76
      %p163 = pneg %p109
      %p164 = pneg %p106
      %s165 = smul.u32 36, %s19
      %p166 = scmp.lt.s32.totalorder %s18, 1
      %s167 = scalar_select %p166, %s18, 1
      %p168 = scmp.lt.s32.totalorder %s165, 35
      %s169 = scalar_select %p168, %s165, 35
      %p170 = scmp.lt.s32.totalorder %s20, 0
      %s171 = scalar_select %p170, %s20, 0
      %s172 = sadd.s32 %s171, %s169
      %s173 = smul.addr %s167, 36
      %s174 = sadd.s32 %s172, %s173
      %s175 = smul.addr %s174, 8
      %s176 = scalar_lea.vmem %s2, %s175
      %p177 = scmp.lt.s32.totalorder %s18, 1
      %s178 = scalar_select %p177, %s18, 1
      %s179 = smul.addr %s178, 43
      %s180 = smul.addr %s179, 8
      %s181 = scalar_lea.vmem %s0, %s180
      %p182 = scmp.lt.s32.totalorder %s20, 0
      %s183 = scalar_select %p182, %s20, 0
      %s184 = smul.addr %s183, 2
      %s185 = scalar_lea.vmem %s1, %s184
      %s186 = smul.u32 36, %s19
      %p187 = scmp.lt.s32.totalorder %s18, 1
      %s188 = scalar_select %p187, %s18, 1
      %p189 = scmp.lt.s32.totalorder %s186, 35
      %s190 = scalar_select %p189, %s186, 35
      %p191 = scmp.lt.s32.totalorder %s20, 0
      %s192 = scalar_select %p191, %s20, 0
      %s193 = sadd.s32 %s192, %s190
      %s194 = smul.addr %s188, 36
      %s195 = sadd.s32 %s193, %s194
      %s196 = smul.addr %s195, 8
      %s197 = scalar_lea.vmem %s2, %s196
      %s198 = smul.u32 36, %s19
      %v200 = vld [vmem:[%s181] sm:$0xff]
      %v201 = vld [vmem:[%s181 + $0x8] sm:$0xff]
      %v202 = vld [vmem:[%s181 + $0x10] sm:$0xff]
      %v203 = vld [vmem:[%s181 + $0x18] sm:$0xff]
      %v204 = vld [vmem:[%s181 + $0x20] sm:$0xff]
      %v205 = vld [vmem:[%s181 + $0x28] sm:$0xff]
      %v206 = vld [vmem:[%s181 + $0x30] sm:$0xff]
      %v207 = vld [vmem:[%s181 + $0x38] sm:$0xff]
      %v208 = vld [vmem:[%s181 + $0x40] sm:$0xff]
      %v209 = vld [vmem:[%s181 + $0x48] sm:$0xff]
      %v210 = vld [vmem:[%s181 + $0x50] sm:$0xff]
      %v211 = vld [vmem:[%s181 + $0x58] sm:$0xff]
      %v212 = vld [vmem:[%s181 + $0x60] sm:$0xff]
      %v213 = vld [vmem:[%s181 + $0x68] sm:$0xff]
      %v214 = vld [vmem:[%s181 + $0x70] sm:$0xff]
      %v215 = vld [vmem:[%s181 + $0x78] sm:$0xff]
      %v216 = vld [vmem:[%s181 + $0x80] sm:$0xff]
      %v217 = vld [vmem:[%s181 + $0x88] sm:$0xff]
      %v218 = vld [vmem:[%s181 + $0x90] sm:$0xff]
      %v219 = vld [vmem:[%s181 + $0x98] sm:$0xff]
      %v220 = vld [vmem:[%s181 + $0xa0] sm:$0xff]
      %v221 = vld [vmem:[%s181 + $0xa8] sm:$0xff]
      %v222 = vld [vmem:[%s181 + $0xb0] sm:$0xff]
      %v223 = vld [vmem:[%s181 + $0xb8] sm:$0xff]
      %v224 = vld [vmem:[%s181 + $0xc0] sm:$0xff]
      %v225 = vld [vmem:[%s181 + $0xc8] sm:$0xff]
      %v226 = vld [vmem:[%s181 + $0xd0] sm:$0xff]
      %v227 = vld [vmem:[%s181 + $0xd8] sm:$0xff]
      %v228 = vld [vmem:[%s181 + $0xe0] sm:$0xff]
      %v229 = vld [vmem:[%s181 + $0xe8] sm:$0xff]
      %v230 = vld [vmem:[%s181 + $0xf0] sm:$0xff]
      %v231 = vld [vmem:[%s181 + $0xf8] sm:$0xff]
      %v232 = vld [vmem:[%s181 + $0x100] sm:$0xff]
      %v233 = vld [vmem:[%s181 + $0x108] sm:$0xff]
      %v234 = vld [vmem:[%s181 + $0x110] sm:$0xff]
      %v235 = vld [vmem:[%s181 + $0x118] sm:$0xff]
      %v236 = vld [vmem:[%s181 + $0x120] sm:$0xff]
      %v237 = vld [vmem:[%s181 + $0x128] sm:$0xff]
      %v238 = vld [vmem:[%s181 + $0x130] sm:$0xff]
      %v239 = vld [vmem:[%s181 + $0x138] sm:$0xff]
      %v240 = vld [vmem:[%s181 + $0x140] sm:$0x3f]
      %v241 = vmul.f32 %v200, 39.498142
      %v242 = vmul.f32 %v201, 39.498142
      %v243 = vmul.f32 %v202, 39.498142
      %v244 = vmul.f32 %v203, 39.498142
      %v245 = vmul.f32 %v204, 39.498142
      %v246 = vmul.f32 %v205, 39.498142
      %v247 = vmul.f32 %v206, 39.498142
      %v248 = vmul.f32 %v207, 39.498142
      %v249 = vmul.f32 %v208, 39.498142
      %v250 = vmul.f32 %v209, 39.498142
      %v251 = vmul.f32 %v210, 39.498142
      %v252 = vmul.f32 %v211, 39.498142
      %v253 = vmul.f32 %v212, 39.498142
      %v254 = vmul.f32 %v213, 39.498142
      %v255 = vmul.f32 %v214, 39.498142
      %v256 = vmul.f32 %v215, 39.498142
      %v257 = vmul.f32 %v216, 39.498142
      %v258 = vmul.f32 %v217, 39.498142
      %v259 = vmul.f32 %v218, 39.498142
      %v260 = vmul.f32 %v219, 39.498142
      %v261 = vmul.f32 %v220, 39.498142
      %v262 = vmul.f32 %v221, 39.498142
      %v263 = vmul.f32 %v222, 39.498142
      %v264 = vmul.f32 %v223, 39.498142
      %v265 = vmul.f32 %v224, 39.498142
      %v266 = vmul.f32 %v225, 39.498142
      %v267 = vmul.f32 %v226, 39.498142
      %v268 = vmul.f32 %v227, 39.498142
      %v269 = vmul.f32 %v228, 39.498142
      %v270 = vmul.f32 %v229, 39.498142
      %v271 = vmul.f32 %v230, 39.498142
      %v272 = vmul.f32 %v231, 39.498142
      %v273 = vmul.f32 %v232, 39.498142
      %v274 = vmul.f32 %v233, 39.498142
      %v275 = vmul.f32 %v234, 39.498142
      %v276 = vmul.f32 %v235, 39.498142
      %v277 = vmul.f32 %v236, 39.498142
      %v278 = vmul.f32 %v237, 39.498142
      %v279 = vmul.f32 %v238, 39.498142
      %v280 = vmul.f32 %v239, 39.498142
      %v281 = vmul.f32 %v240, 39.498142
      %v282 = vround.ne.pseudo %v241
      %v283 = vround.ne.pseudo %v242
      %v284 = vround.ne.pseudo %v243
      %v285 = vround.ne.pseudo %v244
      %v286 = vround.ne.pseudo %v245
      %v287 = vround.ne.pseudo %v246
      %v288 = vround.ne.pseudo %v247
      %v289 = vround.ne.pseudo %v248
      %v290 = vround.ne.pseudo %v249
      %v291 = vround.ne.pseudo %v250
      %v292 = vround.ne.pseudo %v251
      %v293 = vround.ne.pseudo %v252
      %v294 = vround.ne.pseudo %v253
      %v295 = vround.ne.pseudo %v254
      %v296 = vround.ne.pseudo %v255
      %v297 = vround.ne.pseudo %v256
      %v298 = vround.ne.pseudo %v257
      %v299 = vround.ne.pseudo %v258
      %v300 = vround.ne.pseudo %v259
      %v301 = vround.ne.pseudo %v260
      %v302 = vround.ne.pseudo %v261
      %v303 = vround.ne.pseudo %v262
      %v304 = vround.ne.pseudo %v263
      %v305 = vround.ne.pseudo %v264
      %v306 = vround.ne.pseudo %v265
      %v307 = vround.ne.pseudo %v266
      %v308 = vround.ne.pseudo %v267
      %v309 = vround.ne.pseudo %v268
      %v310 = vround.ne.pseudo %v269
      %v311 = vround.ne.pseudo %v270
      %v312 = vround.ne.pseudo %v271
      %v313 = vround.ne.pseudo %v272
      %v314 = vround.ne.pseudo %v273
      %v315 = vround.ne.pseudo %v274
      %v316 = vround.ne.pseudo %v275
      %v317 = vround.ne.pseudo %v276
      %v318 = vround.ne.pseudo %v277
      %v319 = vround.ne.pseudo %v278
      %v320 = vround.ne.pseudo %v279
      %v321 = vround.ne.pseudo %v280
      %v322 = vround.ne.pseudo %v281
      %v323 = vmax.f32 %v282, -124.0
      %v324 = vmax.f32 %v283, -124.0
      %v325 = vmax.f32 %v284, -124.0
      %v326 = vmax.f32 %v285, -124.0
      %v327 = vmax.f32 %v286, -124.0
      %v328 = vmax.f32 %v287, -124.0
      %v329 = vmax.f32 %v288, -124.0
      %v330 = vmax.f32 %v289, -124.0
      %v331 = vmax.f32 %v290, -124.0
      %v332 = vmax.f32 %v291, -124.0
      %v333 = vmax.f32 %v292, -124.0
      %v334 = vmax.f32 %v293, -124.0
      %v335 = vmax.f32 %v294, -124.0
      %v336 = vmax.f32 %v295, -124.0
      %v337 = vmax.f32 %v296, -124.0
      %v338 = vmax.f32 %v297, -124.0
      %v339 = vmax.f32 %v298, -124.0
      %v340 = vmax.f32 %v299, -124.0
      %v341 = vmax.f32 %v300, -124.0
      %v342 = vmax.f32 %v301, -124.0
      %v343 = vmax.f32 %v302, -124.0
      %v344 = vmax.f32 %v303, -124.0
      %v345 = vmax.f32 %v304, -124.0
      %v346 = vmax.f32 %v305, -124.0
      %v347 = vmax.f32 %v306, -124.0
      %v348 = vmax.f32 %v307, -124.0
      %v349 = vmax.f32 %v308, -124.0
      %v350 = vmax.f32 %v309, -124.0
      %v351 = vmax.f32 %v310, -124.0
      %v352 = vmax.f32 %v311, -124.0
      %v353 = vmax.f32 %v312, -124.0
      %v354 = vmax.f32 %v313, -124.0
      %v355 = vmax.f32 %v314, -124.0
      %v356 = vmax.f32 %v315, -124.0
      %v357 = vmax.f32 %v316, -124.0
      %v358 = vmax.f32 %v317, -124.0
      %v359 = vmax.f32 %v318, -124.0
      %v360 = vmax.f32 %v319, -124.0
      %v361 = vmax.f32 %v320, -124.0
      %v362 = vmax.f32 %v321, -124.0
      %v363 = vmax.f32 %v322, -124.0
      %v364 = vmin.f32 %v323, 131.0
      %v365 = vmin.f32 %v324, 131.0
      %v366 = vmin.f32 %v325, 131.0
      %v367 = vmin.f32 %v326, 131.0
      %v368 = vmin.f32 %v327, 131.0
      %v369 = vmin.f32 %v328, 131.0
      %v370 = vmin.f32 %v329, 131.0
      %v371 = vmin.f32 %v330, 131.0
      %v372 = vmin.f32 %v331, 131.0
      %v373 = vmin.f32 %v332, 131.0
      %v374 = vmin.f32 %v333, 131.0
      %v375 = vmin.f32 %v334, 131.0
      %v376 = vmin.f32 %v335, 131.0
      %v377 = vmin.f32 %v336, 131.0
      %v378 = vmin.f32 %v337, 131.0
      %v379 = vmin.f32 %v338, 131.0
      %v380 = vmin.f32 %v339, 131.0
      %v381 = vmin.f32 %v340, 131.0
      %v382 = vmin.f32 %v341, 131.0
      %v383 = vmin.f32 %v342, 131.0
      %v384 = vmin.f32 %v343, 131.0
      %v385 = vmin.f32 %v344, 131.0
      %v386 = vmin.f32 %v345, 131.0
      %v387 = vmin.f32 %v346, 131.0
      %v388 = vmin.f32 %v347, 131.0
      %v389 = vmin.f32 %v348, 131.0
      %v390 = vmin.f32 %v349, 131.0
      %v391 = vmin.f32 %v350, 131.0
      %v392 = vmin.f32 %v351, 131.0
      %v393 = vmin.f32 %v352, 131.0
      %v394 = vmin.f32 %v353, 131.0
      %v395 = vmin.f32 %v354, 131.0
      %v396 = vmin.f32 %v355, 131.0
      %v397 = vmin.f32 %v356, 131.0
      %v398 = vmin.f32 %v357, 131.0
      %v399 = vmin.f32 %v358, 131.0
      %v400 = vmin.f32 %v359, 131.0
      %v401 = vmin.f32 %v360, 131.0
      %v402 = vmin.f32 %v361, 131.0
      %v403 = vmin.f32 %v362, 131.0
      %v404 = vmin.f32 %v363, 131.0
      %v405 = vmul.f32 %v364, 0.025317647
      %v406 = vmul.f32 %v365, 0.025317647
      %v407 = vmul.f32 %v366, 0.025317647
      %v408 = vmul.f32 %v367, 0.025317647
      %v409 = vmul.f32 %v368, 0.025317647
      %v410 = vmul.f32 %v369, 0.025317647
      %v411 = vmul.f32 %v370, 0.025317647
      %v412 = vmul.f32 %v371, 0.025317647
      %v413 = vmul.f32 %v372, 0.025317647
      %v414 = vmul.f32 %v373, 0.025317647
      %v415 = vmul.f32 %v374, 0.025317647
      %v416 = vmul.f32 %v375, 0.025317647
      %v417 = vmul.f32 %v376, 0.025317647
      %v418 = vmul.f32 %v377, 0.025317647
      %v419 = vmul.f32 %v378, 0.025317647
      %v420 = vmul.f32 %v379, 0.025317647
      %v421 = vmul.f32 %v380, 0.025317647
      %v422 = vmul.f32 %v381, 0.025317647
      %v423 = vmul.f32 %v382, 0.025317647
      %v424 = vmul.f32 %v383, 0.025317647
      %v425 = vmul.f32 %v384, 0.025317647
      %v426 = vmul.f32 %v385, 0.025317647
      %v427 = vmul.f32 %v386, 0.025317647
      %v428 = vmul.f32 %v387, 0.025317647
      %v429 = vmul.f32 %v388, 0.025317647
      %v430 = vmul.f32 %v389, 0.025317647
      %v431 = vmul.f32 %v390, 0.025317647
      %v432 = vmul.f32 %v391, 0.025317647
      %v433 = vmul.f32 %v392, 0.025317647
      %v434 = vmul.f32 %v393, 0.025317647
      %v435 = vmul.f32 %v394, 0.025317647
      %v436 = vmul.f32 %v395, 0.025317647
      %v437 = vmul.f32 %v396, 0.025317647
      %v438 = vmul.f32 %v397, 0.025317647
      %v439 = vmul.f32 %v398, 0.025317647
      %v440 = vmul.f32 %v399, 0.025317647
      %v441 = vmul.f32 %v400, 0.025317647
      %v442 = vmul.f32 %v401, 0.025317647
      %v443 = vmul.f32 %v402, 0.025317647
      %v444 = vmul.f32 %v403, 0.025317647
      %v445 = vmul.f32 %v404, 0.025317647
      %v446 = vpack.c.bf16 %v406, %v405
      %v447 = vpack.c.bf16 %v408, %v407
      %v448 = vpack.c.bf16 %v410, %v409
      %v449 = vpack.c.bf16 %v412, %v411
      %v450 = vpack.c.bf16 %v414, %v413
      %v451 = vpack.c.bf16 %v416, %v415
      %v452 = vpack.c.bf16 %v418, %v417
      %v453 = vpack.c.bf16 %v420, %v419
      %v454 = vpack.c.bf16 %v422, %v421
      %v455 = vpack.c.bf16 %v424, %v423
      %v456 = vpack.c.bf16 %v426, %v425
      %v457 = vpack.c.bf16 %v428, %v427
      %v458 = vpack.c.bf16 %v430, %v429
      %v459 = vpack.c.bf16 %v432, %v431
      %v460 = vpack.c.bf16 %v434, %v433
      %v461 = vpack.c.bf16 %v436, %v435
      %v462 = vpack.c.bf16 %v438, %v437
      %v463 = vpack.c.bf16 %v440, %v439
      %v464 = vpack.c.bf16 %v442, %v441
      %v465 = vpack.c.bf16 %v444, %v443
      %v466 = vpack.c.bf16 %v445, %v445
      %v488 = vunpack.c.l.b16 %v446
      %v489 = vunpack.c.h.b16 %v446
      %v490 = vunpack.c.l.b16 %v447
      %v491 = vunpack.c.h.b16 %v447
      %v492 = vunpack.c.l.b16 %v448
      %v493 = vunpack.c.h.b16 %v448
      %v494 = vunpack.c.l.b16 %v449
      %v495 = vunpack.c.h.b16 %v449
      %v496 = vunpack.c.l.b16 %v450
      %v497 = vunpack.c.h.b16 %v450
      %v498 = vunpack.c.l.b16 %v451
      %v499 = vunpack.c.h.b16 %v451
      %v500 = vunpack.c.l.b16 %v452
      %v501 = vunpack.c.h.b16 %v452
      %v502 = vunpack.c.l.b16 %v453
      %v503 = vunpack.c.h.b16 %v453
      %v504 = vunpack.c.l.b16 %v454
      %v505 = vunpack.c.h.b16 %v454
      %v506 = vunpack.c.l.b16 %v455
      %v507 = vunpack.c.h.b16 %v455
      %v508 = vunpack.c.l.b16 %v456
      %v509 = vunpack.c.h.b16 %v456
      %v510 = vunpack.c.l.b16 %v457
      %v511 = vunpack.c.h.b16 %v457
      %v512 = vunpack.c.l.b16 %v458
      %v513 = vunpack.c.h.b16 %v458
      %v514 = vunpack.c.l.b16 %v459
      %v515 = vunpack.c.h.b16 %v459
      %v516 = vunpack.c.l.b16 %v460
      %v517 = vunpack.c.h.b16 %v460
      %v518 = vunpack.c.l.b16 %v461
      %v519 = vunpack.c.h.b16 %v461
      %v520 = vunpack.c.l.b16 %v462
      %v521 = vunpack.c.h.b16 %v462
      %v522 = vunpack.c.l.b16 %v463
      %v523 = vunpack.c.h.b16 %v463
      %v524 = vunpack.c.l.b16 %v464
      %v525 = vunpack.c.h.b16 %v464
      %v526 = vunpack.c.l.b16 %v465
      %v527 = vunpack.c.h.b16 %v465
      %v528 = vunpack.c.l.b16 %v466
      %v529 = vpack.c.b16 %v488, %v488
      %v530 = vpack.c.b16 %v489, %v489
      %v531 = vpack.c.b16 %v490, %v490
      %v532 = vpack.c.b16 %v491, %v491
      %v533 = vpack.c.b16 %v492, %v492
      %v534 = vpack.c.b16 %v493, %v493
      %v535 = vpack.c.b16 %v494, %v494
      %v536 = vpack.c.b16 %v495, %v495
      %v537 = vpack.c.b16 %v496, %v496
      %v538 = vpack.c.b16 %v497, %v497
      %v539 = vpack.c.b16 %v498, %v498
      %v540 = vpack.c.b16 %v499, %v499
      %v541 = vpack.c.b16 %v500, %v500
      %v542 = vpack.c.b16 %v501, %v501
      %v543 = vpack.c.b16 %v502, %v502
      %v544 = vpack.c.b16 %v503, %v503
      %v545 = vpack.c.b16 %v504, %v504
      %v546 = vpack.c.b16 %v505, %v505
      %v547 = vpack.c.b16 %v506, %v506
      %v548 = vpack.c.b16 %v507, %v507
      %v549 = vpack.c.b16 %v508, %v508
      %v550 = vpack.c.b16 %v509, %v509
      %v551 = vpack.c.b16 %v510, %v510
      %v552 = vpack.c.b16 %v511, %v511
      %v553 = vpack.c.b16 %v512, %v512
      %v554 = vpack.c.b16 %v513, %v513
      %v555 = vpack.c.b16 %v514, %v514
      %v556 = vpack.c.b16 %v515, %v515
      %v557 = vpack.c.b16 %v516, %v516
      %v558 = vpack.c.b16 %v517, %v517
      %v559 = vpack.c.b16 %v518, %v518
      %v560 = vpack.c.b16 %v519, %v519
      %v561 = vpack.c.b16 %v520, %v520
      %v562 = vpack.c.b16 %v521, %v521
      %v563 = vpack.c.b16 %v522, %v522
      %v564 = vpack.c.b16 %v523, %v523
      %v565 = vpack.c.b16 %v524, %v524
      %v566 = vpack.c.b16 %v525, %v525
      %v567 = vpack.c.b16 %v526, %v526
      %v568 = vpack.c.b16 %v527, %v527
      %v569 = vpack.c.b16 %v528, %v528
      %vm611 = vcmask 27648
      %612 = vst.msk [vmem:[#allocation2] sm:$0xf] %vm611, %v529
      %613 = vst.msk [vmem:[#allocation2 + $0x4] sm:$0xf] %vm611, %v530
      %614 = vst.msk [vmem:[#allocation2 + $0x8] sm:$0xf] %vm611, %v531
      %615 = vst.msk [vmem:[#allocation2 + $0xc] sm:$0xf] %vm611, %v532
      %616 = vst.msk [vmem:[#allocation2 + $0x10] sm:$0xf] %vm611, %v533
      %617 = vst.msk [vmem:[#allocation2 + $0x14] sm:$0xf] %vm611, %v534
      %618 = vst.msk [vmem:[#allocation2 + $0x18] sm:$0xf] %vm611, %v535
      %619 = vst.msk [vmem:[#allocation2 + $0x1c] sm:$0xf] %vm611, %v536
      %620 = vst.msk [vmem:[#allocation2 + $0x20] sm:$0xf] %vm611, %v537
      %621 = vst.msk [vmem:[#allocation2 + $0x24] sm:$0xf] %vm611, %v538
      %622 = vst.msk [vmem:[#allocation2 + $0x28] sm:$0xf] %vm611, %v539
      %623 = vst.msk [vmem:[#allocation2 + $0x2c] sm:$0xf] %vm611, %v540
      %624 = vst.msk [vmem:[#allocation2 + $0x30] sm:$0xf] %vm611, %v541
      %625 = vst.msk [vmem:[#allocation2 + $0x34] sm:$0xf] %vm611, %v542
      %626 = vst.msk [vmem:[#allocation2 + $0x38] sm:$0xf] %vm611, %v543
      %627 = vst.msk [vmem:[#allocation2 + $0x3c] sm:$0xf] %vm611, %v544
      %628 = vst.msk [vmem:[#allocation2 + $0x40] sm:$0xf] %vm611, %v545
      %629 = vst.msk [vmem:[#allocation2 + $0x44] sm:$0xf] %vm611, %v546
      %630 = vst.msk [vmem:[#allocation2 + $0x48] sm:$0xf] %vm611, %v547
      %631 = vst.msk [vmem:[#allocation2 + $0x4c] sm:$0xf] %vm611, %v548
      %632 = vst.msk [vmem:[#allocation2 + $0x50] sm:$0xf] %vm611, %v549
      %633 = vst.msk [vmem:[#allocation2 + $0x54] sm:$0xf] %vm611, %v550
      %634 = vst.msk [vmem:[#allocation2 + $0x58] sm:$0xf] %vm611, %v551
      %635 = vst.msk [vmem:[#allocation2 + $0x5c] sm:$0xf] %vm611, %v552
      %636 = vst.msk [vmem:[#allocation2 + $0x60] sm:$0xf] %vm611, %v553
      %637 = vst.msk [vmem:[#allocation2 + $0x64] sm:$0xf] %vm611, %v554
      %638 = vst.msk [vmem:[#allocation2 + $0x68] sm:$0xf] %vm611, %v555
      %639 = vst.msk [vmem:[#allocation2 + $0x6c] sm:$0xf] %vm611, %v556
      %640 = vst.msk [vmem:[#allocation2 + $0x70] sm:$0xf] %vm611, %v557
      %641 = vst.msk [vmem:[#allocation2 + $0x74] sm:$0xf] %vm611, %v558
      %642 = vst.msk [vmem:[#allocation2 + $0x78] sm:$0xf] %vm611, %v559
      %643 = vst.msk [vmem:[#allocation2 + $0x7c] sm:$0xf] %vm611, %v560
      %644 = vst.msk [vmem:[#allocation2 + $0x80] sm:$0xf] %vm611, %v561
      %645 = vst.msk [vmem:[#allocation2 + $0x84] sm:$0xf] %vm611, %v562
      %646 = vst.msk [vmem:[#allocation2 + $0x88] sm:$0xf] %vm611, %v563
      %647 = vst.msk [vmem:[#allocation2 + $0x8c] sm:$0xf] %vm611, %v564
      %648 = vst.msk [vmem:[#allocation2 + $0x90] sm:$0xf] %vm611, %v565
      %649 = vst.msk [vmem:[#allocation2 + $0x94] sm:$0xf] %vm611, %v566
      %650 = vst.msk [vmem:[#allocation2 + $0x98] sm:$0xf] %vm611, %v567
      %651 = vst.msk [vmem:[#allocation2 + $0x9c] sm:$0xf] %vm611, %v568
      %vm652 = vcmask 26624
      %653 = vst.msk [vmem:[#allocation2 + $0xa0] sm:$0x7] %vm652, %v569
      %v654 = vld [vmem:[#allocation2] sm:$0xf]
      %v655 = vld [vmem:[#allocation2 + $0x4] sm:$0xf]
      %v656 = vld [vmem:[#allocation2 + $0x8] sm:$0xf]
      %v657 = vld [vmem:[#allocation2 + $0xc] sm:$0xf]
      %v658 = vld [vmem:[#allocation2 + $0x10] sm:$0xf]
      %v659 = vld [vmem:[#allocation2 + $0x14] sm:$0xf]
      %v660 = vld [vmem:[#allocation2 + $0x18] sm:$0xf]
      %v661 = vld [vmem:[#allocation2 + $0x1c] sm:$0xf]
      %v662 = vld [vmem:[#allocation2 + $0x20] sm:$0xf]
      %v663 = vld [vmem:[#allocation2 + $0x24] sm:$0xf]
      %v664 = vld [vmem:[#allocation2 + $0x28] sm:$0xf]
      %v665 = vld [vmem:[#allocation2 + $0x2c] sm:$0xf]
      %v666 = vld [vmem:[#allocation2 + $0x30] sm:$0xf]
      %v667 = vld [vmem:[#allocation2 + $0x34] sm:$0xf]
      %v668 = vld [vmem:[#allocation2 + $0x38] sm:$0xf]
      %v669 = vld [vmem:[#allocation2 + $0x3c] sm:$0xf]
      %v670 = vld [vmem:[#allocation2 + $0x40] sm:$0xf]
      %v671 = vld [vmem:[#allocation2 + $0x44] sm:$0xf]
      %v672 = vld [vmem:[#allocation2 + $0x48] sm:$0xf]
      %v673 = vld [vmem:[#allocation2 + $0x4c] sm:$0xf]
      %v674 = vld [vmem:[#allocation2 + $0x50] sm:$0xf]
      %v675 = vld [vmem:[#allocation2 + $0x54] sm:$0xf]
      %v676 = vld [vmem:[#allocation2 + $0x58] sm:$0xf]
      %v677 = vld [vmem:[#allocation2 + $0x5c] sm:$0xf]
      %v678 = vld [vmem:[#allocation2 + $0x60] sm:$0xf]
      %v679 = vld [vmem:[#allocation2 + $0x64] sm:$0xf]
      %v680 = vld [vmem:[#allocation2 + $0x68] sm:$0xf]
      %v681 = vld [vmem:[#allocation2 + $0x6c] sm:$0xf]
      %v682 = vld [vmem:[#allocation2 + $0x70] sm:$0xf]
      %v683 = vld [vmem:[#allocation2 + $0x74] sm:$0xf]
      %v684 = vld [vmem:[#allocation2 + $0x78] sm:$0xf]
      %v685 = vld [vmem:[#allocation2 + $0x7c] sm:$0xf]
      %v686 = vld [vmem:[#allocation2 + $0x80] sm:$0xf]
      %v687 = vld [vmem:[#allocation2 + $0x84] sm:$0xf]
      %v688 = vld [vmem:[#allocation2 + $0x88] sm:$0xf]
      %v689 = vld [vmem:[#allocation2 + $0x8c] sm:$0xf]
      %v690 = vld [vmem:[%s185] sm:$0x3]
      %v691 = vld [vmem:[#allocation2 + $0x90] sm:$0x1]
      %s692 = scalar_lea.vmem %s185, 2
      %v693 = vld [vmem:[%s692] sm:$0x3]
      %v731 = vunpack.c.l.b16 %v654
      %v732 = vunpack.c.l.b16 %v655
      %v733 = vunpack.c.l.b16 %v656
      %v734 = vunpack.c.l.b16 %v657
      %v735 = vunpack.c.l.b16 %v658
      %v736 = vunpack.c.l.b16 %v659
      %v737 = vunpack.c.l.b16 %v660
      %v738 = vunpack.c.l.b16 %v661
      %v739 = vunpack.c.l.b16 %v662
      %v740 = vunpack.c.l.b16 %v663
      %v741 = vunpack.c.l.b16 %v664
      %v742 = vunpack.c.l.b16 %v665
      %v743 = vunpack.c.l.b16 %v666
      %v744 = vunpack.c.l.b16 %v667
      %v745 = vunpack.c.l.b16 %v668
      %v746 = vunpack.c.l.b16 %v669
      %v747 = vunpack.c.l.b16 %v670
      %v748 = vunpack.c.l.b16 %v671
      %v749 = vunpack.c.l.b16 %v672
      %v750 = vunpack.c.l.b16 %v673
      %v751 = vunpack.c.l.b16 %v674
      %v752 = vunpack.c.l.b16 %v675
      %v753 = vunpack.c.l.b16 %v676
      %v754 = vunpack.c.l.b16 %v677
      %v755 = vunpack.c.l.b16 %v678
      %v756 = vunpack.c.l.b16 %v679
      %v757 = vunpack.c.l.b16 %v680
      %v758 = vunpack.c.l.b16 %v681
      %v759 = vunpack.c.l.b16 %v682
      %v760 = vunpack.c.l.b16 %v683
      %v761 = vunpack.c.l.b16 %v684
      %v762 = vunpack.c.l.b16 %v685
      %v763 = vunpack.c.l.b16 %v686
      %v764 = vunpack.c.l.b16 %v687
      %v765 = vunpack.c.l.b16 %v688
      %v766 = vunpack.c.l.b16 %v689
      %v767 = vunpack.c.l.b16 %v691
      %v768 = vpack.c.b16 %v732, %v731
      %v769 = vpack.c.b16 %v734, %v733
      %v770 = vpack.c.b16 %v736, %v735
      %v771 = vpack.c.b16 %v738, %v737
      %v772 = vpack.c.b16 %v740, %v739
      %v773 = vpack.c.b16 %v742, %v741
      %v774 = vpack.c.b16 %v744, %v743
      %v775 = vpack.c.b16 %v746, %v745
      %v776 = vpack.c.b16 %v748, %v747
      %v777 = vpack.c.b16 %v750, %v749
      %v778 = vpack.c.b16 %v752, %v751
      %v779 = vpack.c.b16 %v754, %v753
      %v780 = vpack.c.b16 %v756, %v755
      %v781 = vpack.c.b16 %v758, %v757
      %v782 = vpack.c.b16 %v760, %v759
      %v783 = vpack.c.b16 %v762, %v761
      %v784 = vpack.c.b16 %v764, %v763
      %v785 = vpack.c.b16 %v766, %v765
      %v786 = vpack.c.b16 %v767, %v767
      %vm787 = vsmask.f32 7424
      %v789 = vshrl.u32 %v768, 16
      %v791 = vshll.u32 %v768, 16
      %v793 = vrot.slane %v791, 1
      %v794 = vor.u32 %v789, %v793
      %v796 = vshll.u32 %v769, 16
      %v798 = vrot.slane %v796, 1
      %v799 = vsel %vm787, %v794, %v798
      %v800 = vshrl.u32 %v769, 16
      %v802 = vor.u32 %v800, %v798
      %v804 = vshll.u32 %v770, 16
      %v806 = vrot.slane %v804, 1
      %v807 = vsel %vm787, %v802, %v806
      %v808 = vshrl.u32 %v770, 16
      %v810 = vor.u32 %v808, %v806
      %v812 = vshll.u32 %v771, 16
      %v814 = vrot.slane %v812, 1
      %v815 = vsel %vm787, %v810, %v814
      %v816 = vshrl.u32 %v771, 16
      %v818 = vor.u32 %v816, %v814
      %v820 = vshll.u32 %v772, 16
      %v822 = vrot.slane %v820, 1
      %v823 = vsel %vm787, %v818, %v822
      %v824 = vshrl.u32 %v772, 16
      %v826 = vor.u32 %v824, %v822
      %v828 = vshll.u32 %v773, 16
      %v830 = vrot.slane %v828, 1
      %v831 = vsel %vm787, %v826, %v830
      %v832 = vshrl.u32 %v773, 16
      %v834 = vor.u32 %v832, %v830
      %v836 = vshll.u32 %v774, 16
      %v838 = vrot.slane %v836, 1
      %v839 = vsel %vm787, %v834, %v838
      %v840 = vshrl.u32 %v774, 16
      %v842 = vor.u32 %v840, %v838
      %v844 = vshll.u32 %v775, 16
      %v846 = vrot.slane %v844, 1
      %v847 = vsel %vm787, %v842, %v846
      %v848 = vshrl.u32 %v775, 16
      %v850 = vor.u32 %v848, %v846
      %v852 = vshll.u32 %v776, 16
      %v854 = vrot.slane %v852, 1
      %v855 = vsel %vm787, %v850, %v854
      %v856 = vshrl.u32 %v776, 16
      %v858 = vor.u32 %v856, %v854
      %v860 = vshll.u32 %v777, 16
      %v862 = vrot.slane %v860, 1
      %v863 = vsel %vm787, %v858, %v862
      %v864 = vshrl.u32 %v777, 16
      %v866 = vor.u32 %v864, %v862
      %v868 = vshll.u32 %v778, 16
      %v870 = vrot.slane %v868, 1
      %v871 = vsel %vm787, %v866, %v870
      %v872 = vshrl.u32 %v778, 16
      %v874 = vor.u32 %v872, %v870
      %v876 = vshll.u32 %v779, 16
      %v878 = vrot.slane %v876, 1
      %v879 = vsel %vm787, %v874, %v878
      %v880 = vshrl.u32 %v779, 16
      %v882 = vor.u32 %v880, %v878
      %v884 = vshll.u32 %v780, 16
      %v886 = vrot.slane %v884, 1
      %v887 = vsel %vm787, %v882, %v886
      %v888 = vshrl.u32 %v780, 16
      %v890 = vor.u32 %v888, %v886
      %v892 = vshll.u32 %v781, 16
      %v894 = vrot.slane %v892, 1
      %v895 = vsel %vm787, %v890, %v894
      %v896 = vshrl.u32 %v781, 16
      %v898 = vor.u32 %v896, %v894
      %v900 = vshll.u32 %v782, 16
      %v902 = vrot.slane %v900, 1
      %v903 = vsel %vm787, %v898, %v902
      %v904 = vshrl.u32 %v782, 16
      %v906 = vor.u32 %v904, %v902
      %v908 = vshll.u32 %v783, 16
      %v910 = vrot.slane %v908, 1
      %v911 = vsel %vm787, %v906, %v910
      %v912 = vshrl.u32 %v783, 16
      %v914 = vor.u32 %v912, %v910
      %v916 = vshll.u32 %v784, 16
      %v918 = vrot.slane %v916, 1
      %v919 = vsel %vm787, %v914, %v918
      %v920 = vshrl.u32 %v784, 16
      %v922 = vor.u32 %v920, %v918
      %v924 = vshll.u32 %v785, 16
      %v926 = vrot.slane %v924, 1
      %v927 = vsel %vm787, %v922, %v926
      %v928 = vshrl.u32 %v785, 16
      %v930 = vor.u32 %v928, %v926
      %v932 = vshll.u32 %v786, 16
      %v934 = vrot.slane %v932, 1
      %v935 = vsel %vm787, %v930, %v934
      %vm936 = vcmask 31744
      %v938 = vsel %vm936, %v799, 0
      %v941 = vsel %vm936, %v807, 0
      %v944 = vsel %vm936, %v815, 0
      %v947 = vsel %vm936, %v823, 0
      %v950 = vsel %vm936, %v831, 0
      %v953 = vsel %vm936, %v839, 0
      %v956 = vsel %vm936, %v847, 0
      %v959 = vsel %vm936, %v855, 0
      %v962 = vsel %vm936, %v863, 0
      %v965 = vsel %vm936, %v871, 0
      %v968 = vsel %vm936, %v879, 0
      %v971 = vsel %vm936, %v887, 0
      %v974 = vsel %vm936, %v895, 0
      %v977 = vsel %vm936, %v903, 0
      %v980 = vsel %vm936, %v911, 0
      %v983 = vsel %vm936, %v919, 0
      %v986 = vsel %vm936, %v927, 0
      %v989 = vsel %vm936, %v935, 0
      %vm991 = vcmask 1041408
      %v993 = vsel %vm991, %v693, 0
      %995 = vmatprep.subr.bf16.mxu0 0
      %996 = vmatpush1.bf16.msra.mxu0 0
      %997 = vmatprep.subr.bf16.mxu0 0
      %998 = vmatpush1.bf16.msra.mxu0 0
      %999 = vmatprep.subr.bf16.mxu0 0
      %1000 = vmatpush1.bf16.msra.mxu0 0
      %1001 = vmatprep.subr.bf16.mxu0 0
      %1002 = vmatpush1.bf16.msra.mxu0 0
      %1003 = vmatprep.subr.bf16.mxu0 0
      %1004 = vmatpush1.bf16.msra.mxu0 0
      %1005 = vmatprep.subr.bf16.mxu0 0
      %1006 = vmatpush1.bf16.msra.mxu0 0
      %1007 = vmatprep.subr.bf16.mxu0 0
      %1008 = vmatpush1.bf16.msra.mxu0 0
      %1009 = vmatprep.subr.bf16.mxu0 0
      %1010 = vmatpush1.bf16.msra.mxu0 %v993
      %1011 = vmatprep.subr.bf16.mxu0 0
      %1012 = vmatpush2.bf16.msra.mxu0 0
      %1013 = vmatprep.subr.bf16.mxu0 0
      %1014 = vmatpush2.bf16.msra.mxu0 0
      %1015 = vmatprep.subr.bf16.mxu0 0
      %1016 = vmatpush2.bf16.msra.mxu0 0
      %1017 = vmatprep.subr.bf16.mxu0 0
      %1018 = vmatpush2.bf16.msra.mxu0 0
      %1019 = vmatprep.subr.bf16.mxu0 0
      %1020 = vmatpush2.bf16.msra.mxu0 0
      %1021 = vmatprep.subr.bf16.mxu0 0
      %1022 = vmatpush2.bf16.msra.mxu0 0
      %1023 = vmatprep.subr.bf16.mxu0 0
      %1024 = vmatpush2.bf16.msra.mxu0 0
      %1025 = vmatprep.subr.bf16.mxu0 0
      %1026 = vmatpush2.bf16.msra.mxu0 0
      %1027 = vmatprep.mubr.bf16.mxu0 0
      %1028 = vmatmul.mubr.bf16.gmra.mxu0 %v938
      %v1029 = vpop.f32.mrf.mxu0
      %v1030 = vadd.f32 0.0, %v1029
      %v1031 = vpop.f32.mrf.mxu0
      %v1032 = vpop.f32.mrf.mxu0
      %v1033 = vadd.f32 0.0, %v1032
      %v1034 = vpop.f32.mrf.mxu0
      %1035 = vmatprep.mubr.bf16.mxu0 0
      %1036 = vmatmul.mubr.bf16.gmra.mxu0 %v941
      %v1037 = vpop.f32.mrf.mxu0
      %v1038 = vadd.f32 0.0, %v1037
      %v1039 = vpop.f32.mrf.mxu0
      %v1040 = vpop.f32.mrf.mxu0
      %v1041 = vadd.f32 0.0, %v1040
      %v1042 = vpop.f32.mrf.mxu0
      %1043 = vmatprep.mubr.bf16.mxu0 0
      %1044 = vmatmul.mubr.bf16.gmra.mxu0 %v944
      %v1045 = vpop.f32.mrf.mxu0
      %v1046 = vadd.f32 0.0, %v1045
      %v1047 = vpop.f32.mrf.mxu0
      %v1048 = vpop.f32.mrf.mxu0
      %v1049 = vadd.f32 0.0, %v1048
      %v1050 = vpop.f32.mrf.mxu0
      %1051 = vmatprep.mubr.bf16.mxu0 0
      %1052 = vmatmul.mubr.bf16.gmra.mxu0 %v947
      %v1053 = vpop.f32.mrf.mxu0
      %v1054 = vadd.f32 0.0, %v1053
      %v1055 = vpop.f32.mrf.mxu0
      %v1056 = vpop.f32.mrf.mxu0
      %v1057 = vadd.f32 0.0, %v1056
      %v1058 = vpop.f32.mrf.mxu0
      %1059 = vmatprep.mubr.bf16.mxu0 0
      %1060 = vmatmul.mubr.bf16.gmra.mxu0 %v950
      %v1061 = vpop.f32.mrf.mxu0
      %v1062 = vadd.f32 0.0, %v1061
      %v1063 = vpop.f32.mrf.mxu0
      %v1064 = vpop.f32.mrf.mxu0
      %v1065 = vadd.f32 0.0, %v1064
      %v1066 = vpop.f32.mrf.mxu0
      %1067 = vmatprep.mubr.bf16.mxu0 0
      %1068 = vmatmul.mubr.bf16.gmra.mxu0 %v953
      %v1069 = vpop.f32.mrf.mxu0
      %v1070 = vadd.f32 0.0, %v1069
      %v1071 = vpop.f32.mrf.mxu0
      %v1072 = vpop.f32.mrf.mxu0
      %v1073 = vadd.f32 0.0, %v1072
      %v1074 = vpop.f32.mrf.mxu0
      %1075 = vmatprep.mubr.bf16.mxu0 0
      %1076 = vmatmul.mubr.bf16.gmra.mxu0 %v956
      %v1077 = vpop.f32.mrf.mxu0
      %v1078 = vadd.f32 0.0, %v1077
      %v1079 = vpop.f32.mrf.mxu0
      %v1080 = vpop.f32.mrf.mxu0
      %v1081 = vadd.f32 0.0, %v1080
      %v1082 = vpop.f32.mrf.mxu0
      %1083 = vmatprep.mubr.bf16.mxu0 0
      %1084 = vmatmul.mubr.bf16.gmra.mxu0 %v959
      %v1085 = vpop.f32.mrf.mxu0
      %v1086 = vadd.f32 0.0, %v1085
      %v1087 = vpop.f32.mrf.mxu0
      %v1088 = vpop.f32.mrf.mxu0
      %v1089 = vadd.f32 0.0, %v1088
      %v1090 = vpop.f32.mrf.mxu0
      %1091 = vmatprep.mubr.bf16.mxu0 0
      %1092 = vmatmul.mubr.bf16.gmra.mxu0 %v962
      %v1093 = vpop.f32.mrf.mxu0
      %v1094 = vadd.f32 0.0, %v1093
      %v1095 = vpop.f32.mrf.mxu0
      %v1096 = vpop.f32.mrf.mxu0
      %v1097 = vadd.f32 0.0, %v1096
      %v1098 = vpop.f32.mrf.mxu0
      %1099 = vmatprep.mubr.bf16.mxu0 0
      %1100 = vmatmul.mubr.bf16.gmra.mxu0 %v965
      %v1101 = vpop.f32.mrf.mxu0
      %v1102 = vadd.f32 0.0, %v1101
      %v1103 = vpop.f32.mrf.mxu0
      %v1104 = vpop.f32.mrf.mxu0
      %v1105 = vadd.f32 0.0, %v1104
      %v1106 = vpop.f32.mrf.mxu0
      %1107 = vmatprep.mubr.bf16.mxu0 0
      %1108 = vmatmul.mubr.bf16.gmra.mxu0 %v968
      %v1109 = vpop.f32.mrf.mxu0
      %v1110 = vadd.f32 0.0, %v1109
      %v1111 = vpop.f32.mrf.mxu0
      %v1112 = vpop.f32.mrf.mxu0
      %v1113 = vadd.f32 0.0, %v1112
      %v1114 = vpop.f32.mrf.mxu0
      %1115 = vmatprep.mubr.bf16.mxu0 0
      %1116 = vmatmul.mubr.bf16.gmra.mxu0 %v971
      %v1117 = vpop.f32.mrf.mxu0
      %v1118 = vadd.f32 0.0, %v1117
      %v1119 = vpop.f32.mrf.mxu0
      %v1120 = vpop.f32.mrf.mxu0
      %v1121 = vadd.f32 0.0, %v1120
      %v1122 = vpop.f32.mrf.mxu0
      %1123 = vmatprep.mubr.bf16.mxu0 0
      %1124 = vmatmul.mubr.bf16.gmra.mxu0 %v974
      %v1125 = vpop.f32.mrf.mxu0
      %v1126 = vadd.f32 0.0, %v1125
      %v1127 = vpop.f32.mrf.mxu0
      %v1128 = vpop.f32.mrf.mxu0
      %v1129 = vadd.f32 0.0, %v1128
      %v1130 = vpop.f32.mrf.mxu0
      %1131 = vmatprep.mubr.bf16.mxu0 0
      %1132 = vmatmul.mubr.bf16.gmra.mxu0 %v977
      %v1133 = vpop.f32.mrf.mxu0
      %v1134 = vadd.f32 0.0, %v1133
      %v1135 = vpop.f32.mrf.mxu0
      %v1136 = vpop.f32.mrf.mxu0
      %v1137 = vadd.f32 0.0, %v1136
      %v1138 = vpop.f32.mrf.mxu0
      %1139 = vmatprep.mubr.bf16.mxu0 0
      %1140 = vmatmul.mubr.bf16.gmra.mxu0 %v980
      %v1141 = vpop.f32.mrf.mxu0
      %v1142 = vadd.f32 0.0, %v1141
      %v1143 = vpop.f32.mrf.mxu0
      %v1144 = vpop.f32.mrf.mxu0
      %v1145 = vadd.f32 0.0, %v1144
      %v1146 = vpop.f32.mrf.mxu0
      %1147 = vmatprep.mubr.bf16.mxu0 0
      %1148 = vmatmul.mubr.bf16.gmra.mxu0 %v983
      %v1149 = vpop.f32.mrf.mxu0
      %v1150 = vadd.f32 0.0, %v1149
      %v1151 = vpop.f32.mrf.mxu0
      %v1152 = vpop.f32.mrf.mxu0
      %v1153 = vadd.f32 0.0, %v1152
      %v1154 = vpop.f32.mrf.mxu0
      %1155 = vmatprep.mubr.bf16.mxu0 0
      %1156 = vmatmul.mubr.bf16.gmra.mxu0 %v986
      %v1157 = vpop.f32.mrf.mxu0
      %v1158 = vadd.f32 0.0, %v1157
      %v1159 = vpop.f32.mrf.mxu0
      %v1160 = vpop.f32.mrf.mxu0
      %v1161 = vadd.f32 0.0, %v1160
      %v1162 = vpop.f32.mrf.mxu0
      %1163 = vmatprep.mubr.bf16.mxu0 0
      %1164 = vmatmul.mubr.bf16.gmra.mxu0 %v989
      %v1165 = vpop.f32.mrf.mxu0
      %v1166 = vadd.f32 0.0, %v1165
      %v1167 = vpop.f32.mrf.mxu0
      %v1168 = vpop.f32.mrf.mxu0
      %v1169 = vadd.f32 0.0, %v1168
      %v1170 = vpop.f32.mrf.mxu0
      %1171 = vdwg.mxu0
      %v1172 = vsel %vm936, %v768, 0
      %v1174 = vsel %vm936, %v769, 0
      %v1176 = vsel %vm936, %v770, 0
      %v1178 = vsel %vm936, %v771, 0
      %v1180 = vsel %vm936, %v772, 0
      %v1182 = vsel %vm936, %v773, 0
      %v1184 = vsel %vm936, %v774, 0
      %v1186 = vsel %vm936, %v775, 0
      %v1188 = vsel %vm936, %v776, 0
      %v1190 = vsel %vm936, %v777, 0
      %v1192 = vsel %vm936, %v778, 0
      %v1194 = vsel %vm936, %v779, 0
      %v1196 = vsel %vm936, %v780, 0
      %v1198 = vsel %vm936, %v781, 0
      %v1200 = vsel %vm936, %v782, 0
      %v1202 = vsel %vm936, %v783, 0
      %v1204 = vsel %vm936, %v784, 0
      %v1206 = vsel %vm936, %v785, 0
      %v1209 = vsel %vm991, %v690, 0
      %1211 = vmatprep.subr.bf16.mxu0 0
      %1212 = vmatpush1.bf16.msra.mxu0 0
      %1213 = vmatprep.subr.bf16.mxu0 0
      %1214 = vmatpush1.bf16.msra.mxu0 0
      %1215 = vmatprep.subr.bf16.mxu0 0
      %1216 = vmatpush1.bf16.msra.mxu0 0
      %1217 = vmatprep.subr.bf16.mxu0 0
      %1218 = vmatpush1.bf16.msra.mxu0 0
      %1219 = vmatprep.subr.bf16.mxu0 0
      %1220 = vmatpush1.bf16.msra.mxu0 0
      %1221 = vmatprep.subr.bf16.mxu0 0
      %1222 = vmatpush1.bf16.msra.mxu0 0
      %1223 = vmatprep.subr.bf16.mxu0 0
      %1224 = vmatpush1.bf16.msra.mxu0 0
      %1225 = vmatprep.subr.bf16.mxu0 0
      %1226 = vmatpush1.bf16.msra.mxu0 %v1209
      %1227 = vmatprep.subr.bf16.mxu0 0
      %1228 = vmatpush2.bf16.msra.mxu0 0
      %1229 = vmatprep.subr.bf16.mxu0 0
      %1230 = vmatpush2.bf16.msra.mxu0 0
      %1231 = vmatprep.subr.bf16.mxu0 0
      %1232 = vmatpush2.bf16.msra.mxu0 0
      %1233 = vmatprep.subr.bf16.mxu0 0
      %1234 = vmatpush2.bf16.msra.mxu0 0
      %1235 = vmatprep.subr.bf16.mxu0 0
      %1236 = vmatpush2.bf16.msra.mxu0 0
      %1237 = vmatprep.subr.bf16.mxu0 0
      %1238 = vmatpush2.bf16.msra.mxu0 0
      %1239 = vmatprep.subr.bf16.mxu0 0
      %1240 = vmatpush2.bf16.msra.mxu0 0
      %1241 = vmatprep.subr.bf16.mxu0 0
      %1242 = vmatpush2.bf16.msra.mxu0 0
      %1243 = vmatprep.mubr.bf16.mxu0 0
      %1244 = vmatmul.mubr.bf16.gmra.mxu0 %v1172
      %v1245 = vpop.f32.mrf.mxu0
      %v1246 = vadd.f32 %v1030, %v1245
      %v1247 = vpop.f32.mrf.mxu0
      %v1248 = vpop.f32.mrf.mxu0
      %v1249 = vadd.f32 %v1033, %v1248
      %v1250 = vpop.f32.mrf.mxu0
      %1251 = vmatprep.mubr.bf16.mxu0 0
      %1252 = vmatmul.mubr.bf16.gmra.mxu0 %v1174
      %v1253 = vpop.f32.mrf.mxu0
      %v1254 = vadd.f32 %v1038, %v1253
      %v1255 = vpop.f32.mrf.mxu0
      %v1256 = vpop.f32.mrf.mxu0
      %v1257 = vadd.f32 %v1041, %v1256
      %v1258 = vpop.f32.mrf.mxu0
      %1259 = vmatprep.mubr.bf16.mxu0 0
      %1260 = vmatmul.mubr.bf16.gmra.mxu0 %v1176
      %v1261 = vpop.f32.mrf.mxu0
      %v1262 = vadd.f32 %v1046, %v1261
      %v1263 = vpop.f32.mrf.mxu0
      %v1264 = vpop.f32.mrf.mxu0
      %v1265 = vadd.f32 %v1049, %v1264
      %v1266 = vpop.f32.mrf.mxu0
      %1267 = vmatprep.mubr.bf16.mxu0 0
      %1268 = vmatmul.mubr.bf16.gmra.mxu0 %v1178
      %v1269 = vpop.f32.mrf.mxu0
      %v1270 = vadd.f32 %v1054, %v1269
      %v1271 = vpop.f32.mrf.mxu0
      %v1272 = vpop.f32.mrf.mxu0
      %v1273 = vadd.f32 %v1057, %v1272
      %v1274 = vpop.f32.mrf.mxu0
      %1275 = vmatprep.mubr.bf16.mxu0 0
      %1276 = vmatmul.mubr.bf16.gmra.mxu0 %v1180
      %v1277 = vpop.f32.mrf.mxu0
      %v1278 = vadd.f32 %v1062, %v1277
      %v1279 = vpop.f32.mrf.mxu0
      %v1280 = vpop.f32.mrf.mxu0
      %v1281 = vadd.f32 %v1065, %v1280
      %v1282 = vpop.f32.mrf.mxu0
      %1283 = vmatprep.mubr.bf16.mxu0 0
      %1284 = vmatmul.mubr.bf16.gmra.mxu0 %v1182
      %v1285 = vpop.f32.mrf.mxu0
      %v1286 = vadd.f32 %v1070, %v1285
      %v1287 = vpop.f32.mrf.mxu0
      %v1288 = vpop.f32.mrf.mxu0
      %v1289 = vadd.f32 %v1073, %v1288
      %v1290 = vpop.f32.mrf.mxu0
      %1291 = vmatprep.mubr.bf16.mxu0 0
      %1292 = vmatmul.mubr.bf16.gmra.mxu0 %v1184
      %v1293 = vpop.f32.mrf.mxu0
      %v1294 = vadd.f32 %v1078, %v1293
      %v1295 = vpop.f32.mrf.mxu0
      %v1296 = vpop.f32.mrf.mxu0
      %v1297 = vadd.f32 %v1081, %v1296
      %v1298 = vpop.f32.mrf.mxu0
      %1299 = vmatprep.mubr.bf16.mxu0 0
      %1300 = vmatmul.mubr.bf16.gmra.mxu0 %v1186
      %v1301 = vpop.f32.mrf.mxu0
      %v1302 = vadd.f32 %v1086, %v1301
      %v1303 = vpop.f32.mrf.mxu0
      %v1304 = vpop.f32.mrf.mxu0
      %v1305 = vadd.f32 %v1089, %v1304
      %v1306 = vpop.f32.mrf.mxu0
      %1307 = vmatprep.mubr.bf16.mxu0 0
      %1308 = vmatmul.mubr.bf16.gmra.mxu0 %v1188
      %v1309 = vpop.f32.mrf.mxu0
      %v1310 = vadd.f32 %v1094, %v1309
      %v1311 = vpop.f32.mrf.mxu0
      %v1312 = vpop.f32.mrf.mxu0
      %v1313 = vadd.f32 %v1097, %v1312
      %v1314 = vpop.f32.mrf.mxu0
      %1315 = vmatprep.mubr.bf16.mxu0 0
      %1316 = vmatmul.mubr.bf16.gmra.mxu0 %v1190
      %v1317 = vpop.f32.mrf.mxu0
      %v1318 = vadd.f32 %v1102, %v1317
      %v1319 = vpop.f32.mrf.mxu0
      %v1320 = vpop.f32.mrf.mxu0
      %v1321 = vadd.f32 %v1105, %v1320
      %v1322 = vpop.f32.mrf.mxu0
      %1323 = vmatprep.mubr.bf16.mxu0 0
      %1324 = vmatmul.mubr.bf16.gmra.mxu0 %v1192
      %v1325 = vpop.f32.mrf.mxu0
      %v1326 = vadd.f32 %v1110, %v1325
      %v1327 = vpop.f32.mrf.mxu0
      %v1328 = vpop.f32.mrf.mxu0
      %v1329 = vadd.f32 %v1113, %v1328
      %v1330 = vpop.f32.mrf.mxu0
      %1331 = vmatprep.mubr.bf16.mxu0 0
      %1332 = vmatmul.mubr.bf16.gmra.mxu0 %v1194
      %v1333 = vpop.f32.mrf.mxu0
      %v1334 = vadd.f32 %v1118, %v1333
      %v1335 = vpop.f32.mrf.mxu0
      %v1336 = vpop.f32.mrf.mxu0
      %v1337 = vadd.f32 %v1121, %v1336
      %v1338 = vpop.f32.mrf.mxu0
      %1339 = vmatprep.mubr.bf16.mxu0 0
      %1340 = vmatmul.mubr.bf16.gmra.mxu0 %v1196
      %v1341 = vpop.f32.mrf.mxu0
      %v1342 = vadd.f32 %v1126, %v1341
      %v1343 = vpop.f32.mrf.mxu0
      %v1344 = vpop.f32.mrf.mxu0
      %v1345 = vadd.f32 %v1129, %v1344
      %v1346 = vpop.f32.mrf.mxu0
      %1347 = vmatprep.mubr.bf16.mxu0 0
      %1348 = vmatmul.mubr.bf16.gmra.mxu0 %v1198
      %v1349 = vpop.f32.mrf.mxu0
      %v1350 = vadd.f32 %v1134, %v1349
      %v1351 = vpop.f32.mrf.mxu0
      %v1352 = vpop.f32.mrf.mxu0
      %v1353 = vadd.f32 %v1137, %v1352
      %v1354 = vpop.f32.mrf.mxu0
      %1355 = vmatprep.mubr.bf16.mxu0 0
      %1356 = vmatmul.mubr.bf16.gmra.mxu0 %v1200
      %v1357 = vpop.f32.mrf.mxu0
      %v1358 = vadd.f32 %v1142, %v1357
      %v1359 = vpop.f32.mrf.mxu0
      %v1360 = vpop.f32.mrf.mxu0
      %v1361 = vadd.f32 %v1145, %v1360
      %v1362 = vpop.f32.mrf.mxu0
      %1363 = vmatprep.mubr.bf16.mxu0 0
      %1364 = vmatmul.mubr.bf16.gmra.mxu0 %v1202
      %v1365 = vpop.f32.mrf.mxu0
      %v1366 = vadd.f32 %v1150, %v1365
      %v1367 = vpop.f32.mrf.mxu0
      %v1368 = vpop.f32.mrf.mxu0
      %v1369 = vadd.f32 %v1153, %v1368
      %v1370 = vpop.f32.mrf.mxu0
      %1371 = vmatprep.mubr.bf16.mxu0 0
      %1372 = vmatmul.mubr.bf16.gmra.mxu0 %v1204
      %v1373 = vpop.f32.mrf.mxu0
      %v1374 = vadd.f32 %v1158, %v1373
      %v1375 = vpop.f32.mrf.mxu0
      %v1376 = vpop.f32.mrf.mxu0
      %v1377 = vadd.f32 %v1161, %v1376
      %v1378 = vpop.f32.mrf.mxu0
      %1379 = vmatprep.mubr.bf16.mxu0 0
      %1380 = vmatmul.mubr.bf16.gmra.mxu0 %v1206
      %v1381 = vpop.f32.mrf.mxu0
      %v1382 = vadd.f32 %v1166, %v1381
      %v1383 = vpop.f32.mrf.mxu0
      %v1384 = vpop.f32.mrf.mxu0
      %v1385 = vadd.f32 %v1169, %v1384
      %v1386 = vpop.f32.mrf.mxu0
      %1387 = vdwg.mxu0
      %v1388 = vld [vmem:[#allocation2] sm:$0xe]
      %s1389 = scalar_lea.vmem %s185, 4
      %v1390 = vld [vmem:[%s1389] sm:$0x3]
      %v1392 = vunpack.c.l.b16 %v1388
      %v1393 = vpack.c.b16 %v732, %v1392
      %vm1394 = vcmask 1046528
      %v1395 = vrot.slane %v1393, 1
      %v1396 = vrot.slane %v769, 1
      %v1397 = vsel %vm1394, %v1395, %v1396
      %v1398 = vrot.slane %v770, 1
      %v1399 = vsel %vm1394, %v1396, %v1398
      %v1400 = vrot.slane %v771, 1
      %v1401 = vsel %vm1394, %v1398, %v1400
      %v1402 = vrot.slane %v772, 1
      %v1403 = vsel %vm1394, %v1400, %v1402
      %v1404 = vrot.slane %v773, 1
      %v1405 = vsel %vm1394, %v1402, %v1404
      %v1406 = vrot.slane %v774, 1
      %v1407 = vsel %vm1394, %v1404, %v1406
      %v1408 = vrot.slane %v775, 1
      %v1409 = vsel %vm1394, %v1406, %v1408
      %v1410 = vrot.slane %v776, 1
      %v1411 = vsel %vm1394, %v1408, %v1410
      %v1412 = vrot.slane %v777, 1
      %v1413 = vsel %vm1394, %v1410, %v1412
      %v1414 = vrot.slane %v778, 1
      %v1415 = vsel %vm1394, %v1412, %v1414
      %v1416 = vrot.slane %v779, 1
      %v1417 = vsel %vm1394, %v1414, %v1416
      %v1418 = vrot.slane %v780, 1
      %v1419 = vsel %vm1394, %v1416, %v1418
      %v1420 = vrot.slane %v781, 1
      %v1421 = vsel %vm1394, %v1418, %v1420
      %v1422 = vrot.slane %v782, 1
      %v1423 = vsel %vm1394, %v1420, %v1422
      %v1424 = vrot.slane %v783, 1
      %v1425 = vsel %vm1394, %v1422, %v1424
      %v1426 = vrot.slane %v784, 1
      %v1427 = vsel %vm1394, %v1424, %v1426
      %v1428 = vrot.slane %v785, 1
      %v1429 = vsel %vm1394, %v1426, %v1428
      %v1430 = vrot.slane %v786, 1
      %v1431 = vsel %vm1394, %v1428, %v1430
      %v1433 = vsel %vm936, %v1397, 0
      %v1436 = vsel %vm936, %v1399, 0
      %v1439 = vsel %vm936, %v1401, 0
      %v1442 = vsel %vm936, %v1403, 0
      %v1445 = vsel %vm936, %v1405, 0
      %v1448 = vsel %vm936, %v1407, 0
      %v1451 = vsel %vm936, %v1409, 0
      %v1454 = vsel %vm936, %v1411, 0
      %v1457 = vsel %vm936, %v1413, 0
      %v1460 = vsel %vm936, %v1415, 0
      %v1463 = vsel %vm936, %v1417, 0
      %v1466 = vsel %vm936, %v1419, 0
      %v1469 = vsel %vm936, %v1421, 0
      %v1472 = vsel %vm936, %v1423, 0
      %v1475 = vsel %vm936, %v1425, 0
      %v1478 = vsel %vm936, %v1427, 0
      %v1481 = vsel %vm936, %v1429, 0
      %v1484 = vsel %vm936, %v1431, 0
      %v1487 = vsel %vm991, %v1390, 0
      %1489 = vmatprep.subr.bf16.mxu0 0
      %1490 = vmatpush1.bf16.msra.mxu0 0
      %1491 = vmatprep.subr.bf16.mxu0 0
      %1492 = vmatpush1.bf16.msra.mxu0 0
      %1493 = vmatprep.subr.bf16.mxu0 0
      %1494 = vmatpush1.bf16.msra.mxu0 0
      %1495 = vmatprep.subr.bf16.mxu0 0
      %1496 = vmatpush1.bf16.msra.mxu0 0
      %1497 = vmatprep.subr.bf16.mxu0 0
      %1498 = vmatpush1.bf16.msra.mxu0 0
      %1499 = vmatprep.subr.bf16.mxu0 0
      %1500 = vmatpush1.bf16.msra.mxu0 0
      %1501 = vmatprep.subr.bf16.mxu0 0
      %1502 = vmatpush1.bf16.msra.mxu0 0
      %1503 = vmatprep.subr.bf16.mxu0 0
      %1504 = vmatpush1.bf16.msra.mxu0 %v1487
      %1505 = vmatprep.subr.bf16.mxu0 0
      %1506 = vmatpush2.bf16.msra.mxu0 0
      %1507 = vmatprep.subr.bf16.mxu0 0
      %1508 = vmatpush2.bf16.msra.mxu0 0
      %1509 = vmatprep.subr.bf16.mxu0 0
      %1510 = vmatpush2.bf16.msra.mxu0 0
      %1511 = vmatprep.subr.bf16.mxu0 0
      %1512 = vmatpush2.bf16.msra.mxu0 0
      %1513 = vmatprep.subr.bf16.mxu0 0
      %1514 = vmatpush2.bf16.msra.mxu0 0
      %1515 = vmatprep.subr.bf16.mxu0 0
      %1516 = vmatpush2.bf16.msra.mxu0 0
      %1517 = vmatprep.subr.bf16.mxu0 0
      %1518 = vmatpush2.bf16.msra.mxu0 0
      %1519 = vmatprep.subr.bf16.mxu0 0
      %1520 = vmatpush2.bf16.msra.mxu0 0
      %1521 = vmatprep.mubr.bf16.mxu0 0
      %1522 = vmatmul.mubr.bf16.gmra.mxu0 %v1433
      %v1523 = vpop.f32.mrf.mxu0
      %v1524 = vadd.f32 0.0, %v1523
      %v1525 = vpop.f32.mrf.mxu0
      %v1526 = vpop.f32.mrf.mxu0
      %v1527 = vadd.f32 0.0, %v1526
      %v1528 = vpop.f32.mrf.mxu0
      %1529 = vmatprep.mubr.bf16.mxu0 0
      %1530 = vmatmul.mubr.bf16.gmra.mxu0 %v1436
      %v1531 = vpop.f32.mrf.mxu0
      %v1532 = vadd.f32 0.0, %v1531
      %v1533 = vpop.f32.mrf.mxu0
      %v1534 = vpop.f32.mrf.mxu0
      %v1535 = vadd.f32 0.0, %v1534
      %v1536 = vpop.f32.mrf.mxu0
      %1537 = vmatprep.mubr.bf16.mxu0 0
      %1538 = vmatmul.mubr.bf16.gmra.mxu0 %v1439
      %v1539 = vpop.f32.mrf.mxu0
      %v1540 = vadd.f32 0.0, %v1539
      %v1541 = vpop.f32.mrf.mxu0
      %v1542 = vpop.f32.mrf.mxu0
      %v1543 = vadd.f32 0.0, %v1542
      %v1544 = vpop.f32.mrf.mxu0
      %1545 = vmatprep.mubr.bf16.mxu0 0
      %1546 = vmatmul.mubr.bf16.gmra.mxu0 %v1442
      %v1547 = vpop.f32.mrf.mxu0
      %v1548 = vadd.f32 0.0, %v1547
      %v1549 = vpop.f32.mrf.mxu0
      %v1550 = vpop.f32.mrf.mxu0
      %v1551 = vadd.f32 0.0, %v1550
      %v1552 = vpop.f32.mrf.mxu0
      %1553 = vmatprep.mubr.bf16.mxu0 0
      %1554 = vmatmul.mubr.bf16.gmra.mxu0 %v1445
      %v1555 = vpop.f32.mrf.mxu0
      %v1556 = vadd.f32 0.0, %v1555
      %v1557 = vpop.f32.mrf.mxu0
      %v1558 = vpop.f32.mrf.mxu0
      %v1559 = vadd.f32 0.0, %v1558
      %v1560 = vpop.f32.mrf.mxu0
      %1561 = vmatprep.mubr.bf16.mxu0 0
      %1562 = vmatmul.mubr.bf16.gmra.mxu0 %v1448
      %v1563 = vpop.f32.mrf.mxu0
      %v1564 = vadd.f32 0.0, %v1563
      %v1565 = vpop.f32.mrf.mxu0
      %v1566 = vpop.f32.mrf.mxu0
      %v1567 = vadd.f32 0.0, %v1566
      %v1568 = vpop.f32.mrf.mxu0
      %1569 = vmatprep.mubr.bf16.mxu0 0
      %1570 = vmatmul.mubr.bf16.gmra.mxu0 %v1451
      %v1571 = vpop.f32.mrf.mxu0
      %v1572 = vadd.f32 0.0, %v1571
      %v1573 = vpop.f32.mrf.mxu0
      %v1574 = vpop.f32.mrf.mxu0
      %v1575 = vadd.f32 0.0, %v1574
      %v1576 = vpop.f32.mrf.mxu0
      %1577 = vmatprep.mubr.bf16.mxu0 0
      %1578 = vmatmul.mubr.bf16.gmra.mxu0 %v1454
      %v1579 = vpop.f32.mrf.mxu0
      %v1580 = vadd.f32 0.0, %v1579
      %v1581 = vpop.f32.mrf.mxu0
      %v1582 = vpop.f32.mrf.mxu0
      %v1583 = vadd.f32 0.0, %v1582
      %v1584 = vpop.f32.mrf.mxu0
      %1585 = vmatprep.mubr.bf16.mxu0 0
      %1586 = vmatmul.mubr.bf16.gmra.mxu0 %v1457
      %v1587 = vpop.f32.mrf.mxu0
      %v1588 = vadd.f32 0.0, %v1587
      %v1589 = vpop.f32.mrf.mxu0
      %v1590 = vpop.f32.mrf.mxu0
      %v1591 = vadd.f32 0.0, %v1590
      %v1592 = vpop.f32.mrf.mxu0
      %1593 = vmatprep.mubr.bf16.mxu0 0
      %1594 = vmatmul.mubr.bf16.gmra.mxu0 %v1460
      %v1595 = vpop.f32.mrf.mxu0
      %v1596 = vadd.f32 0.0, %v1595
      %v1597 = vpop.f32.mrf.mxu0
      %v1598 = vpop.f32.mrf.mxu0
      %v1599 = vadd.f32 0.0, %v1598
      %v1600 = vpop.f32.mrf.mxu0
      %1601 = vmatprep.mubr.bf16.mxu0 0
      %1602 = vmatmul.mubr.bf16.gmra.mxu0 %v1463
      %v1603 = vpop.f32.mrf.mxu0
      %v1604 = vadd.f32 0.0, %v1603
      %v1605 = vpop.f32.mrf.mxu0
      %v1606 = vpop.f32.mrf.mxu0
      %v1607 = vadd.f32 0.0, %v1606
      %v1608 = vpop.f32.mrf.mxu0
      %1609 = vmatprep.mubr.bf16.mxu0 0
      %1610 = vmatmul.mubr.bf16.gmra.mxu0 %v1466
      %v1611 = vpop.f32.mrf.mxu0
      %v1612 = vadd.f32 0.0, %v1611
      %v1613 = vpop.f32.mrf.mxu0
      %v1614 = vpop.f32.mrf.mxu0
      %v1615 = vadd.f32 0.0, %v1614
      %v1616 = vpop.f32.mrf.mxu0
      %1617 = vmatprep.mubr.bf16.mxu0 0
      %1618 = vmatmul.mubr.bf16.gmra.mxu0 %v1469
      %v1619 = vpop.f32.mrf.mxu0
      %v1620 = vadd.f32 0.0, %v1619
      %v1621 = vpop.f32.mrf.mxu0
      %v1622 = vpop.f32.mrf.mxu0
      %v1623 = vadd.f32 0.0, %v1622
      %v1624 = vpop.f32.mrf.mxu0
      %1625 = vmatprep.mubr.bf16.mxu0 0
      %1626 = vmatmul.mubr.bf16.gmra.mxu0 %v1472
      %v1627 = vpop.f32.mrf.mxu0
      %v1628 = vadd.f32 0.0, %v1627
      %v1629 = vpop.f32.mrf.mxu0
      %v1630 = vpop.f32.mrf.mxu0
      %v1631 = vadd.f32 0.0, %v1630
      %v1632 = vpop.f32.mrf.mxu0
      %1633 = vmatprep.mubr.bf16.mxu0 0
      %1634 = vmatmul.mubr.bf16.gmra.mxu0 %v1475
      %v1635 = vpop.f32.mrf.mxu0
      %v1636 = vadd.f32 0.0, %v1635
      %v1637 = vpop.f32.mrf.mxu0
      %v1638 = vpop.f32.mrf.mxu0
      %v1639 = vadd.f32 0.0, %v1638
      %v1640 = vpop.f32.mrf.mxu0
      %1641 = vmatprep.mubr.bf16.mxu0 0
      %1642 = vmatmul.mubr.bf16.gmra.mxu0 %v1478
      %v1643 = vpop.f32.mrf.mxu0
      %v1644 = vadd.f32 0.0, %v1643
      %v1645 = vpop.f32.mrf.mxu0
      %v1646 = vpop.f32.mrf.mxu0
      %v1647 = vadd.f32 0.0, %v1646
      %v1648 = vpop.f32.mrf.mxu0
      %1649 = vmatprep.mubr.bf16.mxu0 0
      %1650 = vmatmul.mubr.bf16.gmra.mxu0 %v1481
      %v1651 = vpop.f32.mrf.mxu0
      %v1652 = vadd.f32 0.0, %v1651
      %v1653 = vpop.f32.mrf.mxu0
      %v1654 = vpop.f32.mrf.mxu0
      %v1655 = vadd.f32 0.0, %v1654
      %v1656 = vpop.f32.mrf.mxu0
      %1657 = vmatprep.mubr.bf16.mxu0 0
      %1658 = vmatmul.mubr.bf16.gmra.mxu0 %v1484
      %v1659 = vpop.f32.mrf.mxu0
      %v1660 = vadd.f32 0.0, %v1659
      %v1661 = vpop.f32.mrf.mxu0
      %v1662 = vpop.f32.mrf.mxu0
      %v1663 = vadd.f32 0.0, %v1662
      %v1664 = vpop.f32.mrf.mxu0
      %1665 = vdwg.mxu0
      %v1666 = vadd.f32 %v1246, %v1524
      %v1667 = vadd.f32 %v1249, %v1527
      %v1668 = vadd.f32 %v1254, %v1532
      %v1669 = vadd.f32 %v1257, %v1535
      %v1670 = vadd.f32 %v1262, %v1540
      %v1671 = vadd.f32 %v1265, %v1543
      %v1672 = vadd.f32 %v1270, %v1548
      %v1673 = vadd.f32 %v1273, %v1551
      %v1674 = vadd.f32 %v1278, %v1556
      %v1675 = vadd.f32 %v1281, %v1559
      %v1676 = vadd.f32 %v1286, %v1564
      %v1677 = vadd.f32 %v1289, %v1567
      %v1678 = vadd.f32 %v1294, %v1572
      %v1679 = vadd.f32 %v1297, %v1575
      %v1680 = vadd.f32 %v1302, %v1580
      %v1681 = vadd.f32 %v1305, %v1583
      %v1682 = vadd.f32 %v1310, %v1588
      %v1683 = vadd.f32 %v1313, %v1591
      %v1684 = vadd.f32 %v1318, %v1596
      %v1685 = vadd.f32 %v1321, %v1599
      %v1686 = vadd.f32 %v1326, %v1604
      %v1687 = vadd.f32 %v1329, %v1607
      %v1688 = vadd.f32 %v1334, %v1612
      %v1689 = vadd.f32 %v1337, %v1615
      %v1690 = vadd.f32 %v1342, %v1620
      %v1691 = vadd.f32 %v1345, %v1623
      %v1692 = vadd.f32 %v1350, %v1628
      %v1693 = vadd.f32 %v1353, %v1631
      %v1694 = vadd.f32 %v1358, %v1636
      %v1695 = vadd.f32 %v1361, %v1639
      %v1696 = vadd.f32 %v1366, %v1644
      %v1697 = vadd.f32 %v1369, %v1647
      %v1698 = vadd.f32 %v1374, %v1652
      %v1699 = vadd.f32 %v1377, %v1655
      %v1700 = vadd.f32 %v1382, %v1660
      %v1701 = vadd.f32 %v1385, %v1663
      %v1702 = vld [vmem:[#allocation2 + $0x8] sm:$0xe]
      %v1703 = vld [vmem:[#allocation2 + $0xc] sm:$0xf]
      %v1704 = vld [vmem:[#allocation2 + $0x10] sm:$0xf]
      %v1705 = vld [vmem:[#allocation2 + $0x14] sm:$0xf]
      %v1706 = vld [vmem:[#allocation2 + $0x18] sm:$0xf]
      %v1707 = vld [vmem:[#allocation2 + $0x1c] sm:$0xf]
      %v1708 = vld [vmem:[#allocation2 + $0x20] sm:$0xf]
      %v1709 = vld [vmem:[#allocation2 + $0x24] sm:$0xf]
      %v1710 = vld [vmem:[#allocation2 + $0x28] sm:$0xf]
      %v1711 = vld [vmem:[#allocation2 + $0x2c] sm:$0xf]
      %v1712 = vld [vmem:[#allocation2 + $0x30] sm:$0xf]
      %v1713 = vld [vmem:[#allocation2 + $0x34] sm:$0xf]
      %v1714 = vld [vmem:[#allocation2 + $0x38] sm:$0xf]
      %v1715 = vld [vmem:[#allocation2 + $0x3c] sm:$0xf]
      %v1716 = vld [vmem:[#allocation2 + $0x40] sm:$0xf]
      %v1717 = vld [vmem:[#allocation2 + $0x44] sm:$0xf]
      %v1718 = vld [vmem:[#allocation2 + $0x48] sm:$0xf]
      %v1719 = vld [vmem:[#allocation2 + $0x4c] sm:$0xf]
      %v1720 = vld [vmem:[#allocation2 + $0x50] sm:$0xf]
      %v1721 = vld [vmem:[#allocation2 + $0x54] sm:$0xf]
      %v1722 = vld [vmem:[#allocation2 + $0x58] sm:$0xf]
      %v1723 = vld [vmem:[#allocation2 + $0x5c] sm:$0xf]
      %v1724 = vld [vmem:[#allocation2 + $0x60] sm:$0xf]
      %v1725 = vld [vmem:[#allocation2 + $0x64] sm:$0xf]
      %v1726 = vld [vmem:[#allocation2 + $0x68] sm:$0xf]
      %v1727 = vld [vmem:[#allocation2 + $0x6c] sm:$0xf]
      %v1728 = vld [vmem:[#allocation2 + $0x70] sm:$0xf]
      %v1729 = vld [vmem:[#allocation2 + $0x74] sm:$0xf]
      %v1730 = vld [vmem:[#allocation2 + $0x78] sm:$0xf]
      %v1731 = vld [vmem:[#allocation2 + $0x7c] sm:$0xf]
      %v1732 = vld [vmem:[#allocation2 + $0x80] sm:$0xf]
      %v1733 = vld [vmem:[#allocation2 + $0x84] sm:$0xf]
      %v1734 = vld [vmem:[#allocation2 + $0x88] sm:$0xf]
      %v1735 = vld [vmem:[#allocation2 + $0x8c] sm:$0xf]
      %v1736 = vld [vmem:[#allocation2 + $0x90] sm:$0xf]
      %v1737 = vld [vmem:[#allocation2 + $0x94] sm:$0xf]
      %v1738 = vld [vmem:[#allocation2 + $0x98] sm:$0x1]
      %s1739 = scalar_lea.vmem %s185, 6
      %v1740 = vld [vmem:[%s1739] sm:$0x3]
      %v1778 = vunpack.c.l.b16 %v1702
      %v1779 = vunpack.c.l.b16 %v1703
      %v1780 = vunpack.c.l.b16 %v1704
      %v1781 = vunpack.c.l.b16 %v1705
      %v1782 = vunpack.c.l.b16 %v1706
      %v1783 = vunpack.c.l.b16 %v1707
      %v1784 = vunpack.c.l.b16 %v1708
      %v1785 = vunpack.c.l.b16 %v1709
      %v1786 = vunpack.c.l.b16 %v1710
      %v1787 = vunpack.c.l.b16 %v1711
      %v1788 = vunpack.c.l.b16 %v1712
      %v1789 = vunpack.c.l.b16 %v1713
      %v1790 = vunpack.c.l.b16 %v1714
      %v1791 = vunpack.c.l.b16 %v1715
      %v1792 = vunpack.c.l.b16 %v1716
      %v1793 = vunpack.c.l.b16 %v1717
      %v1794 = vunpack.c.l.b16 %v1718
      %v1795 = vunpack.c.l.b16 %v1719
      %v1796 = vunpack.c.l.b16 %v1720
      %v1797 = vunpack.c.l.b16 %v1721
      %v1798 = vunpack.c.l.b16 %v1722
      %v1799 = vunpack.c.l.b16 %v1723
      %v1800 = vunpack.c.l.b16 %v1724
      %v1801 = vunpack.c.l.b16 %v1725
      %v1802 = vunpack.c.l.b16 %v1726
      %v1803 = vunpack.c.l.b16 %v1727
      %v1804 = vunpack.c.l.b16 %v1728
      %v1805 = vunpack.c.l.b16 %v1729
      %v1806 = vunpack.c.l.b16 %v1730
      %v1807 = vunpack.c.l.b16 %v1731
      %v1808 = vunpack.c.l.b16 %v1732
      %v1809 = vunpack.c.l.b16 %v1733
      %v1810 = vunpack.c.l.b16 %v1734
      %v1811 = vunpack.c.l.b16 %v1735
      %v1812 = vunpack.c.l.b16 %v1736
      %v1813 = vunpack.c.l.b16 %v1737
      %v1814 = vunpack.c.l.b16 %v1738
      %v1815 = vpack.c.b16 %v1779, %v1778
      %v1816 = vpack.c.b16 %v1781, %v1780
      %v1817 = vpack.c.b16 %v1783, %v1782
      %v1818 = vpack.c.b16 %v1785, %v1784
      %v1819 = vpack.c.b16 %v1787, %v1786
      %v1820 = vpack.c.b16 %v1789, %v1788
      %v1821 = vpack.c.b16 %v1791, %v1790
      %v1822 = vpack.c.b16 %v1793, %v1792
      %v1823 = vpack.c.b16 %v1795, %v1794
      %v1824 = vpack.c.b16 %v1797, %v1796
      %v1825 = vpack.c.b16 %v1799, %v1798
      %v1826 = vpack.c.b16 %v1801, %v1800
      %v1827 = vpack.c.b16 %v1803, %v1802
      %v1828 = vpack.c.b16 %v1805, %v1804
      %v1829 = vpack.c.b16 %v1807, %v1806
      %v1830 = vpack.c.b16 %v1809, %v1808
      %v1831 = vpack.c.b16 %v1811, %v1810
      %v1832 = vpack.c.b16 %v1813, %v1812
      %v1833 = vpack.c.b16 %v1814, %v1814
      %v1834 = vrot.slane %v1815, 1
      %v1835 = vrot.slane %v1816, 1
      %v1836 = vsel %vm1394, %v1834, %v1835
      %v1837 = vrot.slane %v1817, 1
      %v1838 = vsel %vm1394, %v1835, %v1837
      %v1839 = vrot.slane %v1818, 1
      %v1840 = vsel %vm1394, %v1837, %v1839
      %v1841 = vrot.slane %v1819, 1
      %v1842 = vsel %vm1394, %v1839, %v1841
      %v1843 = vrot.slane %v1820, 1
      %v1844 = vsel %vm1394, %v1841, %v1843
      %v1845 = vrot.slane %v1821, 1
      %v1846 = vsel %vm1394, %v1843, %v1845
      %v1847 = vrot.slane %v1822, 1
      %v1848 = vsel %vm1394, %v1845, %v1847
      %v1849 = vrot.slane %v1823, 1
      %v1850 = vsel %vm1394, %v1847, %v1849
      %v1851 = vrot.slane %v1824, 1
      %v1852 = vsel %vm1394, %v1849, %v1851
      %v1853 = vrot.slane %v1825, 1
      %v1854 = vsel %vm1394, %v1851, %v1853
      %v1855 = vrot.slane %v1826, 1
      %v1856 = vsel %vm1394, %v1853, %v1855
      %v1857 = vrot.slane %v1827, 1
      %v1858 = vsel %vm1394, %v1855, %v1857
      %v1859 = vrot.slane %v1828, 1
      %v1860 = vsel %vm1394, %v1857, %v1859
      %v1861 = vrot.slane %v1829, 1
      %v1862 = vsel %vm1394, %v1859, %v1861
      %v1863 = vrot.slane %v1830, 1
      %v1864 = vsel %vm1394, %v1861, %v1863
      %v1865 = vrot.slane %v1831, 1
      %v1866 = vsel %vm1394, %v1863, %v1865
      %v1867 = vrot.slane %v1832, 1
      %v1868 = vsel %vm1394, %v1865, %v1867
      %v1869 = vrot.slane %v1833, 1
      %v1870 = vsel %vm1394, %v1867, %v1869
      %v1872 = vsel %vm936, %v1836, 0
      %v1875 = vsel %vm936, %v1838, 0
      %v1878 = vsel %vm936, %v1840, 0
      %v1881 = vsel %vm936, %v1842, 0
      %v1884 = vsel %vm936, %v1844, 0
      %v1887 = vsel %vm936, %v1846, 0
      %v1890 = vsel %vm936, %v1848, 0
      %v1893 = vsel %vm936, %v1850, 0
      %v1896 = vsel %vm936, %v1852, 0
      %v1899 = vsel %vm936, %v1854, 0
      %v1902 = vsel %vm936, %v1856, 0
      %v1905 = vsel %vm936, %v1858, 0
      %v1908 = vsel %vm936, %v1860, 0
      %v1911 = vsel %vm936, %v1862, 0
      %v1914 = vsel %vm936, %v1864, 0
      %v1917 = vsel %vm936, %v1866, 0
      %v1920 = vsel %vm936, %v1868, 0
      %v1923 = vsel %vm936, %v1870, 0
      %v1926 = vsel %vm991, %v1740, 0
      %1928 = vmatprep.subr.bf16.mxu0 0
      %1929 = vmatpush1.bf16.msra.mxu0 0
      %1930 = vmatprep.subr.bf16.mxu0 0
      %1931 = vmatpush1.bf16.msra.mxu0 0
      %1932 = vmatprep.subr.bf16.mxu0 0
      %1933 = vmatpush1.bf16.msra.mxu0 0
      %1934 = vmatprep.subr.bf16.mxu0 0
      %1935 = vmatpush1.bf16.msra.mxu0 0
      %1936 = vmatprep.subr.bf16.mxu0 0
      %1937 = vmatpush1.bf16.msra.mxu0 0
      %1938 = vmatprep.subr.bf16.mxu0 0
      %1939 = vmatpush1.bf16.msra.mxu0 0
      %1940 = vmatprep.subr.bf16.mxu0 0
      %1941 = vmatpush1.bf16.msra.mxu0 0
      %1942 = vmatprep.subr.bf16.mxu0 0
      %1943 = vmatpush1.bf16.msra.mxu0 %v1926
      %1944 = vmatprep.subr.bf16.mxu0 0
      %1945 = vmatpush2.bf16.msra.mxu0 0
      %1946 = vmatprep.subr.bf16.mxu0 0
      %1947 = vmatpush2.bf16.msra.mxu0 0
      %1948 = vmatprep.subr.bf16.mxu0 0
      %1949 = vmatpush2.bf16.msra.mxu0 0
      %1950 = vmatprep.subr.bf16.mxu0 0
      %1951 = vmatpush2.bf16.msra.mxu0 0
      %1952 = vmatprep.subr.bf16.mxu0 0
      %1953 = vmatpush2.bf16.msra.mxu0 0
      %1954 = vmatprep.subr.bf16.mxu0 0
      %1955 = vmatpush2.bf16.msra.mxu0 0
      %1956 = vmatprep.subr.bf16.mxu0 0
      %1957 = vmatpush2.bf16.msra.mxu0 0
      %1958 = vmatprep.subr.bf16.mxu0 0
      %1959 = vmatpush2.bf16.msra.mxu0 0
      %1960 = vmatprep.mubr.bf16.mxu0 0
      %1961 = vmatmul.mubr.bf16.gmra.mxu0 %v1872
      %v1962 = vpop.f32.mrf.mxu0
      %v1963 = vadd.f32 0.0, %v1962
      %v1964 = vpop.f32.mrf.mxu0
      %v1965 = vpop.f32.mrf.mxu0
      %v1966 = vadd.f32 0.0, %v1965
      %v1967 = vpop.f32.mrf.mxu0
      %1968 = vmatprep.mubr.bf16.mxu0 0
      %1969 = vmatmul.mubr.bf16.gmra.mxu0 %v1875
      %v1970 = vpop.f32.mrf.mxu0
      %v1971 = vadd.f32 0.0, %v1970
      %v1972 = vpop.f32.mrf.mxu0
      %v1973 = vpop.f32.mrf.mxu0
      %v1974 = vadd.f32 0.0, %v1973
      %v1975 = vpop.f32.mrf.mxu0
      %1976 = vmatprep.mubr.bf16.mxu0 0
      %1977 = vmatmul.mubr.bf16.gmra.mxu0 %v1878
      %v1978 = vpop.f32.mrf.mxu0
      %v1979 = vadd.f32 0.0, %v1978
      %v1980 = vpop.f32.mrf.mxu0
      %v1981 = vpop.f32.mrf.mxu0
      %v1982 = vadd.f32 0.0, %v1981
      %v1983 = vpop.f32.mrf.mxu0
      %1984 = vmatprep.mubr.bf16.mxu0 0
      %1985 = vmatmul.mubr.bf16.gmra.mxu0 %v1881
      %v1986 = vpop.f32.mrf.mxu0
      %v1987 = vadd.f32 0.0, %v1986
      %v1988 = vpop.f32.mrf.mxu0
      %v1989 = vpop.f32.mrf.mxu0
      %v1990 = vadd.f32 0.0, %v1989
      %v1991 = vpop.f32.mrf.mxu0
      %1992 = vmatprep.mubr.bf16.mxu0 0
      %1993 = vmatmul.mubr.bf16.gmra.mxu0 %v1884
      %v1994 = vpop.f32.mrf.mxu0
      %v1995 = vadd.f32 0.0, %v1994
      %v1996 = vpop.f32.mrf.mxu0
      %v1997 = vpop.f32.mrf.mxu0
      %v1998 = vadd.f32 0.0, %v1997
      %v1999 = vpop.f32.mrf.mxu0
      %2000 = vmatprep.mubr.bf16.mxu0 0
      %2001 = vmatmul.mubr.bf16.gmra.mxu0 %v1887
      %v2002 = vpop.f32.mrf.mxu0
      %v2003 = vadd.f32 0.0, %v2002
      %v2004 = vpop.f32.mrf.mxu0
      %v2005 = vpop.f32.mrf.mxu0
      %v2006 = vadd.f32 0.0, %v2005
      %v2007 = vpop.f32.mrf.mxu0
      %2008 = vmatprep.mubr.bf16.mxu0 0
      %2009 = vmatmul.mubr.bf16.gmra.mxu0 %v1890
      %v2010 = vpop.f32.mrf.mxu0
      %v2011 = vadd.f32 0.0, %v2010
      %v2012 = vpop.f32.mrf.mxu0
      %v2013 = vpop.f32.mrf.mxu0
      %v2014 = vadd.f32 0.0, %v2013
      %v2015 = vpop.f32.mrf.mxu0
      %2016 = vmatprep.mubr.bf16.mxu0 0
      %2017 = vmatmul.mubr.bf16.gmra.mxu0 %v1893
      %v2018 = vpop.f32.mrf.mxu0
      %v2019 = vadd.f32 0.0, %v2018
      %v2020 = vpop.f32.mrf.mxu0
      %v2021 = vpop.f32.mrf.mxu0
      %v2022 = vadd.f32 0.0, %v2021
      %v2023 = vpop.f32.mrf.mxu0
      %2024 = vmatprep.mubr.bf16.mxu0 0
      %2025 = vmatmul.mubr.bf16.gmra.mxu0 %v1896
      %v2026 = vpop.f32.mrf.mxu0
      %v2027 = vadd.f32 0.0, %v2026
      %v2028 = vpop.f32.mrf.mxu0
      %v2029 = vpop.f32.mrf.mxu0
      %v2030 = vadd.f32 0.0, %v2029
      %v2031 = vpop.f32.mrf.mxu0
      %2032 = vmatprep.mubr.bf16.mxu0 0
      %2033 = vmatmul.mubr.bf16.gmra.mxu0 %v1899
      %v2034 = vpop.f32.mrf.mxu0
      %v2035 = vadd.f32 0.0, %v2034
      %v2036 = vpop.f32.mrf.mxu0
      %v2037 = vpop.f32.mrf.mxu0
      %v2038 = vadd.f32 0.0, %v2037
      %v2039 = vpop.f32.mrf.mxu0
      %2040 = vmatprep.mubr.bf16.mxu0 0
      %2041 = vmatmul.mubr.bf16.gmra.mxu0 %v1902
      %v2042 = vpop.f32.mrf.mxu0
      %v2043 = vadd.f32 0.0, %v2042
      %v2044 = vpop.f32.mrf.mxu0
      %v2045 = vpop.f32.mrf.mxu0
      %v2046 = vadd.f32 0.0, %v2045
      %v2047 = vpop.f32.mrf.mxu0
      %2048 = vmatprep.mubr.bf16.mxu0 0
      %2049 = vmatmul.mubr.bf16.gmra.mxu0 %v1905
      %v2050 = vpop.f32.mrf.mxu0
      %v2051 = vadd.f32 0.0, %v2050
      %v2052 = vpop.f32.mrf.mxu0
      %v2053 = vpop.f32.mrf.mxu0
      %v2054 = vadd.f32 0.0, %v2053
      %v2055 = vpop.f32.mrf.mxu0
      %2056 = vmatprep.mubr.bf16.mxu0 0
      %2057 = vmatmul.mubr.bf16.gmra.mxu0 %v1908
      %v2058 = vpop.f32.mrf.mxu0
      %v2059 = vadd.f32 0.0, %v2058
      %v2060 = vpop.f32.mrf.mxu0
      %v2061 = vpop.f32.mrf.mxu0
      %v2062 = vadd.f32 0.0, %v2061
      %v2063 = vpop.f32.mrf.mxu0
      %2064 = vmatprep.mubr.bf16.mxu0 0
      %2065 = vmatmul.mubr.bf16.gmra.mxu0 %v1911
      %v2066 = vpop.f32.mrf.mxu0
      %v2067 = vadd.f32 0.0, %v2066
      %v2068 = vpop.f32.mrf.mxu0
      %v2069 = vpop.f32.mrf.mxu0
      %v2070 = vadd.f32 0.0, %v2069
      %v2071 = vpop.f32.mrf.mxu0
      %2072 = vmatprep.mubr.bf16.mxu0 0
      %2073 = vmatmul.mubr.bf16.gmra.mxu0 %v1914
      %v2074 = vpop.f32.mrf.mxu0
      %v2075 = vadd.f32 0.0, %v2074
      %v2076 = vpop.f32.mrf.mxu0
      %v2077 = vpop.f32.mrf.mxu0
      %v2078 = vadd.f32 0.0, %v2077
      %v2079 = vpop.f32.mrf.mxu0
      %2080 = vmatprep.mubr.bf16.mxu0 0
      %2081 = vmatmul.mubr.bf16.gmra.mxu0 %v1917
      %v2082 = vpop.f32.mrf.mxu0
      %v2083 = vadd.f32 0.0, %v2082
      %v2084 = vpop.f32.mrf.mxu0
      %v2085 = vpop.f32.mrf.mxu0
      %v2086 = vadd.f32 0.0, %v2085
      %v2087 = vpop.f32.mrf.mxu0
      %2088 = vmatprep.mubr.bf16.mxu0 0
      %2089 = vmatmul.mubr.bf16.gmra.mxu0 %v1920
      %v2090 = vpop.f32.mrf.mxu0
      %v2091 = vadd.f32 0.0, %v2090
      %v2092 = vpop.f32.mrf.mxu0
      %v2093 = vpop.f32.mrf.mxu0
      %v2094 = vadd.f32 0.0, %v2093
      %v2095 = vpop.f32.mrf.mxu0
      %2096 = vmatprep.mubr.bf16.mxu0 0
      %2097 = vmatmul.mubr.bf16.gmra.mxu0 %v1923
      %v2098 = vpop.f32.mrf.mxu0
      %v2099 = vadd.f32 0.0, %v2098
      %v2100 = vpop.f32.mrf.mxu0
      %v2101 = vpop.f32.mrf.mxu0
      %v2102 = vadd.f32 0.0, %v2101
      %v2103 = vpop.f32.mrf.mxu0
      %2104 = vdwg.mxu0
      %v2105 = vadd.f32 %v1666, %v1963
      %v2106 = vadd.f32 %v1667, %v1966
      %v2107 = vadd.f32 %v1668, %v1971
      %v2108 = vadd.f32 %v1669, %v1974
      %v2109 = vadd.f32 %v1670, %v1979
      %v2110 = vadd.f32 %v1671, %v1982
      %v2111 = vadd.f32 %v1672, %v1987
      %v2112 = vadd.f32 %v1673, %v1990
      %v2113 = vadd.f32 %v1674, %v1995
      %v2114 = vadd.f32 %v1675, %v1998
      %v2115 = vadd.f32 %v1676, %v2003
      %v2116 = vadd.f32 %v1677, %v2006
      %v2117 = vadd.f32 %v1678, %v2011
      %v2118 = vadd.f32 %v1679, %v2014
      %v2119 = vadd.f32 %v1680, %v2019
      %v2120 = vadd.f32 %v1681, %v2022
      %v2121 = vadd.f32 %v1682, %v2027
      %v2122 = vadd.f32 %v1683, %v2030
      %v2123 = vadd.f32 %v1684, %v2035
      %v2124 = vadd.f32 %v1685, %v2038
      %v2125 = vadd.f32 %v1686, %v2043
      %v2126 = vadd.f32 %v1687, %v2046
      %v2127 = vadd.f32 %v1688, %v2051
      %v2128 = vadd.f32 %v1689, %v2054
      %v2129 = vadd.f32 %v1690, %v2059
      %v2130 = vadd.f32 %v1691, %v2062
      %v2131 = vadd.f32 %v1692, %v2067
      %v2132 = vadd.f32 %v1693, %v2070
      %v2133 = vadd.f32 %v1694, %v2075
      %v2134 = vadd.f32 %v1695, %v2078
      %v2135 = vadd.f32 %v1696, %v2083
      %v2136 = vadd.f32 %v1697, %v2086
      %v2137 = vadd.f32 %v1698, %v2091
      %v2138 = vadd.f32 %v1699, %v2094
      %v2139 = vadd.f32 %v1700, %v2099
      %v2140 = vadd.f32 %v1701, %v2102
      %v2141 = vld [vmem:[#allocation2 + $0x98] sm:$0x3]
      %s2142 = scalar_lea.vmem %s185, 8
      %v2143 = vld [vmem:[%s2142] sm:$0x3]
      %v2145 = vunpack.c.l.b16 %v2141
      %v2146 = vpack.c.b16 %v2145, %v2145
      %vm2147 = vsmask.f32 6400
      %v2149 = vshrl.u32 %v1815, 16
      %v2151 = vrot.slane %v2149, 1
      %v2152 = vshll.u32 %v1815, 16
      %v2154 = vrot.slane %v2152, 2
      %v2155 = vor.u32 %v2151, %v2154
      %v2157 = vshrl.u32 %v1816, 16
      %v2159 = vrot.slane %v2157, 1
      %v2160 = vshll.u32 %v1816, 16
      %v2162 = vrot.slane %v2160, 2
      %v2163 = vor.u32 %v2159, %v2162
      %v2164 = vsel %vm2147, %v2155, %v2163
      %v2166 = vshrl.u32 %v1817, 16
      %v2168 = vrot.slane %v2166, 1
      %v2169 = vshll.u32 %v1817, 16
      %v2171 = vrot.slane %v2169, 2
      %v2172 = vor.u32 %v2168, %v2171
      %v2173 = vsel %vm2147, %v2163, %v2172
      %v2175 = vshrl.u32 %v1818, 16
      %v2177 = vrot.slane %v2175, 1
      %v2178 = vshll.u32 %v1818, 16
      %v2180 = vrot.slane %v2178, 2
      %v2181 = vor.u32 %v2177, %v2180
      %v2182 = vsel %vm2147, %v2172, %v2181
      %v2184 = vshrl.u32 %v1819, 16
      %v2186 = vrot.slane %v2184, 1
      %v2187 = vshll.u32 %v1819, 16
      %v2189 = vrot.slane %v2187, 2
      %v2190 = vor.u32 %v2186, %v2189
      %v2191 = vsel %vm2147, %v2181, %v2190
      %v2193 = vshrl.u32 %v1820, 16
      %v2195 = vrot.slane %v2193, 1
      %v2196 = vshll.u32 %v1820, 16
      %v2198 = vrot.slane %v2196, 2
      %v2199 = vor.u32 %v2195, %v2198
      %v2200 = vsel %vm2147, %v2190, %v2199
      %v2202 = vshrl.u32 %v1821, 16
      %v2204 = vrot.slane %v2202, 1
      %v2205 = vshll.u32 %v1821, 16
      %v2207 = vrot.slane %v2205, 2
      %v2208 = vor.u32 %v2204, %v2207
      %v2209 = vsel %vm2147, %v2199, %v2208
      %v2211 = vshrl.u32 %v1822, 16
      %v2213 = vrot.slane %v2211, 1
      %v2214 = vshll.u32 %v1822, 16
      %v2216 = vrot.slane %v2214, 2
      %v2217 = vor.u32 %v2213, %v2216
      %v2218 = vsel %vm2147, %v2208, %v2217
      %v2220 = vshrl.u32 %v1823, 16
      %v2222 = vrot.slane %v2220, 1
      %v2223 = vshll.u32 %v1823, 16
      %v2225 = vrot.slane %v2223, 2
      %v2226 = vor.u32 %v2222, %v2225
      %v2227 = vsel %vm2147, %v2217, %v2226
      %v2229 = vshrl.u32 %v1824, 16
      %v2231 = vrot.slane %v2229, 1
      %v2232 = vshll.u32 %v1824, 16
      %v2234 = vrot.slane %v2232, 2
      %v2235 = vor.u32 %v2231, %v2234
      %v2236 = vsel %vm2147, %v2226, %v2235
      %v2238 = vshrl.u32 %v1825, 16
      %v2240 = vrot.slane %v2238, 1
      %v2241 = vshll.u32 %v1825, 16
      %v2243 = vrot.slane %v2241, 2
      %v2244 = vor.u32 %v2240, %v2243
      %v2245 = vsel %vm2147, %v2235, %v2244
      %v2247 = vshrl.u32 %v1826, 16
      %v2249 = vrot.slane %v2247, 1
      %v2250 = vshll.u32 %v1826, 16
      %v2252 = vrot.slane %v2250, 2
      %v2253 = vor.u32 %v2249, %v2252
      %v2254 = vsel %vm2147, %v2244, %v2253
      %v2256 = vshrl.u32 %v1827, 16
      %v2258 = vrot.slane %v2256, 1
      %v2259 = vshll.u32 %v1827, 16
      %v2261 = vrot.slane %v2259, 2
      %v2262 = vor.u32 %v2258, %v2261
      %v2263 = vsel %vm2147, %v2253, %v2262
      %v2265 = vshrl.u32 %v1828, 16
      %v2267 = vrot.slane %v2265, 1
      %v2268 = vshll.u32 %v1828, 16
      %v2270 = vrot.slane %v2268, 2
      %v2271 = vor.u32 %v2267, %v2270
      %v2272 = vsel %vm2147, %v2262, %v2271
      %v2274 = vshrl.u32 %v1829, 16
      %v2276 = vrot.slane %v2274, 1
      %v2277 = vshll.u32 %v1829, 16
      %v2279 = vrot.slane %v2277, 2
      %v2280 = vor.u32 %v2276, %v2279
      %v2281 = vsel %vm2147, %v2271, %v2280
      %v2283 = vshrl.u32 %v1830, 16
      %v2285 = vrot.slane %v2283, 1
      %v2286 = vshll.u32 %v1830, 16
      %v2288 = vrot.slane %v2286, 2
      %v2289 = vor.u32 %v2285, %v2288
      %v2290 = vsel %vm2147, %v2280, %v2289
      %v2292 = vshrl.u32 %v1831, 16
      %v2294 = vrot.slane %v2292, 1
      %v2295 = vshll.u32 %v1831, 16
      %v2297 = vrot.slane %v2295, 2
      %v2298 = vor.u32 %v2294, %v2297
      %v2299 = vsel %vm2147, %v2289, %v2298
      %v2301 = vshrl.u32 %v1832, 16
      %v2303 = vrot.slane %v2301, 1
      %v2304 = vshll.u32 %v1832, 16
      %v2306 = vrot.slane %v2304, 2
      %v2307 = vor.u32 %v2303, %v2306
      %v2308 = vsel %vm2147, %v2298, %v2307
      %v2310 = vshrl.u32 %v2146, 16
      %v2312 = vrot.slane %v2310, 1
      %v2313 = vshll.u32 %v2146, 16
      %v2315 = vrot.slane %v2313, 2
      %v2316 = vor.u32 %v2312, %v2315
      %v2317 = vsel %vm2147, %v2307, %v2316
      %v2319 = vsel %vm936, %v2164, 0
      %v2322 = vsel %vm936, %v2173, 0
      %v2325 = vsel %vm936, %v2182, 0
      %v2328 = vsel %vm936, %v2191, 0
      %v2331 = vsel %vm936, %v2200, 0
      %v2334 = vsel %vm936, %v2209, 0
      %v2337 = vsel %vm936, %v2218, 0
      %v2340 = vsel %vm936, %v2227, 0
      %v2343 = vsel %vm936, %v2236, 0
      %v2346 = vsel %vm936, %v2245, 0
      %v2349 = vsel %vm936, %v2254, 0
      %v2352 = vsel %vm936, %v2263, 0
      %v2355 = vsel %vm936, %v2272, 0
      %v2358 = vsel %vm936, %v2281, 0
      %v2361 = vsel %vm936, %v2290, 0
      %v2364 = vsel %vm936, %v2299, 0
      %v2367 = vsel %vm936, %v2308, 0
      %v2370 = vsel %vm936, %v2317, 0
      %v2373 = vsel %vm991, %v2143, 0
      %2375 = vmatprep.subr.bf16.mxu0 0
      %2376 = vmatpush1.bf16.msra.mxu0 0
      %2377 = vmatprep.subr.bf16.mxu0 0
      %2378 = vmatpush1.bf16.msra.mxu0 0
      %2379 = vmatprep.subr.bf16.mxu0 0
      %2380 = vmatpush1.bf16.msra.mxu0 0
      %2381 = vmatprep.subr.bf16.mxu0 0
      %2382 = vmatpush1.bf16.msra.mxu0 0
      %2383 = vmatprep.subr.bf16.mxu0 0
      %2384 = vmatpush1.bf16.msra.mxu0 0
      %2385 = vmatprep.subr.bf16.mxu0 0
      %2386 = vmatpush1.bf16.msra.mxu0 0
      %2387 = vmatprep.subr.bf16.mxu0 0
      %2388 = vmatpush1.bf16.msra.mxu0 0
      %2389 = vmatprep.subr.bf16.mxu0 0
      %2390 = vmatpush1.bf16.msra.mxu0 %v2373
      %2391 = vmatprep.subr.bf16.mxu0 0
      %2392 = vmatpush2.bf16.msra.mxu0 0
      %2393 = vmatprep.subr.bf16.mxu0 0
      %2394 = vmatpush2.bf16.msra.mxu0 0
      %2395 = vmatprep.subr.bf16.mxu0 0
      %2396 = vmatpush2.bf16.msra.mxu0 0
      %2397 = vmatprep.subr.bf16.mxu0 0
      %2398 = vmatpush2.bf16.msra.mxu0 0
      %2399 = vmatprep.subr.bf16.mxu0 0
      %2400 = vmatpush2.bf16.msra.mxu0 0
      %2401 = vmatprep.subr.bf16.mxu0 0
      %2402 = vmatpush2.bf16.msra.mxu0 0
      %2403 = vmatprep.subr.bf16.mxu0 0
      %2404 = vmatpush2.bf16.msra.mxu0 0
      %2405 = vmatprep.subr.bf16.mxu0 0
      %2406 = vmatpush2.bf16.msra.mxu0 0
      %2407 = vmatprep.mubr.bf16.mxu0 0
      %2408 = vmatmul.mubr.bf16.gmra.mxu0 %v2319
      %v2409 = vpop.f32.mrf.mxu0
      %v2410 = vadd.f32 0.0, %v2409
      %v2411 = vpop.f32.mrf.mxu0
      %v2412 = vpop.f32.mrf.mxu0
      %v2413 = vadd.f32 0.0, %v2412
      %v2414 = vpop.f32.mrf.mxu0
      %2415 = vmatprep.mubr.bf16.mxu0 0
      %2416 = vmatmul.mubr.bf16.gmra.mxu0 %v2322
      %v2417 = vpop.f32.mrf.mxu0
      %v2418 = vadd.f32 0.0, %v2417
      %v2419 = vpop.f32.mrf.mxu0
      %v2420 = vpop.f32.mrf.mxu0
      %v2421 = vadd.f32 0.0, %v2420
      %v2422 = vpop.f32.mrf.mxu0
      %2423 = vmatprep.mubr.bf16.mxu0 0
      %2424 = vmatmul.mubr.bf16.gmra.mxu0 %v2325
      %v2425 = vpop.f32.mrf.mxu0
      %v2426 = vadd.f32 0.0, %v2425
      %v2427 = vpop.f32.mrf.mxu0
      %v2428 = vpop.f32.mrf.mxu0
      %v2429 = vadd.f32 0.0, %v2428
      %v2430 = vpop.f32.mrf.mxu0
      %2431 = vmatprep.mubr.bf16.mxu0 0
      %2432 = vmatmul.mubr.bf16.gmra.mxu0 %v2328
      %v2433 = vpop.f32.mrf.mxu0
      %v2434 = vadd.f32 0.0, %v2433
      %v2435 = vpop.f32.mrf.mxu0
      %v2436 = vpop.f32.mrf.mxu0
      %v2437 = vadd.f32 0.0, %v2436
      %v2438 = vpop.f32.mrf.mxu0
      %2439 = vmatprep.mubr.bf16.mxu0 0
      %2440 = vmatmul.mubr.bf16.gmra.mxu0 %v2331
      %v2441 = vpop.f32.mrf.mxu0
      %v2442 = vadd.f32 0.0, %v2441
      %v2443 = vpop.f32.mrf.mxu0
      %v2444 = vpop.f32.mrf.mxu0
      %v2445 = vadd.f32 0.0, %v2444
      %v2446 = vpop.f32.mrf.mxu0
      %2447 = vmatprep.mubr.bf16.mxu0 0
      %2448 = vmatmul.mubr.bf16.gmra.mxu0 %v2334
      %v2449 = vpop.f32.mrf.mxu0
      %v2450 = vadd.f32 0.0, %v2449
      %v2451 = vpop.f32.mrf.mxu0
      %v2452 = vpop.f32.mrf.mxu0
      %v2453 = vadd.f32 0.0, %v2452
      %v2454 = vpop.f32.mrf.mxu0
      %2455 = vmatprep.mubr.bf16.mxu0 0
      %2456 = vmatmul.mubr.bf16.gmra.mxu0 %v2337
      %v2457 = vpop.f32.mrf.mxu0
      %v2458 = vadd.f32 0.0, %v2457
      %v2459 = vpop.f32.mrf.mxu0
      %v2460 = vpop.f32.mrf.mxu0
      %v2461 = vadd.f32 0.0, %v2460
      %v2462 = vpop.f32.mrf.mxu0
      %2463 = vmatprep.mubr.bf16.mxu0 0
      %2464 = vmatmul.mubr.bf16.gmra.mxu0 %v2340
      %v2465 = vpop.f32.mrf.mxu0
      %v2466 = vadd.f32 0.0, %v2465
      %v2467 = vpop.f32.mrf.mxu0
      %v2468 = vpop.f32.mrf.mxu0
      %v2469 = vadd.f32 0.0, %v2468
      %v2470 = vpop.f32.mrf.mxu0
      %2471 = vmatprep.mubr.bf16.mxu0 0
      %2472 = vmatmul.mubr.bf16.gmra.mxu0 %v2343
      %v2473 = vpop.f32.mrf.mxu0
      %v2474 = vadd.f32 0.0, %v2473
      %v2475 = vpop.f32.mrf.mxu0
      %v2476 = vpop.f32.mrf.mxu0
      %v2477 = vadd.f32 0.0, %v2476
      %v2478 = vpop.f32.mrf.mxu0
      %2479 = vmatprep.mubr.bf16.mxu0 0
      %2480 = vmatmul.mubr.bf16.gmra.mxu0 %v2346
      %v2481 = vpop.f32.mrf.mxu0
      %v2482 = vadd.f32 0.0, %v2481
      %v2483 = vpop.f32.mrf.mxu0
      %v2484 = vpop.f32.mrf.mxu0
      %v2485 = vadd.f32 0.0, %v2484
      %v2486 = vpop.f32.mrf.mxu0
      %2487 = vmatprep.mubr.bf16.mxu0 0
      %2488 = vmatmul.mubr.bf16.gmra.mxu0 %v2349
      %v2489 = vpop.f32.mrf.mxu0
      %v2490 = vadd.f32 0.0, %v2489
      %v2491 = vpop.f32.mrf.mxu0
      %v2492 = vpop.f32.mrf.mxu0
      %v2493 = vadd.f32 0.0, %v2492
      %v2494 = vpop.f32.mrf.mxu0
      %2495 = vmatprep.mubr.bf16.mxu0 0
      %2496 = vmatmul.mubr.bf16.gmra.mxu0 %v2352
      %v2497 = vpop.f32.mrf.mxu0
      %v2498 = vadd.f32 0.0, %v2497
      %v2499 = vpop.f32.mrf.mxu0
      %v2500 = vpop.f32.mrf.mxu0
      %v2501 = vadd.f32 0.0, %v2500
      %v2502 = vpop.f32.mrf.mxu0
      %2503 = vmatprep.mubr.bf16.mxu0 0
      %2504 = vmatmul.mubr.bf16.gmra.mxu0 %v2355
      %v2505 = vpop.f32.mrf.mxu0
      %v2506 = vadd.f32 0.0, %v2505
      %v2507 = vpop.f32.mrf.mxu0
      %v2508 = vpop.f32.mrf.mxu0
      %v2509 = vadd.f32 0.0, %v2508
      %v2510 = vpop.f32.mrf.mxu0
      %2511 = vmatprep.mubr.bf16.mxu0 0
      %2512 = vmatmul.mubr.bf16.gmra.mxu0 %v2358
      %v2513 = vpop.f32.mrf.mxu0
      %v2514 = vadd.f32 0.0, %v2513
      %v2515 = vpop.f32.mrf.mxu0
      %v2516 = vpop.f32.mrf.mxu0
      %v2517 = vadd.f32 0.0, %v2516
      %v2518 = vpop.f32.mrf.mxu0
      %2519 = vmatprep.mubr.bf16.mxu0 0
      %2520 = vmatmul.mubr.bf16.gmra.mxu0 %v2361
      %v2521 = vpop.f32.mrf.mxu0
      %v2522 = vadd.f32 0.0, %v2521
      %v2523 = vpop.f32.mrf.mxu0
      %v2524 = vpop.f32.mrf.mxu0
      %v2525 = vadd.f32 0.0, %v2524
      %v2526 = vpop.f32.mrf.mxu0
      %2527 = vmatprep.mubr.bf16.mxu0 0
      %2528 = vmatmul.mubr.bf16.gmra.mxu0 %v2364
      %v2529 = vpop.f32.mrf.mxu0
      %v2530 = vadd.f32 0.0, %v2529
      %v2531 = vpop.f32.mrf.mxu0
      %v2532 = vpop.f32.mrf.mxu0
      %v2533 = vadd.f32 0.0, %v2532
      %v2534 = vpop.f32.mrf.mxu0
      %2535 = vmatprep.mubr.bf16.mxu0 0
      %2536 = vmatmul.mubr.bf16.gmra.mxu0 %v2367
      %v2537 = vpop.f32.mrf.mxu0
      %v2538 = vadd.f32 0.0, %v2537
      %v2539 = vpop.f32.mrf.mxu0
      %v2540 = vpop.f32.mrf.mxu0
      %v2541 = vadd.f32 0.0, %v2540
      %v2542 = vpop.f32.mrf.mxu0
      %2543 = vmatprep.mubr.bf16.mxu0 0
      %2544 = vmatmul.mubr.bf16.gmra.mxu0 %v2370
      %v2545 = vpop.f32.mrf.mxu0
      %v2546 = vadd.f32 0.0, %v2545
      %v2547 = vpop.f32.mrf.mxu0
      %v2548 = vpop.f32.mrf.mxu0
      %v2549 = vadd.f32 0.0, %v2548
      %v2550 = vpop.f32.mrf.mxu0
      %2551 = vdwg.mxu0
      %v2552 = vadd.f32 %v2105, %v2410
      %v2553 = vadd.f32 %v2106, %v2413
      %v2554 = vadd.f32 %v2107, %v2418
      %v2555 = vadd.f32 %v2108, %v2421
      %v2556 = vadd.f32 %v2109, %v2426
      %v2557 = vadd.f32 %v2110, %v2429
      %v2558 = vadd.f32 %v2111, %v2434
      %v2559 = vadd.f32 %v2112, %v2437
      %v2560 = vadd.f32 %v2113, %v2442
      %v2561 = vadd.f32 %v2114, %v2445
      %v2562 = vadd.f32 %v2115, %v2450
      %v2563 = vadd.f32 %v2116, %v2453
      %v2564 = vadd.f32 %v2117, %v2458
      %v2565 = vadd.f32 %v2118, %v2461
      %v2566 = vadd.f32 %v2119, %v2466
      %v2567 = vadd.f32 %v2120, %v2469
      %v2568 = vadd.f32 %v2121, %v2474
      %v2569 = vadd.f32 %v2122, %v2477
      %v2570 = vadd.f32 %v2123, %v2482
      %v2571 = vadd.f32 %v2124, %v2485
      %v2572 = vadd.f32 %v2125, %v2490
      %v2573 = vadd.f32 %v2126, %v2493
      %v2574 = vadd.f32 %v2127, %v2498
      %v2575 = vadd.f32 %v2128, %v2501
      %v2576 = vadd.f32 %v2129, %v2506
      %v2577 = vadd.f32 %v2130, %v2509
      %v2578 = vadd.f32 %v2131, %v2514
      %v2579 = vadd.f32 %v2132, %v2517
      %v2580 = vadd.f32 %v2133, %v2522
      %v2581 = vadd.f32 %v2134, %v2525
      %v2582 = vadd.f32 %v2135, %v2530
      %v2583 = vadd.f32 %v2136, %v2533
      %v2584 = vadd.f32 %v2137, %v2538
      %v2585 = vadd.f32 %v2138, %v2541
      %v2586 = vadd.f32 %v2139, %v2546
      %v2587 = vadd.f32 %v2140, %v2549
      %v2588 = vld [vmem:[#allocation2 + $0x8] sm:$0xc]
      %s2589 = scalar_lea.vmem %s185, 10
      %v2590 = vld [vmem:[%s2589] sm:$0x3]
      %v2592 = vunpack.c.l.b16 %v2588
      %v2593 = vpack.c.b16 %v1779, %v2592
      %vm2594 = vcmask 1045504
      %v2595 = vrot.slane %v2593, 2
      %v2596 = vrot.slane %v1816, 2
      %v2597 = vsel %vm2594, %v2595, %v2596
      %v2598 = vrot.slane %v1817, 2
      %v2599 = vsel %vm2594, %v2596, %v2598
      %v2600 = vrot.slane %v1818, 2
      %v2601 = vsel %vm2594, %v2598, %v2600
      %v2602 = vrot.slane %v1819, 2
      %v2603 = vsel %vm2594, %v2600, %v2602
      %v2604 = vrot.slane %v1820, 2
      %v2605 = vsel %vm2594, %v2602, %v2604
      %v2606 = vrot.slane %v1821, 2
      %v2607 = vsel %vm2594, %v2604, %v2606
      %v2608 = vrot.slane %v1822, 2
      %v2609 = vsel %vm2594, %v2606, %v2608
      %v2610 = vrot.slane %v1823, 2
      %v2611 = vsel %vm2594, %v2608, %v2610
      %v2612 = vrot.slane %v1824, 2
      %v2613 = vsel %vm2594, %v2610, %v2612
      %v2614 = vrot.slane %v1825, 2
      %v2615 = vsel %vm2594, %v2612, %v2614
      %v2616 = vrot.slane %v1826, 2
      %v2617 = vsel %vm2594, %v2614, %v2616
      %v2618 = vrot.slane %v1827, 2
      %v2619 = vsel %vm2594, %v2616, %v2618
      %v2620 = vrot.slane %v1828, 2
      %v2621 = vsel %vm2594, %v2618, %v2620
      %v2622 = vrot.slane %v1829, 2
      %v2623 = vsel %vm2594, %v2620, %v2622
      %v2624 = vrot.slane %v1830, 2
      %v2625 = vsel %vm2594, %v2622, %v2624
      %v2626 = vrot.slane %v1831, 2
      %v2627 = vsel %vm2594, %v2624, %v2626
      %v2628 = vrot.slane %v1832, 2
      %v2629 = vsel %vm2594, %v2626, %v2628
      %v2630 = vrot.slane %v2146, 2
      %v2631 = vsel %vm2594, %v2628, %v2630
      %v2633 = vsel %vm936, %v2597, 0
      %v2636 = vsel %vm936, %v2599, 0
      %v2639 = vsel %vm936, %v2601, 0
      %v2642 = vsel %vm936, %v2603, 0
      %v2645 = vsel %vm936, %v2605, 0
      %v2648 = vsel %vm936, %v2607, 0
      %v2651 = vsel %vm936, %v2609, 0
      %v2654 = vsel %vm936, %v2611, 0
      %v2657 = vsel %vm936, %v2613, 0
      %v2660 = vsel %vm936, %v2615, 0
      %v2663 = vsel %vm936, %v2617, 0
      %v2666 = vsel %vm936, %v2619, 0
      %v2669 = vsel %vm936, %v2621, 0
      %v2672 = vsel %vm936, %v2623, 0
      %v2675 = vsel %vm936, %v2625, 0
      %v2678 = vsel %vm936, %v2627, 0
      %v2681 = vsel %vm936, %v2629, 0
      %v2684 = vsel %vm936, %v2631, 0
      %v2687 = vsel %vm991, %v2590, 0
      %2689 = vmatprep.subr.bf16.mxu0 0
      %2690 = vmatpush1.bf16.msra.mxu0 0
      %2691 = vmatprep.subr.bf16.mxu0 0
      %2692 = vmatpush1.bf16.msra.mxu0 0
      %2693 = vmatprep.subr.bf16.mxu0 0
      %2694 = vmatpush1.bf16.msra.mxu0 0
      %2695 = vmatprep.subr.bf16.mxu0 0
      %2696 = vmatpush1.bf16.msra.mxu0 0
      %2697 = vmatprep.subr.bf16.mxu0 0
      %2698 = vmatpush1.bf16.msra.mxu0 0
      %2699 = vmatprep.subr.bf16.mxu0 0
      %2700 = vmatpush1.bf16.msra.mxu0 0
      %2701 = vmatprep.subr.bf16.mxu0 0
      %2702 = vmatpush1.bf16.msra.mxu0 0
      %2703 = vmatprep.subr.bf16.mxu0 0
      %2704 = vmatpush1.bf16.msra.mxu0 %v2687
      %2705 = vmatprep.subr.bf16.mxu0 0
      %2706 = vmatpush2.bf16.msra.mxu0 0
      %2707 = vmatprep.subr.bf16.mxu0 0
      %2708 = vmatpush2.bf16.msra.mxu0 0
      %2709 = vmatprep.subr.bf16.mxu0 0
      %2710 = vmatpush2.bf16.msra.mxu0 0
      %2711 = vmatprep.subr.bf16.mxu0 0
      %2712 = vmatpush2.bf16.msra.mxu0 0
      %2713 = vmatprep.subr.bf16.mxu0 0
      %2714 = vmatpush2.bf16.msra.mxu0 0
      %2715 = vmatprep.subr.bf16.mxu0 0
      %2716 = vmatpush2.bf16.msra.mxu0 0
      %2717 = vmatprep.subr.bf16.mxu0 0
      %2718 = vmatpush2.bf16.msra.mxu0 0
      %2719 = vmatprep.subr.bf16.mxu0 0
      %2720 = vmatpush2.bf16.msra.mxu0 0
      %2721 = vmatprep.mubr.bf16.mxu0 0
      %2722 = vmatmul.mubr.bf16.gmra.mxu0 %v2633
      %v2723 = vpop.f32.mrf.mxu0
      %v2724 = vadd.f32 0.0, %v2723
      %v2725 = vpop.f32.mrf.mxu0
      %v2726 = vpop.f32.mrf.mxu0
      %v2727 = vadd.f32 0.0, %v2726
      %v2728 = vpop.f32.mrf.mxu0
      %2729 = vmatprep.mubr.bf16.mxu0 0
      %2730 = vmatmul.mubr.bf16.gmra.mxu0 %v2636
      %v2731 = vpop.f32.mrf.mxu0
      %v2732 = vadd.f32 0.0, %v2731
      %v2733 = vpop.f32.mrf.mxu0
      %v2734 = vpop.f32.mrf.mxu0
      %v2735 = vadd.f32 0.0, %v2734
      %v2736 = vpop.f32.mrf.mxu0
      %2737 = vmatprep.mubr.bf16.mxu0 0
      %2738 = vmatmul.mubr.bf16.gmra.mxu0 %v2639
      %v2739 = vpop.f32.mrf.mxu0
      %v2740 = vadd.f32 0.0, %v2739
      %v2741 = vpop.f32.mrf.mxu0
      %v2742 = vpop.f32.mrf.mxu0
      %v2743 = vadd.f32 0.0, %v2742
      %v2744 = vpop.f32.mrf.mxu0
      %2745 = vmatprep.mubr.bf16.mxu0 0
      %2746 = vmatmul.mubr.bf16.gmra.mxu0 %v2642
      %v2747 = vpop.f32.mrf.mxu0
      %v2748 = vadd.f32 0.0, %v2747
      %v2749 = vpop.f32.mrf.mxu0
      %v2750 = vpop.f32.mrf.mxu0
      %v2751 = vadd.f32 0.0, %v2750
      %v2752 = vpop.f32.mrf.mxu0
      %2753 = vmatprep.mubr.bf16.mxu0 0
      %2754 = vmatmul.mubr.bf16.gmra.mxu0 %v2645
      %v2755 = vpop.f32.mrf.mxu0
      %v2756 = vadd.f32 0.0, %v2755
      %v2757 = vpop.f32.mrf.mxu0
      %v2758 = vpop.f32.mrf.mxu0
      %v2759 = vadd.f32 0.0, %v2758
      %v2760 = vpop.f32.mrf.mxu0
      %2761 = vmatprep.mubr.bf16.mxu0 0
      %2762 = vmatmul.mubr.bf16.gmra.mxu0 %v2648
      %v2763 = vpop.f32.mrf.mxu0
      %v2764 = vadd.f32 0.0, %v2763
      %v2765 = vpop.f32.mrf.mxu0
      %v2766 = vpop.f32.mrf.mxu0
      %v2767 = vadd.f32 0.0, %v2766
      %v2768 = vpop.f32.mrf.mxu0
      %2769 = vmatprep.mubr.bf16.mxu0 0
      %2770 = vmatmul.mubr.bf16.gmra.mxu0 %v2651
      %v2771 = vpop.f32.mrf.mxu0
      %v2772 = vadd.f32 0.0, %v2771
      %v2773 = vpop.f32.mrf.mxu0
      %v2774 = vpop.f32.mrf.mxu0
      %v2775 = vadd.f32 0.0, %v2774
      %v2776 = vpop.f32.mrf.mxu0
      %2777 = vmatprep.mubr.bf16.mxu0 0
      %2778 = vmatmul.mubr.bf16.gmra.mxu0 %v2654
      %v2779 = vpop.f32.mrf.mxu0
      %v2780 = vadd.f32 0.0, %v2779
      %v2781 = vpop.f32.mrf.mxu0
      %v2782 = vpop.f32.mrf.mxu0
      %v2783 = vadd.f32 0.0, %v2782
      %v2784 = vpop.f32.mrf.mxu0
      %2785 = vmatprep.mubr.bf16.mxu0 0
      %2786 = vmatmul.mubr.bf16.gmra.mxu0 %v2657
      %v2787 = vpop.f32.mrf.mxu0
      %v2788 = vadd.f32 0.0, %v2787
      %v2789 = vpop.f32.mrf.mxu0
      %v2790 = vpop.f32.mrf.mxu0
      %v2791 = vadd.f32 0.0, %v2790
      %v2792 = vpop.f32.mrf.mxu0
      %2793 = vmatprep.mubr.bf16.mxu0 0
      %2794 = vmatmul.mubr.bf16.gmra.mxu0 %v2660
      %v2795 = vpop.f32.mrf.mxu0
      %v2796 = vadd.f32 0.0, %v2795
      %v2797 = vpop.f32.mrf.mxu0
      %v2798 = vpop.f32.mrf.mxu0
      %v2799 = vadd.f32 0.0, %v2798
      %v2800 = vpop.f32.mrf.mxu0
      %2801 = vmatprep.mubr.bf16.mxu0 0
      %2802 = vmatmul.mubr.bf16.gmra.mxu0 %v2663
      %v2803 = vpop.f32.mrf.mxu0
      %v2804 = vadd.f32 0.0, %v2803
      %v2805 = vpop.f32.mrf.mxu0
      %v2806 = vpop.f32.mrf.mxu0
      %v2807 = vadd.f32 0.0, %v2806
      %v2808 = vpop.f32.mrf.mxu0
      %2809 = vmatprep.mubr.bf16.mxu0 0
      %2810 = vmatmul.mubr.bf16.gmra.mxu0 %v2666
      %v2811 = vpop.f32.mrf.mxu0
      %v2812 = vadd.f32 0.0, %v2811
      %v2813 = vpop.f32.mrf.mxu0
      %v2814 = vpop.f32.mrf.mxu0
      %v2815 = vadd.f32 0.0, %v2814
      %v2816 = vpop.f32.mrf.mxu0
      %2817 = vmatprep.mubr.bf16.mxu0 0
      %2818 = vmatmul.mubr.bf16.gmra.mxu0 %v2669
      %v2819 = vpop.f32.mrf.mxu0
      %v2820 = vadd.f32 0.0, %v2819
      %v2821 = vpop.f32.mrf.mxu0
      %v2822 = vpop.f32.mrf.mxu0
      %v2823 = vadd.f32 0.0, %v2822
      %v2824 = vpop.f32.mrf.mxu0
      %2825 = vmatprep.mubr.bf16.mxu0 0
      %2826 = vmatmul.mubr.bf16.gmra.mxu0 %v2672
      %v2827 = vpop.f32.mrf.mxu0
      %v2828 = vadd.f32 0.0, %v2827
      %v2829 = vpop.f32.mrf.mxu0
      %v2830 = vpop.f32.mrf.mxu0
      %v2831 = vadd.f32 0.0, %v2830
      %v2832 = vpop.f32.mrf.mxu0
      %2833 = vmatprep.mubr.bf16.mxu0 0
      %2834 = vmatmul.mubr.bf16.gmra.mxu0 %v2675
      %v2835 = vpop.f32.mrf.mxu0
      %v2836 = vadd.f32 0.0, %v2835
      %v2837 = vpop.f32.mrf.mxu0
      %v2838 = vpop.f32.mrf.mxu0
      %v2839 = vadd.f32 0.0, %v2838
      %v2840 = vpop.f32.mrf.mxu0
      %2841 = vmatprep.mubr.bf16.mxu0 0
      %2842 = vmatmul.mubr.bf16.gmra.mxu0 %v2678
      %v2843 = vpop.f32.mrf.mxu0
      %v2844 = vadd.f32 0.0, %v2843
      %v2845 = vpop.f32.mrf.mxu0
      %v2846 = vpop.f32.mrf.mxu0
      %v2847 = vadd.f32 0.0, %v2846
      %v2848 = vpop.f32.mrf.mxu0
      %2849 = vmatprep.mubr.bf16.mxu0 0
      %2850 = vmatmul.mubr.bf16.gmra.mxu0 %v2681
      %v2851 = vpop.f32.mrf.mxu0
      %v2852 = vadd.f32 0.0, %v2851
      %v2853 = vpop.f32.mrf.mxu0
      %v2854 = vpop.f32.mrf.mxu0
      %v2855 = vadd.f32 0.0, %v2854
      %v2856 = vpop.f32.mrf.mxu0
      %2857 = vmatprep.mubr.bf16.mxu0 0
      %2858 = vmatmul.mubr.bf16.gmra.mxu0 %v2684
      %v2859 = vpop.f32.mrf.mxu0
      %v2860 = vadd.f32 0.0, %v2859
      %v2861 = vpop.f32.mrf.mxu0
      %v2862 = vpop.f32.mrf.mxu0
      %v2863 = vadd.f32 0.0, %v2862
      %v2864 = vpop.f32.mrf.mxu0
      %2865 = vdwg.mxu0
      %v2866 = vadd.f32 %v2552, %v2724
      %v2867 = vadd.f32 %v2553, %v2727
      %v2868 = vadd.f32 %v2554, %v2732
      %v2869 = vadd.f32 %v2555, %v2735
      %v2870 = vadd.f32 %v2556, %v2740
      %v2871 = vadd.f32 %v2557, %v2743
      %v2872 = vadd.f32 %v2558, %v2748
      %v2873 = vadd.f32 %v2559, %v2751
      %v2874 = vadd.f32 %v2560, %v2756
      %v2875 = vadd.f32 %v2561, %v2759
      %v2876 = vadd.f32 %v2562, %v2764
      %v2877 = vadd.f32 %v2563, %v2767
      %v2878 = vadd.f32 %v2564, %v2772
      %v2879 = vadd.f32 %v2565, %v2775
      %v2880 = vadd.f32 %v2566, %v2780
      %v2881 = vadd.f32 %v2567, %v2783
      %v2882 = vadd.f32 %v2568, %v2788
      %v2883 = vadd.f32 %v2569, %v2791
      %v2884 = vadd.f32 %v2570, %v2796
      %v2885 = vadd.f32 %v2571, %v2799
      %v2886 = vadd.f32 %v2572, %v2804
      %v2887 = vadd.f32 %v2573, %v2807
      %v2888 = vadd.f32 %v2574, %v2812
      %v2889 = vadd.f32 %v2575, %v2815
      %v2890 = vadd.f32 %v2576, %v2820
      %v2891 = vadd.f32 %v2577, %v2823
      %v2892 = vadd.f32 %v2578, %v2828
      %v2893 = vadd.f32 %v2579, %v2831
      %v2894 = vadd.f32 %v2580, %v2836
      %v2895 = vadd.f32 %v2581, %v2839
      %v2896 = vadd.f32 %v2582, %v2844
      %v2897 = vadd.f32 %v2583, %v2847
      %v2898 = vadd.f32 %v2584, %v2852
      %v2899 = vadd.f32 %v2585, %v2855
      %v2900 = vadd.f32 %v2586, %v2860
      %v2901 = vadd.f32 %v2587, %v2863
      %v2902 = vld [vmem:[#allocation2 + $0x10] sm:$0xc]
      %v2903 = vld [vmem:[#allocation2 + $0x14] sm:$0xf]
      %v2904 = vld [vmem:[#allocation2 + $0x18] sm:$0xf]
      %v2905 = vld [vmem:[#allocation2 + $0x1c] sm:$0xf]
      %v2906 = vld [vmem:[#allocation2 + $0x20] sm:$0xf]
      %v2907 = vld [vmem:[#allocation2 + $0x24] sm:$0xf]
      %v2908 = vld [vmem:[#allocation2 + $0x28] sm:$0xf]
      %v2909 = vld [vmem:[#allocation2 + $0x2c] sm:$0xf]
      %v2910 = vld [vmem:[#allocation2 + $0x30] sm:$0xf]
      %v2911 = vld [vmem:[#allocation2 + $0x34] sm:$0xf]
      %v2912 = vld [vmem:[#allocation2 + $0x38] sm:$0xf]
      %v2913 = vld [vmem:[#allocation2 + $0x3c] sm:$0xf]
      %v2914 = vld [vmem:[#allocation2 + $0x40] sm:$0xf]
      %v2915 = vld [vmem:[#allocation2 + $0x44] sm:$0xf]
      %v2916 = vld [vmem:[#allocation2 + $0x48] sm:$0xf]
      %v2917 = vld [vmem:[#allocation2 + $0x4c] sm:$0xf]
      %v2918 = vld [vmem:[#allocation2 + $0x50] sm:$0xf]
      %v2919 = vld [vmem:[#allocation2 + $0x54] sm:$0xf]
      %v2920 = vld [vmem:[#allocation2 + $0x58] sm:$0xf]
      %v2921 = vld [vmem:[#allocation2 + $0x5c] sm:$0xf]
      %v2922 = vld [vmem:[#allocation2 + $0x60] sm:$0xf]
      %v2923 = vld [vmem:[#allocation2 + $0x64] sm:$0xf]
      %v2924 = vld [vmem:[#allocation2 + $0x68] sm:$0xf]
      %v2925 = vld [vmem:[#allocation2 + $0x6c] sm:$0xf]
      %v2926 = vld [vmem:[#allocation2 + $0x70] sm:$0xf]
      %v2927 = vld [vmem:[#allocation2 + $0x74] sm:$0xf]
      %v2928 = vld [vmem:[#allocation2 + $0x78] sm:$0xf]
      %v2929 = vld [vmem:[#allocation2 + $0x7c] sm:$0xf]
      %v2930 = vld [vmem:[#allocation2 + $0x80] sm:$0xf]
      %v2931 = vld [vmem:[#allocation2 + $0x84] sm:$0xf]
      %v2932 = vld [vmem:[#allocation2 + $0x88] sm:$0xf]
      %v2933 = vld [vmem:[#allocation2 + $0x8c] sm:$0xf]
      %v2934 = vld [vmem:[#allocation2 + $0x90] sm:$0xf]
      %v2935 = vld [vmem:[#allocation2 + $0x94] sm:$0xf]
      %v2936 = vld [vmem:[#allocation2 + $0x98] sm:$0xf]
      %v2937 = vld [vmem:[#allocation2 + $0x9c] sm:$0xf]
      %v2938 = vld [vmem:[#allocation2 + $0xa0] sm:$0x3]
      %s2939 = scalar_lea.vmem %s185, 12
      %v2940 = vld [vmem:[%s2939] sm:$0x3]
      %v2978 = vunpack.c.l.b16 %v2902
      %v2979 = vunpack.c.l.b16 %v2903
      %v2980 = vunpack.c.l.b16 %v2904
      %v2981 = vunpack.c.l.b16 %v2905
      %v2982 = vunpack.c.l.b16 %v2906
      %v2983 = vunpack.c.l.b16 %v2907
      %v2984 = vunpack.c.l.b16 %v2908
      %v2985 = vunpack.c.l.b16 %v2909
      %v2986 = vunpack.c.l.b16 %v2910
      %v2987 = vunpack.c.l.b16 %v2911
      %v2988 = vunpack.c.l.b16 %v2912
      %v2989 = vunpack.c.l.b16 %v2913
      %v2990 = vunpack.c.l.b16 %v2914
      %v2991 = vunpack.c.l.b16 %v2915
      %v2992 = vunpack.c.l.b16 %v2916
      %v2993 = vunpack.c.l.b16 %v2917
      %v2994 = vunpack.c.l.b16 %v2918
      %v2995 = vunpack.c.l.b16 %v2919
      %v2996 = vunpack.c.l.b16 %v2920
      %v2997 = vunpack.c.l.b16 %v2921
      %v2998 = vunpack.c.l.b16 %v2922
      %v2999 = vunpack.c.l.b16 %v2923
      %v3000 = vunpack.c.l.b16 %v2924
      %v3001 = vunpack.c.l.b16 %v2925
      %v3002 = vunpack.c.l.b16 %v2926
      %v3003 = vunpack.c.l.b16 %v2927
      %v3004 = vunpack.c.l.b16 %v2928
      %v3005 = vunpack.c.l.b16 %v2929
      %v3006 = vunpack.c.l.b16 %v2930
      %v3007 = vunpack.c.l.b16 %v2931
      %v3008 = vunpack.c.l.b16 %v2932
      %v3009 = vunpack.c.l.b16 %v2933
      %v3010 = vunpack.c.l.b16 %v2934
      %v3011 = vunpack.c.l.b16 %v2935
      %v3012 = vunpack.c.l.b16 %v2936
      %v3013 = vunpack.c.l.b16 %v2937
      %v3014 = vunpack.c.l.b16 %v2938
      %v3015 = vpack.c.b16 %v2979, %v2978
      %v3016 = vpack.c.b16 %v2981, %v2980
      %v3017 = vpack.c.b16 %v2983, %v2982
      %v3018 = vpack.c.b16 %v2985, %v2984
      %v3019 = vpack.c.b16 %v2987, %v2986
      %v3020 = vpack.c.b16 %v2989, %v2988
      %v3021 = vpack.c.b16 %v2991, %v2990
      %v3022 = vpack.c.b16 %v2993, %v2992
      %v3023 = vpack.c.b16 %v2995, %v2994
      %v3024 = vpack.c.b16 %v2997, %v2996
      %v3025 = vpack.c.b16 %v2999, %v2998
      %v3026 = vpack.c.b16 %v3001, %v3000
      %v3027 = vpack.c.b16 %v3003, %v3002
      %v3028 = vpack.c.b16 %v3005, %v3004
      %v3029 = vpack.c.b16 %v3007, %v3006
      %v3030 = vpack.c.b16 %v3009, %v3008
      %v3031 = vpack.c.b16 %v3011, %v3010
      %v3032 = vpack.c.b16 %v3013, %v3012
      %v3033 = vpack.c.b16 %v3014, %v3014
      %v3034 = vrot.slane %v3015, 2
      %v3035 = vrot.slane %v3016, 2
      %v3036 = vsel %vm2594, %v3034, %v3035
      %v3037 = vrot.slane %v3017, 2
      %v3038 = vsel %vm2594, %v3035, %v3037
      %v3039 = vrot.slane %v3018, 2
      %v3040 = vsel %vm2594, %v3037, %v3039
      %v3041 = vrot.slane %v3019, 2
      %v3042 = vsel %vm2594, %v3039, %v3041
      %v3043 = vrot.slane %v3020, 2
      %v3044 = vsel %vm2594, %v3041, %v3043
      %v3045 = vrot.slane %v3021, 2
      %v3046 = vsel %vm2594, %v3043, %v3045
      %v3047 = vrot.slane %v3022, 2
      %v3048 = vsel %vm2594, %v3045, %v3047
      %v3049 = vrot.slane %v3023, 2
      %v3050 = vsel %vm2594, %v3047, %v3049
      %v3051 = vrot.slane %v3024, 2
      %v3052 = vsel %vm2594, %v3049, %v3051
      %v3053 = vrot.slane %v3025, 2
      %v3054 = vsel %vm2594, %v3051, %v3053
      %v3055 = vrot.slane %v3026, 2
      %v3056 = vsel %vm2594, %v3053, %v3055
      %v3057 = vrot.slane %v3027, 2
      %v3058 = vsel %vm2594, %v3055, %v3057
      %v3059 = vrot.slane %v3028, 2
      %v3060 = vsel %vm2594, %v3057, %v3059
      %v3061 = vrot.slane %v3029, 2
      %v3062 = vsel %vm2594, %v3059, %v3061
      %v3063 = vrot.slane %v3030, 2
      %v3064 = vsel %vm2594, %v3061, %v3063
      %v3065 = vrot.slane %v3031, 2
      %v3066 = vsel %vm2594, %v3063, %v3065
      %v3067 = vrot.slane %v3032, 2
      %v3068 = vsel %vm2594, %v3065, %v3067
      %v3069 = vrot.slane %v3033, 2
      %v3070 = vsel %vm2594, %v3067, %v3069
      %v3072 = vsel %vm936, %v3036, 0
      %v3075 = vsel %vm936, %v3038, 0
      %v3078 = vsel %vm936, %v3040, 0
      %v3081 = vsel %vm936, %v3042, 0
      %v3084 = vsel %vm936, %v3044, 0
      %v3087 = vsel %vm936, %v3046, 0
      %v3090 = vsel %vm936, %v3048, 0
      %v3093 = vsel %vm936, %v3050, 0
      %v3096 = vsel %vm936, %v3052, 0
      %v3099 = vsel %vm936, %v3054, 0
      %v3102 = vsel %vm936, %v3056, 0
      %v3105 = vsel %vm936, %v3058, 0
      %v3108 = vsel %vm936, %v3060, 0
      %v3111 = vsel %vm936, %v3062, 0
      %v3114 = vsel %vm936, %v3064, 0
      %v3117 = vsel %vm936, %v3066, 0
      %v3120 = vsel %vm936, %v3068, 0
      %v3123 = vsel %vm936, %v3070, 0
      %v3126 = vsel %vm991, %v2940, 0
      %3128 = vmatprep.subr.bf16.mxu0 0
      %3129 = vmatpush1.bf16.msra.mxu0 0
      %3130 = vmatprep.subr.bf16.mxu0 0
      %3131 = vmatpush1.bf16.msra.mxu0 0
      %3132 = vmatprep.subr.bf16.mxu0 0
      %3133 = vmatpush1.bf16.msra.mxu0 0
      %3134 = vmatprep.subr.bf16.mxu0 0
      %3135 = vmatpush1.bf16.msra.mxu0 0
      %3136 = vmatprep.subr.bf16.mxu0 0
      %3137 = vmatpush1.bf16.msra.mxu0 0
      %3138 = vmatprep.subr.bf16.mxu0 0
      %3139 = vmatpush1.bf16.msra.mxu0 0
      %3140 = vmatprep.subr.bf16.mxu0 0
      %3141 = vmatpush1.bf16.msra.mxu0 0
      %3142 = vmatprep.subr.bf16.mxu0 0
      %3143 = vmatpush1.bf16.msra.mxu0 %v3126
      %3144 = vmatprep.subr.bf16.mxu0 0
      %3145 = vmatpush2.bf16.msra.mxu0 0
      %3146 = vmatprep.subr.bf16.mxu0 0
      %3147 = vmatpush2.bf16.msra.mxu0 0
      %3148 = vmatprep.subr.bf16.mxu0 0
      %3149 = vmatpush2.bf16.msra.mxu0 0
      %3150 = vmatprep.subr.bf16.mxu0 0
      %3151 = vmatpush2.bf16.msra.mxu0 0
      %3152 = vmatprep.subr.bf16.mxu0 0
      %3153 = vmatpush2.bf16.msra.mxu0 0
      %3154 = vmatprep.subr.bf16.mxu0 0
      %3155 = vmatpush2.bf16.msra.mxu0 0
      %3156 = vmatprep.subr.bf16.mxu0 0
      %3157 = vmatpush2.bf16.msra.mxu0 0
      %3158 = vmatprep.subr.bf16.mxu0 0
      %3159 = vmatpush2.bf16.msra.mxu0 0
      %3160 = vmatprep.mubr.bf16.mxu0 0
      %3161 = vmatmul.mubr.bf16.gmra.mxu0 %v3072
      %v3162 = vpop.f32.mrf.mxu0
      %v3163 = vadd.f32 0.0, %v3162
      %v3164 = vpop.f32.mrf.mxu0
      %v3165 = vpop.f32.mrf.mxu0
      %v3166 = vadd.f32 0.0, %v3165
      %v3167 = vpop.f32.mrf.mxu0
      %3168 = vmatprep.mubr.bf16.mxu0 0
      %3169 = vmatmul.mubr.bf16.gmra.mxu0 %v3075
      %v3170 = vpop.f32.mrf.mxu0
      %v3171 = vadd.f32 0.0, %v3170
      %v3172 = vpop.f32.mrf.mxu0
      %v3173 = vpop.f32.mrf.mxu0
      %v3174 = vadd.f32 0.0, %v3173
      %v3175 = vpop.f32.mrf.mxu0
      %3176 = vmatprep.mubr.bf16.mxu0 0
      %3177 = vmatmul.mubr.bf16.gmra.mxu0 %v3078
      %v3178 = vpop.f32.mrf.mxu0
      %v3179 = vadd.f32 0.0, %v3178
      %v3180 = vpop.f32.mrf.mxu0
      %v3181 = vpop.f32.mrf.mxu0
      %v3182 = vadd.f32 0.0, %v3181
      %v3183 = vpop.f32.mrf.mxu0
      %3184 = vmatprep.mubr.bf16.mxu0 0
      %3185 = vmatmul.mubr.bf16.gmra.mxu0 %v3081
      %v3186 = vpop.f32.mrf.mxu0
      %v3187 = vadd.f32 0.0, %v3186
      %v3188 = vpop.f32.mrf.mxu0
      %v3189 = vpop.f32.mrf.mxu0
      %v3190 = vadd.f32 0.0, %v3189
      %v3191 = vpop.f32.mrf.mxu0
      %3192 = vmatprep.mubr.bf16.mxu0 0
      %3193 = vmatmul.mubr.bf16.gmra.mxu0 %v3084
      %v3194 = vpop.f32.mrf.mxu0
      %v3195 = vadd.f32 0.0, %v3194
      %v3196 = vpop.f32.mrf.mxu0
      %v3197 = vpop.f32.mrf.mxu0
      %v3198 = vadd.f32 0.0, %v3197
      %v3199 = vpop.f32.mrf.mxu0
      %3200 = vmatprep.mubr.bf16.mxu0 0
      %3201 = vmatmul.mubr.bf16.gmra.mxu0 %v3087
      %v3202 = vpop.f32.mrf.mxu0
      %v3203 = vadd.f32 0.0, %v3202
      %v3204 = vpop.f32.mrf.mxu0
      %v3205 = vpop.f32.mrf.mxu0
      %v3206 = vadd.f32 0.0, %v3205
      %v3207 = vpop.f32.mrf.mxu0
      %3208 = vmatprep.mubr.bf16.mxu0 0
      %3209 = vmatmul.mubr.bf16.gmra.mxu0 %v3090
      %v3210 = vpop.f32.mrf.mxu0
      %v3211 = vadd.f32 0.0, %v3210
      %v3212 = vpop.f32.mrf.mxu0
      %v3213 = vpop.f32.mrf.mxu0
      %v3214 = vadd.f32 0.0, %v3213
      %v3215 = vpop.f32.mrf.mxu0
      %3216 = vmatprep.mubr.bf16.mxu0 0
      %3217 = vmatmul.mubr.bf16.gmra.mxu0 %v3093
      %v3218 = vpop.f32.mrf.mxu0
      %v3219 = vadd.f32 0.0, %v3218
      %v3220 = vpop.f32.mrf.mxu0
      %v3221 = vpop.f32.mrf.mxu0
      %v3222 = vadd.f32 0.0, %v3221
      %v3223 = vpop.f32.mrf.mxu0
      %3224 = vmatprep.mubr.bf16.mxu0 0
      %3225 = vmatmul.mubr.bf16.gmra.mxu0 %v3096
      %v3226 = vpop.f32.mrf.mxu0
      %v3227 = vadd.f32 0.0, %v3226
      %v3228 = vpop.f32.mrf.mxu0
      %v3229 = vpop.f32.mrf.mxu0
      %v3230 = vadd.f32 0.0, %v3229
      %v3231 = vpop.f32.mrf.mxu0
      %3232 = vmatprep.mubr.bf16.mxu0 0
      %3233 = vmatmul.mubr.bf16.gmra.mxu0 %v3099
      %v3234 = vpop.f32.mrf.mxu0
      %v3235 = vadd.f32 0.0, %v3234
      %v3236 = vpop.f32.mrf.mxu0
      %v3237 = vpop.f32.mrf.mxu0
      %v3238 = vadd.f32 0.0, %v3237
      %v3239 = vpop.f32.mrf.mxu0
      %3240 = vmatprep.mubr.bf16.mxu0 0
      %3241 = vmatmul.mubr.bf16.gmra.mxu0 %v3102
      %v3242 = vpop.f32.mrf.mxu0
      %v3243 = vadd.f32 0.0, %v3242
      %v3244 = vpop.f32.mrf.mxu0
      %v3245 = vpop.f32.mrf.mxu0
      %v3246 = vadd.f32 0.0, %v3245
      %v3247 = vpop.f32.mrf.mxu0
      %3248 = vmatprep.mubr.bf16.mxu0 0
      %3249 = vmatmul.mubr.bf16.gmra.mxu0 %v3105
      %v3250 = vpop.f32.mrf.mxu0
      %v3251 = vadd.f32 0.0, %v3250
      %v3252 = vpop.f32.mrf.mxu0
      %v3253 = vpop.f32.mrf.mxu0
      %v3254 = vadd.f32 0.0, %v3253
      %v3255 = vpop.f32.mrf.mxu0
      %3256 = vmatprep.mubr.bf16.mxu0 0
      %3257 = vmatmul.mubr.bf16.gmra.mxu0 %v3108
      %v3258 = vpop.f32.mrf.mxu0
      %v3259 = vadd.f32 0.0, %v3258
      %v3260 = vpop.f32.mrf.mxu0
      %v3261 = vpop.f32.mrf.mxu0
      %v3262 = vadd.f32 0.0, %v3261
      %v3263 = vpop.f32.mrf.mxu0
      %3264 = vmatprep.mubr.bf16.mxu0 0
      %3265 = vmatmul.mubr.bf16.gmra.mxu0 %v3111
      %v3266 = vpop.f32.mrf.mxu0
      %v3267 = vadd.f32 0.0, %v3266
      %v3268 = vpop.f32.mrf.mxu0
      %v3269 = vpop.f32.mrf.mxu0
      %v3270 = vadd.f32 0.0, %v3269
      %v3271 = vpop.f32.mrf.mxu0
      %3272 = vmatprep.mubr.bf16.mxu0 0
      %3273 = vmatmul.mubr.bf16.gmra.mxu0 %v3114
      %v3274 = vpop.f32.mrf.mxu0
      %v3275 = vadd.f32 0.0, %v3274
      %v3276 = vpop.f32.mrf.mxu0
      %v3277 = vpop.f32.mrf.mxu0
      %v3278 = vadd.f32 0.0, %v3277
      %v3279 = vpop.f32.mrf.mxu0
      %3280 = vmatprep.mubr.bf16.mxu0 0
      %3281 = vmatmul.mubr.bf16.gmra.mxu0 %v3117
      %v3282 = vpop.f32.mrf.mxu0
      %v3283 = vadd.f32 0.0, %v3282
      %v3284 = vpop.f32.mrf.mxu0
      %v3285 = vpop.f32.mrf.mxu0
      %v3286 = vadd.f32 0.0, %v3285
      %v3287 = vpop.f32.mrf.mxu0
      %3288 = vmatprep.mubr.bf16.mxu0 0
      %3289 = vmatmul.mubr.bf16.gmra.mxu0 %v3120
      %v3290 = vpop.f32.mrf.mxu0
      %v3291 = vadd.f32 0.0, %v3290
      %v3292 = vpop.f32.mrf.mxu0
      %v3293 = vpop.f32.mrf.mxu0
      %v3294 = vadd.f32 0.0, %v3293
      %v3295 = vpop.f32.mrf.mxu0
      %3296 = vmatprep.mubr.bf16.mxu0 0
      %3297 = vmatmul.mubr.bf16.gmra.mxu0 %v3123
      %v3298 = vpop.f32.mrf.mxu0
      %v3299 = vadd.f32 0.0, %v3298
      %v3300 = vpop.f32.mrf.mxu0
      %v3301 = vpop.f32.mrf.mxu0
      %v3302 = vadd.f32 0.0, %v3301
      %v3303 = vpop.f32.mrf.mxu0
      %3304 = vdwg.mxu0
      %v3305 = vadd.f32 %v2866, %v3163
      %v3306 = vadd.f32 %v2867, %v3166
      %v3307 = vadd.f32 %v2868, %v3171
      %v3308 = vadd.f32 %v2869, %v3174
      %v3309 = vadd.f32 %v2870, %v3179
      %v3310 = vadd.f32 %v2871, %v3182
      %v3311 = vadd.f32 %v2872, %v3187
      %v3312 = vadd.f32 %v2873, %v3190
      %v3313 = vadd.f32 %v2874, %v3195
      %v3314 = vadd.f32 %v2875, %v3198
      %v3315 = vadd.f32 %v2876, %v3203
      %v3316 = vadd.f32 %v2877, %v3206
      %v3317 = vadd.f32 %v2878, %v3211
      %v3318 = vadd.f32 %v2879, %v3214
      %v3319 = vadd.f32 %v2880, %v3219
      %v3320 = vadd.f32 %v2881, %v3222
      %v3321 = vadd.f32 %v2882, %v3227
      %v3322 = vadd.f32 %v2883, %v3230
      %v3323 = vadd.f32 %v2884, %v3235
      %v3324 = vadd.f32 %v2885, %v3238
      %v3325 = vadd.f32 %v2886, %v3243
      %v3326 = vadd.f32 %v2887, %v3246
      %v3327 = vadd.f32 %v2888, %v3251
      %v3328 = vadd.f32 %v2889, %v3254
      %v3329 = vadd.f32 %v2890, %v3259
      %v3330 = vadd.f32 %v2891, %v3262
      %v3331 = vadd.f32 %v2892, %v3267
      %v3332 = vadd.f32 %v2893, %v3270
      %v3333 = vadd.f32 %v2894, %v3275
      %v3334 = vadd.f32 %v2895, %v3278
      %v3335 = vadd.f32 %v2896, %v3283
      %v3336 = vadd.f32 %v2897, %v3286
      %v3337 = vadd.f32 %v2898, %v3291
      %v3338 = vadd.f32 %v2899, %v3294
      %v3339 = vadd.f32 %v2900, %v3299
      %v3340 = vadd.f32 %v2901, %v3302
      %v3341 = vld [vmem:[#allocation2 + $0xa0] sm:$0x7]
      %s3342 = scalar_lea.vmem %s185, 14
      %v3343 = vld [vmem:[%s3342] sm:$0x3]
      %v3345 = vunpack.c.l.b16 %v3341
      %v3346 = vpack.c.b16 %v3345, %v3345
      %vm3347 = vsmask.f32 5376
      %v3349 = vshrl.u32 %v3015, 16
      %v3351 = vrot.slane %v3349, 2
      %v3352 = vshll.u32 %v3015, 16
      %v3354 = vrot.slane %v3352, 3
      %v3355 = vor.u32 %v3351, %v3354
      %v3357 = vshrl.u32 %v3016, 16
      %v3359 = vrot.slane %v3357, 2
      %v3360 = vshll.u32 %v3016, 16
      %v3362 = vrot.slane %v3360, 3
      %v3363 = vor.u32 %v3359, %v3362
      %v3364 = vsel %vm3347, %v3355, %v3363
      %v3366 = vshrl.u32 %v3017, 16
      %v3368 = vrot.slane %v3366, 2
      %v3369 = vshll.u32 %v3017, 16
      %v3371 = vrot.slane %v3369, 3
      %v3372 = vor.u32 %v3368, %v3371
      %v3373 = vsel %vm3347, %v3363, %v3372
      %v3375 = vshrl.u32 %v3018, 16
      %v3377 = vrot.slane %v3375, 2
      %v3378 = vshll.u32 %v3018, 16
      %v3380 = vrot.slane %v3378, 3
      %v3381 = vor.u32 %v3377, %v3380
      %v3382 = vsel %vm3347, %v3372, %v3381
      %v3384 = vshrl.u32 %v3019, 16
      %v3386 = vrot.slane %v3384, 2
      %v3387 = vshll.u32 %v3019, 16
      %v3389 = vrot.slane %v3387, 3
      %v3390 = vor.u32 %v3386, %v3389
      %v3391 = vsel %vm3347, %v3381, %v3390
      %v3393 = vshrl.u32 %v3020, 16
      %v3395 = vrot.slane %v3393, 2
      %v3396 = vshll.u32 %v3020, 16
      %v3398 = vrot.slane %v3396, 3
      %v3399 = vor.u32 %v3395, %v3398
      %v3400 = vsel %vm3347, %v3390, %v3399
      %v3402 = vshrl.u32 %v3021, 16
      %v3404 = vrot.slane %v3402, 2
      %v3405 = vshll.u32 %v3021, 16
      %v3407 = vrot.slane %v3405, 3
      %v3408 = vor.u32 %v3404, %v3407
      %v3409 = vsel %vm3347, %v3399, %v3408
      %v3411 = vshrl.u32 %v3022, 16
      %v3413 = vrot.slane %v3411, 2
      %v3414 = vshll.u32 %v3022, 16
      %v3416 = vrot.slane %v3414, 3
      %v3417 = vor.u32 %v3413, %v3416
      %v3418 = vsel %vm3347, %v3408, %v3417
      %v3420 = vshrl.u32 %v3023, 16
      %v3422 = vrot.slane %v3420, 2
      %v3423 = vshll.u32 %v3023, 16
      %v3425 = vrot.slane %v3423, 3
      %v3426 = vor.u32 %v3422, %v3425
      %v3427 = vsel %vm3347, %v3417, %v3426
      %v3429 = vshrl.u32 %v3024, 16
      %v3431 = vrot.slane %v3429, 2
      %v3432 = vshll.u32 %v3024, 16
      %v3434 = vrot.slane %v3432, 3
      %v3435 = vor.u32 %v3431, %v3434
      %v3436 = vsel %vm3347, %v3426, %v3435
      %v3438 = vshrl.u32 %v3025, 16
      %v3440 = vrot.slane %v3438, 2
      %v3441 = vshll.u32 %v3025, 16
      %v3443 = vrot.slane %v3441, 3
      %v3444 = vor.u32 %v3440, %v3443
      %v3445 = vsel %vm3347, %v3435, %v3444
      %v3447 = vshrl.u32 %v3026, 16
      %v3449 = vrot.slane %v3447, 2
      %v3450 = vshll.u32 %v3026, 16
      %v3452 = vrot.slane %v3450, 3
      %v3453 = vor.u32 %v3449, %v3452
      %v3454 = vsel %vm3347, %v3444, %v3453
      %v3456 = vshrl.u32 %v3027, 16
      %v3458 = vrot.slane %v3456, 2
      %v3459 = vshll.u32 %v3027, 16
      %v3461 = vrot.slane %v3459, 3
      %v3462 = vor.u32 %v3458, %v3461
      %v3463 = vsel %vm3347, %v3453, %v3462
      %v3465 = vshrl.u32 %v3028, 16
      %v3467 = vrot.slane %v3465, 2
      %v3468 = vshll.u32 %v3028, 16
      %v3470 = vrot.slane %v3468, 3
      %v3471 = vor.u32 %v3467, %v3470
      %v3472 = vsel %vm3347, %v3462, %v3471
      %v3474 = vshrl.u32 %v3029, 16
      %v3476 = vrot.slane %v3474, 2
      %v3477 = vshll.u32 %v3029, 16
      %v3479 = vrot.slane %v3477, 3
      %v3480 = vor.u32 %v3476, %v3479
      %v3481 = vsel %vm3347, %v3471, %v3480
      %v3483 = vshrl.u32 %v3030, 16
      %v3485 = vrot.slane %v3483, 2
      %v3486 = vshll.u32 %v3030, 16
      %v3488 = vrot.slane %v3486, 3
      %v3489 = vor.u32 %v3485, %v3488
      %v3490 = vsel %vm3347, %v3480, %v3489
      %v3492 = vshrl.u32 %v3031, 16
      %v3494 = vrot.slane %v3492, 2
      %v3495 = vshll.u32 %v3031, 16
      %v3497 = vrot.slane %v3495, 3
      %v3498 = vor.u32 %v3494, %v3497
      %v3499 = vsel %vm3347, %v3489, %v3498
      %v3501 = vshrl.u32 %v3032, 16
      %v3503 = vrot.slane %v3501, 2
      %v3504 = vshll.u32 %v3032, 16
      %v3506 = vrot.slane %v3504, 3
      %v3507 = vor.u32 %v3503, %v3506
      %v3508 = vsel %vm3347, %v3498, %v3507
      %v3510 = vshrl.u32 %v3346, 16
      %v3512 = vrot.slane %v3510, 2
      %v3513 = vshll.u32 %v3346, 16
      %v3515 = vrot.slane %v3513, 3
      %v3516 = vor.u32 %v3512, %v3515
      %v3517 = vsel %vm3347, %v3507, %v3516
      %v3519 = vsel %vm936, %v3364, 0
      %v3522 = vsel %vm936, %v3373, 0
      %v3525 = vsel %vm936, %v3382, 0
      %v3528 = vsel %vm936, %v3391, 0
      %v3531 = vsel %vm936, %v3400, 0
      %v3534 = vsel %vm936, %v3409, 0
      %v3537 = vsel %vm936, %v3418, 0
      %v3540 = vsel %vm936, %v3427, 0
      %v3543 = vsel %vm936, %v3436, 0
      %v3546 = vsel %vm936, %v3445, 0
      %v3549 = vsel %vm936, %v3454, 0
      %v3552 = vsel %vm936, %v3463, 0
      %v3555 = vsel %vm936, %v3472, 0
      %v3558 = vsel %vm936, %v3481, 0
      %v3561 = vsel %vm936, %v3490, 0
      %v3564 = vsel %vm936, %v3499, 0
      %v3567 = vsel %vm936, %v3508, 0
      %v3570 = vsel %vm936, %v3517, 0
      %v3573 = vsel %vm991, %v3343, 0
      %3575 = vmatprep.subr.bf16.mxu0 0
      %3576 = vmatpush1.bf16.msra.mxu0 0
      %3577 = vmatprep.subr.bf16.mxu0 0
      %3578 = vmatpush1.bf16.msra.mxu0 0
      %3579 = vmatprep.subr.bf16.mxu0 0
      %3580 = vmatpush1.bf16.msra.mxu0 0
      %3581 = vmatprep.subr.bf16.mxu0 0
      %3582 = vmatpush1.bf16.msra.mxu0 0
      %3583 = vmatprep.subr.bf16.mxu0 0
      %3584 = vmatpush1.bf16.msra.mxu0 0
      %3585 = vmatprep.subr.bf16.mxu0 0
      %3586 = vmatpush1.bf16.msra.mxu0 0
      %3587 = vmatprep.subr.bf16.mxu0 0
      %3588 = vmatpush1.bf16.msra.mxu0 0
      %3589 = vmatprep.subr.bf16.mxu0 0
      %3590 = vmatpush1.bf16.msra.mxu0 %v3573
      %3591 = vmatprep.subr.bf16.mxu0 0
      %3592 = vmatpush2.bf16.msra.mxu0 0
      %3593 = vmatprep.subr.bf16.mxu0 0
      %3594 = vmatpush2.bf16.msra.mxu0 0
      %3595 = vmatprep.subr.bf16.mxu0 0
      %3596 = vmatpush2.bf16.msra.mxu0 0
      %3597 = vmatprep.subr.bf16.mxu0 0
      %3598 = vmatpush2.bf16.msra.mxu0 0
      %3599 = vmatprep.subr.bf16.mxu0 0
      %3600 = vmatpush2.bf16.msra.mxu0 0
      %3601 = vmatprep.subr.bf16.mxu0 0
      %3602 = vmatpush2.bf16.msra.mxu0 0
      %3603 = vmatprep.subr.bf16.mxu0 0
      %3604 = vmatpush2.bf16.msra.mxu0 0
      %3605 = vmatprep.subr.bf16.mxu0 0
      %3606 = vmatpush2.bf16.msra.mxu0 0
      %3607 = vmatprep.mubr.bf16.mxu0 0
      %3608 = vmatmul.mubr.bf16.gmra.mxu0 %v3519
      %v3609 = vpop.f32.mrf.mxu0
      %v3610 = vadd.f32 0.0, %v3609
      %v3611 = vpop.f32.mrf.mxu0
      %v3612 = vpop.f32.mrf.mxu0
      %v3613 = vadd.f32 0.0, %v3612
      %v3614 = vpop.f32.mrf.mxu0
      %3615 = vmatprep.mubr.bf16.mxu0 0
      %3616 = vmatmul.mubr.bf16.gmra.mxu0 %v3522
      %v3617 = vpop.f32.mrf.mxu0
      %v3618 = vadd.f32 0.0, %v3617
      %v3619 = vpop.f32.mrf.mxu0
      %v3620 = vpop.f32.mrf.mxu0
      %v3621 = vadd.f32 0.0, %v3620
      %v3622 = vpop.f32.mrf.mxu0
      %3623 = vmatprep.mubr.bf16.mxu0 0
      %3624 = vmatmul.mubr.bf16.gmra.mxu0 %v3525
      %v3625 = vpop.f32.mrf.mxu0
      %v3626 = vadd.f32 0.0, %v3625
      %v3627 = vpop.f32.mrf.mxu0
      %v3628 = vpop.f32.mrf.mxu0
      %v3629 = vadd.f32 0.0, %v3628
      %v3630 = vpop.f32.mrf.mxu0
      %3631 = vmatprep.mubr.bf16.mxu0 0
      %3632 = vmatmul.mubr.bf16.gmra.mxu0 %v3528
      %v3633 = vpop.f32.mrf.mxu0
      %v3634 = vadd.f32 0.0, %v3633
      %v3635 = vpop.f32.mrf.mxu0
      %v3636 = vpop.f32.mrf.mxu0
      %v3637 = vadd.f32 0.0, %v3636
      %v3638 = vpop.f32.mrf.mxu0
      %3639 = vmatprep.mubr.bf16.mxu0 0
      %3640 = vmatmul.mubr.bf16.gmra.mxu0 %v3531
      %v3641 = vpop.f32.mrf.mxu0
      %v3642 = vadd.f32 0.0, %v3641
      %v3643 = vpop.f32.mrf.mxu0
      %v3644 = vpop.f32.mrf.mxu0
      %v3645 = vadd.f32 0.0, %v3644
      %v3646 = vpop.f32.mrf.mxu0
      %3647 = vmatprep.mubr.bf16.mxu0 0
      %3648 = vmatmul.mubr.bf16.gmra.mxu0 %v3534
      %v3649 = vpop.f32.mrf.mxu0
      %v3650 = vadd.f32 0.0, %v3649
      %v3651 = vpop.f32.mrf.mxu0
      %v3652 = vpop.f32.mrf.mxu0
      %v3653 = vadd.f32 0.0, %v3652
      %v3654 = vpop.f32.mrf.mxu0
      %3655 = vmatprep.mubr.bf16.mxu0 0
      %3656 = vmatmul.mubr.bf16.gmra.mxu0 %v3537
      %v3657 = vpop.f32.mrf.mxu0
      %v3658 = vadd.f32 0.0, %v3657
      %v3659 = vpop.f32.mrf.mxu0
      %v3660 = vpop.f32.mrf.mxu0
      %v3661 = vadd.f32 0.0, %v3660
      %v3662 = vpop.f32.mrf.mxu0
      %3663 = vmatprep.mubr.bf16.mxu0 0
      %3664 = vmatmul.mubr.bf16.gmra.mxu0 %v3540
      %v3665 = vpop.f32.mrf.mxu0
      %v3666 = vadd.f32 0.0, %v3665
      %v3667 = vpop.f32.mrf.mxu0
      %v3668 = vpop.f32.mrf.mxu0
      %v3669 = vadd.f32 0.0, %v3668
      %v3670 = vpop.f32.mrf.mxu0
      %3671 = vmatprep.mubr.bf16.mxu0 0
      %3672 = vmatmul.mubr.bf16.gmra.mxu0 %v3543
      %v3673 = vpop.f32.mrf.mxu0
      %v3674 = vadd.f32 0.0, %v3673
      %v3675 = vpop.f32.mrf.mxu0
      %v3676 = vpop.f32.mrf.mxu0
      %v3677 = vadd.f32 0.0, %v3676
      %v3678 = vpop.f32.mrf.mxu0
      %3679 = vmatprep.mubr.bf16.mxu0 0
      %3680 = vmatmul.mubr.bf16.gmra.mxu0 %v3546
      %v3681 = vpop.f32.mrf.mxu0
      %v3682 = vadd.f32 0.0, %v3681
      %v3683 = vpop.f32.mrf.mxu0
      %v3684 = vpop.f32.mrf.mxu0
      %v3685 = vadd.f32 0.0, %v3684
      %v3686 = vpop.f32.mrf.mxu0
      %3687 = vmatprep.mubr.bf16.mxu0 0
      %3688 = vmatmul.mubr.bf16.gmra.mxu0 %v3549
      %v3689 = vpop.f32.mrf.mxu0
      %v3690 = vadd.f32 0.0, %v3689
      %v3691 = vpop.f32.mrf.mxu0
      %v3692 = vpop.f32.mrf.mxu0
      %v3693 = vadd.f32 0.0, %v3692
      %v3694 = vpop.f32.mrf.mxu0
      %3695 = vmatprep.mubr.bf16.mxu0 0
      %3696 = vmatmul.mubr.bf16.gmra.mxu0 %v3552
      %v3697 = vpop.f32.mrf.mxu0
      %v3698 = vadd.f32 0.0, %v3697
      %v3699 = vpop.f32.mrf.mxu0
      %v3700 = vpop.f32.mrf.mxu0
      %v3701 = vadd.f32 0.0, %v3700
      %v3702 = vpop.f32.mrf.mxu0
      %3703 = vmatprep.mubr.bf16.mxu0 0
      %3704 = vmatmul.mubr.bf16.gmra.mxu0 %v3555
      %v3705 = vpop.f32.mrf.mxu0
      %v3706 = vadd.f32 0.0, %v3705
      %v3707 = vpop.f32.mrf.mxu0
      %v3708 = vpop.f32.mrf.mxu0
      %v3709 = vadd.f32 0.0, %v3708
      %v3710 = vpop.f32.mrf.mxu0
      %3711 = vmatprep.mubr.bf16.mxu0 0
      %3712 = vmatmul.mubr.bf16.gmra.mxu0 %v3558
      %v3713 = vpop.f32.mrf.mxu0
      %v3714 = vadd.f32 0.0, %v3713
      %v3715 = vpop.f32.mrf.mxu0
      %v3716 = vpop.f32.mrf.mxu0
      %v3717 = vadd.f32 0.0, %v3716
      %v3718 = vpop.f32.mrf.mxu0
      %3719 = vmatprep.mubr.bf16.mxu0 0
      %3720 = vmatmul.mubr.bf16.gmra.mxu0 %v3561
      %v3721 = vpop.f32.mrf.mxu0
      %v3722 = vadd.f32 0.0, %v3721
      %v3723 = vpop.f32.mrf.mxu0
      %v3724 = vpop.f32.mrf.mxu0
      %v3725 = vadd.f32 0.0, %v3724
      %v3726 = vpop.f32.mrf.mxu0
      %3727 = vmatprep.mubr.bf16.mxu0 0
      %3728 = vmatmul.mubr.bf16.gmra.mxu0 %v3564
      %v3729 = vpop.f32.mrf.mxu0
      %v3730 = vadd.f32 0.0, %v3729
      %v3731 = vpop.f32.mrf.mxu0
      %v3732 = vpop.f32.mrf.mxu0
      %v3733 = vadd.f32 0.0, %v3732
      %v3734 = vpop.f32.mrf.mxu0
      %3735 = vmatprep.mubr.bf16.mxu0 0
      %3736 = vmatmul.mubr.bf16.gmra.mxu0 %v3567
      %v3737 = vpop.f32.mrf.mxu0
      %v3738 = vadd.f32 0.0, %v3737
      %v3739 = vpop.f32.mrf.mxu0
      %v3740 = vpop.f32.mrf.mxu0
      %v3741 = vadd.f32 0.0, %v3740
      %v3742 = vpop.f32.mrf.mxu0
      %3743 = vmatprep.mubr.bf16.mxu0 0
      %3744 = vmatmul.mubr.bf16.gmra.mxu0 %v3570
      %v3745 = vpop.f32.mrf.mxu0
      %v3746 = vadd.f32 0.0, %v3745
      %v3747 = vpop.f32.mrf.mxu0
      %v3748 = vpop.f32.mrf.mxu0
      %v3749 = vadd.f32 0.0, %v3748
      %v3750 = vpop.f32.mrf.mxu0
      %3751 = vdwg.mxu0
      %v3752 = vadd.f32 %v3305, %v3610
      %v3753 = vadd.f32 %v3306, %v3613
      %v3754 = vadd.f32 %v3307, %v3618
      %v3755 = vadd.f32 %v3308, %v3621
      %v3756 = vadd.f32 %v3309, %v3626
      %v3757 = vadd.f32 %v3310, %v3629
      %v3758 = vadd.f32 %v3311, %v3634
      %v3759 = vadd.f32 %v3312, %v3637
      %v3760 = vadd.f32 %v3313, %v3642
      %v3761 = vadd.f32 %v3314, %v3645
      %v3762 = vadd.f32 %v3315, %v3650
      %v3763 = vadd.f32 %v3316, %v3653
      %v3764 = vadd.f32 %v3317, %v3658
      %v3765 = vadd.f32 %v3318, %v3661
      %v3766 = vadd.f32 %v3319, %v3666
      %v3767 = vadd.f32 %v3320, %v3669
      %v3768 = vadd.f32 %v3321, %v3674
      %v3769 = vadd.f32 %v3322, %v3677
      %v3770 = vadd.f32 %v3323, %v3682
      %v3771 = vadd.f32 %v3324, %v3685
      %v3772 = vadd.f32 %v3325, %v3690
      %v3773 = vadd.f32 %v3326, %v3693
      %v3774 = vadd.f32 %v3327, %v3698
      %v3775 = vadd.f32 %v3328, %v3701
      %v3776 = vadd.f32 %v3329, %v3706
      %v3777 = vadd.f32 %v3330, %v3709
      %v3778 = vadd.f32 %v3331, %v3714
      %v3779 = vadd.f32 %v3332, %v3717
      %v3780 = vadd.f32 %v3333, %v3722
      %v3781 = vadd.f32 %v3334, %v3725
      %v3782 = vadd.f32 %v3335, %v3730
      %v3783 = vadd.f32 %v3336, %v3733
      %v3784 = vadd.f32 %v3337, %v3738
      %v3785 = vadd.f32 %v3338, %v3741
      %v3786 = vadd.f32 %v3339, %v3746
      %v3787 = vadd.f32 %v3340, %v3749
      %v3788 = vld [vmem:[#allocation2 + $0x10] sm:$0x8]
      %s3789 = scalar_lea.vmem %s185, 16
      %v3790 = vld [vmem:[%s3789] sm:$0x3]
      %v3792 = vunpack.c.l.b16 %v3788
      %v3793 = vpack.c.b16 %v2979, %v3792
      %vm3794 = vcmask 1044480
      %v3795 = vrot.slane %v3793, 3
      %v3796 = vrot.slane %v3016, 3
      %v3797 = vsel %vm3794, %v3795, %v3796
      %v3798 = vrot.slane %v3017, 3
      %v3799 = vsel %vm3794, %v3796, %v3798
      %v3800 = vrot.slane %v3018, 3
      %v3801 = vsel %vm3794, %v3798, %v3800
      %v3802 = vrot.slane %v3019, 3
      %v3803 = vsel %vm3794, %v3800, %v3802
      %v3804 = vrot.slane %v3020, 3
      %v3805 = vsel %vm3794, %v3802, %v3804
      %v3806 = vrot.slane %v3021, 3
      %v3807 = vsel %vm3794, %v3804, %v3806
      %v3808 = vrot.slane %v3022, 3
      %v3809 = vsel %vm3794, %v3806, %v3808
      %v3810 = vrot.slane %v3023, 3
      %v3811 = vsel %vm3794, %v3808, %v3810
      %v3812 = vrot.slane %v3024, 3
      %v3813 = vsel %vm3794, %v3810, %v3812
      %v3814 = vrot.slane %v3025, 3
      %v3815 = vsel %vm3794, %v3812, %v3814
      %v3816 = vrot.slane %v3026, 3
      %v3817 = vsel %vm3794, %v3814, %v3816
      %v3818 = vrot.slane %v3027, 3
      %v3819 = vsel %vm3794, %v3816, %v3818
      %v3820 = vrot.slane %v3028, 3
      %v3821 = vsel %vm3794, %v3818, %v3820
      %v3822 = vrot.slane %v3029, 3
      %v3823 = vsel %vm3794, %v3820, %v3822
      %v3824 = vrot.slane %v3030, 3
      %v3825 = vsel %vm3794, %v3822, %v3824
      %v3826 = vrot.slane %v3031, 3
      %v3827 = vsel %vm3794, %v3824, %v3826
      %v3828 = vrot.slane %v3032, 3
      %v3829 = vsel %vm3794, %v3826, %v3828
      %v3830 = vrot.slane %v3346, 3
      %v3831 = vsel %vm3794, %v3828, %v3830
      %v3833 = vsel %vm936, %v3797, 0
      %v3836 = vsel %vm936, %v3799, 0
      %v3839 = vsel %vm936, %v3801, 0
      %v3842 = vsel %vm936, %v3803, 0
      %v3845 = vsel %vm936, %v3805, 0
      %v3848 = vsel %vm936, %v3807, 0
      %v3851 = vsel %vm936, %v3809, 0
      %v3854 = vsel %vm936, %v3811, 0
      %v3857 = vsel %vm936, %v3813, 0
      %v3860 = vsel %vm936, %v3815, 0
      %v3863 = vsel %vm936, %v3817, 0
      %v3866 = vsel %vm936, %v3819, 0
      %v3869 = vsel %vm936, %v3821, 0
      %v3872 = vsel %vm936, %v3823, 0
      %v3875 = vsel %vm936, %v3825, 0
      %v3878 = vsel %vm936, %v3827, 0
      %v3881 = vsel %vm936, %v3829, 0
      %v3884 = vsel %vm936, %v3831, 0
      %v3887 = vsel %vm991, %v3790, 0
      %3889 = vmatprep.subr.bf16.mxu0 0
      %3890 = vmatpush1.bf16.msra.mxu0 0
      %3891 = vmatprep.subr.bf16.mxu0 0
      %3892 = vmatpush1.bf16.msra.mxu0 0
      %3893 = vmatprep.subr.bf16.mxu0 0
      %3894 = vmatpush1.bf16.msra.mxu0 0
      %3895 = vmatprep.subr.bf16.mxu0 0
      %3896 = vmatpush1.bf16.msra.mxu0 0
      %3897 = vmatprep.subr.bf16.mxu0 0
      %3898 = vmatpush1.bf16.msra.mxu0 0
      %3899 = vmatprep.subr.bf16.mxu0 0
      %3900 = vmatpush1.bf16.msra.mxu0 0
      %3901 = vmatprep.subr.bf16.mxu0 0
      %3902 = vmatpush1.bf16.msra.mxu0 0
      %3903 = vmatprep.subr.bf16.mxu0 0
      %3904 = vmatpush1.bf16.msra.mxu0 %v3887
      %3905 = vmatprep.subr.bf16.mxu0 0
      %3906 = vmatpush2.bf16.msra.mxu0 0
      %3907 = vmatprep.subr.bf16.mxu0 0
      %3908 = vmatpush2.bf16.msra.mxu0 0
      %3909 = vmatprep.subr.bf16.mxu0 0
      %3910 = vmatpush2.bf16.msra.mxu0 0
      %3911 = vmatprep.subr.bf16.mxu0 0
      %3912 = vmatpush2.bf16.msra.mxu0 0
      %3913 = vmatprep.subr.bf16.mxu0 0
      %3914 = vmatpush2.bf16.msra.mxu0 0
      %3915 = vmatprep.subr.bf16.mxu0 0
      %3916 = vmatpush2.bf16.msra.mxu0 0
      %3917 = vmatprep.subr.bf16.mxu0 0
      %3918 = vmatpush2.bf16.msra.mxu0 0
      %3919 = vmatprep.subr.bf16.mxu0 0
      %3920 = vmatpush2.bf16.msra.mxu0 0
      %3921 = vmatprep.mubr.bf16.mxu0 0
      %3922 = vmatmul.mubr.bf16.gmra.mxu0 %v3833
      %v3923 = vpop.f32.mrf.mxu0
      %v3924 = vadd.f32 0.0, %v3923
      %v3925 = vpop.f32.mrf.mxu0
      %v3926 = vpop.f32.mrf.mxu0
      %v3927 = vadd.f32 0.0, %v3926
      %v3928 = vpop.f32.mrf.mxu0
      %3929 = vmatprep.mubr.bf16.mxu0 0
      %3930 = vmatmul.mubr.bf16.gmra.mxu0 %v3836
      %v3931 = vpop.f32.mrf.mxu0
      %v3932 = vadd.f32 0.0, %v3931
      %v3933 = vpop.f32.mrf.mxu0
      %v3934 = vpop.f32.mrf.mxu0
      %v3935 = vadd.f32 0.0, %v3934
      %v3936 = vpop.f32.mrf.mxu0
      %3937 = vmatprep.mubr.bf16.mxu0 0
      %3938 = vmatmul.mubr.bf16.gmra.mxu0 %v3839
      %v3939 = vpop.f32.mrf.mxu0
      %v3940 = vadd.f32 0.0, %v3939
      %v3941 = vpop.f32.mrf.mxu0
      %v3942 = vpop.f32.mrf.mxu0
      %v3943 = vadd.f32 0.0, %v3942
      %v3944 = vpop.f32.mrf.mxu0
      %3945 = vmatprep.mubr.bf16.mxu0 0
      %3946 = vmatmul.mubr.bf16.gmra.mxu0 %v3842
      %v3947 = vpop.f32.mrf.mxu0
      %v3948 = vadd.f32 0.0, %v3947
      %v3949 = vpop.f32.mrf.mxu0
      %v3950 = vpop.f32.mrf.mxu0
      %v3951 = vadd.f32 0.0, %v3950
      %v3952 = vpop.f32.mrf.mxu0
      %3953 = vmatprep.mubr.bf16.mxu0 0
      %3954 = vmatmul.mubr.bf16.gmra.mxu0 %v3845
      %v3955 = vpop.f32.mrf.mxu0
      %v3956 = vadd.f32 0.0, %v3955
      %v3957 = vpop.f32.mrf.mxu0
      %v3958 = vpop.f32.mrf.mxu0
      %v3959 = vadd.f32 0.0, %v3958
      %v3960 = vpop.f32.mrf.mxu0
      %3961 = vmatprep.mubr.bf16.mxu0 0
      %3962 = vmatmul.mubr.bf16.gmra.mxu0 %v3848
      %v3963 = vpop.f32.mrf.mxu0
      %v3964 = vadd.f32 0.0, %v3963
      %v3965 = vpop.f32.mrf.mxu0
      %v3966 = vpop.f32.mrf.mxu0
      %v3967 = vadd.f32 0.0, %v3966
      %v3968 = vpop.f32.mrf.mxu0
      %3969 = vmatprep.mubr.bf16.mxu0 0
      %3970 = vmatmul.mubr.bf16.gmra.mxu0 %v3851
      %v3971 = vpop.f32.mrf.mxu0
      %v3972 = vadd.f32 0.0, %v3971
      %v3973 = vpop.f32.mrf.mxu0
      %v3974 = vpop.f32.mrf.mxu0
      %v3975 = vadd.f32 0.0, %v3974
      %v3976 = vpop.f32.mrf.mxu0
      %3977 = vmatprep.mubr.bf16.mxu0 0
      %3978 = vmatmul.mubr.bf16.gmra.mxu0 %v3854
      %v3979 = vpop.f32.mrf.mxu0
      %v3980 = vadd.f32 0.0, %v3979
      %v3981 = vpop.f32.mrf.mxu0
      %v3982 = vpop.f32.mrf.mxu0
      %v3983 = vadd.f32 0.0, %v3982
      %v3984 = vpop.f32.mrf.mxu0
      %3985 = vmatprep.mubr.bf16.mxu0 0
      %3986 = vmatmul.mubr.bf16.gmra.mxu0 %v3857
      %v3987 = vpop.f32.mrf.mxu0
      %v3988 = vadd.f32 0.0, %v3987
      %v3989 = vpop.f32.mrf.mxu0
      %v3990 = vpop.f32.mrf.mxu0
      %v3991 = vadd.f32 0.0, %v3990
      %v3992 = vpop.f32.mrf.mxu0
      %3993 = vmatprep.mubr.bf16.mxu0 0
      %3994 = vmatmul.mubr.bf16.gmra.mxu0 %v3860
      %v3995 = vpop.f32.mrf.mxu0
      %v3996 = vadd.f32 0.0, %v3995
      %v3997 = vpop.f32.mrf.mxu0
      %v3998 = vpop.f32.mrf.mxu0
      %v3999 = vadd.f32 0.0, %v3998
      %v4000 = vpop.f32.mrf.mxu0
      %4001 = vmatprep.mubr.bf16.mxu0 0
      %4002 = vmatmul.mubr.bf16.gmra.mxu0 %v3863
      %v4003 = vpop.f32.mrf.mxu0
      %v4004 = vadd.f32 0.0, %v4003
      %v4005 = vpop.f32.mrf.mxu0
      %v4006 = vpop.f32.mrf.mxu0
      %v4007 = vadd.f32 0.0, %v4006
      %v4008 = vpop.f32.mrf.mxu0
      %4009 = vmatprep.mubr.bf16.mxu0 0
      %4010 = vmatmul.mubr.bf16.gmra.mxu0 %v3866
      %v4011 = vpop.f32.mrf.mxu0
      %v4012 = vadd.f32 0.0, %v4011
      %v4013 = vpop.f32.mrf.mxu0
      %v4014 = vpop.f32.mrf.mxu0
      %v4015 = vadd.f32 0.0, %v4014
      %v4016 = vpop.f32.mrf.mxu0
      %4017 = vmatprep.mubr.bf16.mxu0 0
      %4018 = vmatmul.mubr.bf16.gmra.mxu0 %v3869
      %v4019 = vpop.f32.mrf.mxu0
      %v4020 = vadd.f32 0.0, %v4019
      %v4021 = vpop.f32.mrf.mxu0
      %v4022 = vpop.f32.mrf.mxu0
      %v4023 = vadd.f32 0.0, %v4022
      %v4024 = vpop.f32.mrf.mxu0
      %4025 = vmatprep.mubr.bf16.mxu0 0
      %4026 = vmatmul.mubr.bf16.gmra.mxu0 %v3872
      %v4027 = vpop.f32.mrf.mxu0
      %v4028 = vadd.f32 0.0, %v4027
      %v4029 = vpop.f32.mrf.mxu0
      %v4030 = vpop.f32.mrf.mxu0
      %v4031 = vadd.f32 0.0, %v4030
      %v4032 = vpop.f32.mrf.mxu0
      %4033 = vmatprep.mubr.bf16.mxu0 0
      %4034 = vmatmul.mubr.bf16.gmra.mxu0 %v3875
      %v4035 = vpop.f32.mrf.mxu0
      %v4036 = vadd.f32 0.0, %v4035
      %v4037 = vpop.f32.mrf.mxu0
      %v4038 = vpop.f32.mrf.mxu0
      %v4039 = vadd.f32 0.0, %v4038
      %v4040 = vpop.f32.mrf.mxu0
      %4041 = vmatprep.mubr.bf16.mxu0 0
      %4042 = vmatmul.mubr.bf16.gmra.mxu0 %v3878
      %v4043 = vpop.f32.mrf.mxu0
      %v4044 = vadd.f32 0.0, %v4043
      %v4045 = vpop.f32.mrf.mxu0
      %v4046 = vpop.f32.mrf.mxu0
      %v4047 = vadd.f32 0.0, %v4046
      %v4048 = vpop.f32.mrf.mxu0
      %4049 = vmatprep.mubr.bf16.mxu0 0
      %4050 = vmatmul.mubr.bf16.gmra.mxu0 %v3881
      %v4051 = vpop.f32.mrf.mxu0
      %v4052 = vadd.f32 0.0, %v4051
      %v4053 = vpop.f32.mrf.mxu0
      %v4054 = vpop.f32.mrf.mxu0
      %v4055 = vadd.f32 0.0, %v4054
      %v4056 = vpop.f32.mrf.mxu0
      %4057 = vmatprep.mubr.bf16.mxu0 0
      %4058 = vmatmul.mubr.bf16.gmra.mxu0 %v3884
      %v4059 = vpop.f32.mrf.mxu0
      %v4060 = vadd.f32 0.0, %v4059
      %v4061 = vpop.f32.mrf.mxu0
      %v4062 = vpop.f32.mrf.mxu0
      %v4063 = vadd.f32 0.0, %v4062
      %v4064 = vpop.f32.mrf.mxu0
      %4065 = vdwg.mxu0
      %v4066 = vadd.f32 %v3752, %v3924
      %v4067 = vadd.f32 %v3753, %v3927
      %v4068 = vadd.f32 %v3754, %v3932
      %v4069 = vadd.f32 %v3755, %v3935
      %v4070 = vadd.f32 %v3756, %v3940
      %v4071 = vadd.f32 %v3757, %v3943
      %v4072 = vadd.f32 %v3758, %v3948
      %v4073 = vadd.f32 %v3759, %v3951
      %v4074 = vadd.f32 %v3760, %v3956
      %v4075 = vadd.f32 %v3761, %v3959
      %v4076 = vadd.f32 %v3762, %v3964
      %v4077 = vadd.f32 %v3763, %v3967
      %v4078 = vadd.f32 %v3764, %v3972
      %v4079 = vadd.f32 %v3765, %v3975
      %v4080 = vadd.f32 %v3766, %v3980
      %v4081 = vadd.f32 %v3767, %v3983
      %v4082 = vadd.f32 %v3768, %v3988
      %v4083 = vadd.f32 %v3769, %v3991
      %v4084 = vadd.f32 %v3770, %v3996
      %v4085 = vadd.f32 %v3771, %v3999
      %v4086 = vadd.f32 %v3772, %v4004
      %v4087 = vadd.f32 %v3773, %v4007
      %v4088 = vadd.f32 %v3774, %v4012
      %v4089 = vadd.f32 %v3775, %v4015
      %v4090 = vadd.f32 %v3776, %v4020
      %v4091 = vadd.f32 %v3777, %v4023
      %v4092 = vadd.f32 %v3778, %v4028
      %v4093 = vadd.f32 %v3779, %v4031
      %v4094 = vadd.f32 %v3780, %v4036
      %v4095 = vadd.f32 %v3781, %v4039
      %v4096 = vadd.f32 %v3782, %v4044
      %v4097 = vadd.f32 %v3783, %v4047
      %v4098 = vadd.f32 %v3784, %v4052
      %v4099 = vadd.f32 %v3785, %v4055
      %v4100 = vadd.f32 %v3786, %v4060
      %v4101 = vadd.f32 %v3787, %v4063
      %4102 = vst [vmem:[%s197] sm:$0xff] %v4066
      %4103 = vst [vmem:[%s197 + $0x8] sm:$0xff] %v4067
      %4104 = vst [vmem:[%s197 + $0x10] sm:$0xff] %v4068
      %4105 = vst [vmem:[%s197 + $0x18] sm:$0xff] %v4069
      %4106 = vst [vmem:[%s197 + $0x20] sm:$0xff] %v4070
      %4107 = vst [vmem:[%s197 + $0x28] sm:$0xff] %v4071
      %4108 = vst [vmem:[%s197 + $0x30] sm:$0xff] %v4072
      %4109 = vst [vmem:[%s197 + $0x38] sm:$0xff] %v4073
      %4110 = vst [vmem:[%s197 + $0x40] sm:$0xff] %v4074
      %4111 = vst [vmem:[%s197 + $0x48] sm:$0xff] %v4075
      %4112 = vst [vmem:[%s197 + $0x50] sm:$0xff] %v4076
      %4113 = vst [vmem:[%s197 + $0x58] sm:$0xff] %v4077
      %4114 = vst [vmem:[%s197 + $0x60] sm:$0xff] %v4078
      %4115 = vst [vmem:[%s197 + $0x68] sm:$0xff] %v4079
      %4116 = vst [vmem:[%s197 + $0x70] sm:$0xff] %v4080
      %4117 = vst [vmem:[%s197 + $0x78] sm:$0xff] %v4081
      %4118 = vst [vmem:[%s197 + $0x80] sm:$0xff] %v4082
      %4119 = vst [vmem:[%s197 + $0x88] sm:$0xff] %v4083
      %4120 = vst [vmem:[%s197 + $0x90] sm:$0xff] %v4084
      %4121 = vst [vmem:[%s197 + $0x98] sm:$0xff] %v4085
      %4122 = vst [vmem:[%s197 + $0xa0] sm:$0xff] %v4086
      %4123 = vst [vmem:[%s197 + $0xa8] sm:$0xff] %v4087
      %4124 = vst [vmem:[%s197 + $0xb0] sm:$0xff] %v4088
      %4125 = vst [vmem:[%s197 + $0xb8] sm:$0xff] %v4089
      %4126 = vst [vmem:[%s197 + $0xc0] sm:$0xff] %v4090
      %4127 = vst [vmem:[%s197 + $0xc8] sm:$0xff] %v4091
      %4128 = vst [vmem:[%s197 + $0xd0] sm:$0xff] %v4092
      %4129 = vst [vmem:[%s197 + $0xd8] sm:$0xff] %v4093
      %4130 = vst [vmem:[%s197 + $0xe0] sm:$0xff] %v4094
      %4131 = vst [vmem:[%s197 + $0xe8] sm:$0xff] %v4095
      %4132 = vst [vmem:[%s197 + $0xf0] sm:$0xff] %v4096
      %4133 = vst [vmem:[%s197 + $0xf8] sm:$0xff] %v4097
      %4134 = vst [vmem:[%s197 + $0x100] sm:$0xff] %v4098
      %4135 = vst [vmem:[%s197 + $0x108] sm:$0xff] %v4099
      %4136 = vst [vmem:[%s197 + $0x110] sm:$0xff] %v4100
      %4137 = vst [vmem:[%s197 + $0x118] sm:$0xff] %v4101
      %s4138 = smul.u32 36, %s19
      %p4139 = scmp.lt.s32.totalorder %s18, 1
      %s4140 = scalar_select %p4139, %s18, 1
      %p4141 = scmp.lt.s32.totalorder %s4138, 35
      %s4142 = scalar_select %p4141, %s4138, 35
      %p4143 = scmp.lt.s32.totalorder %s20, 0
      %s4144 = scalar_select %p4143, %s20, 0
      %s4145 = sadd.s32 %s4144, %s4142
      %s4146 = smul.addr %s4140, 36
      %s4147 = sadd.s32 %s4145, %s4146
      %s4148 = smul.addr %s4147, 8
      %s4149 = scalar_lea.vmem %s2, %s4148
      // Predicated region
      $region29: #{_forward_impl.1} parent=27 // pred_check
        %p4150 = pneg %p106
      $region30: #{_forward_impl.1} parent=27 // pred_check_branch
        %4152 = sbr.rel (%p4150) target = $region32
      $region31: #{_forward_impl.1} parent=27 // pred_region
        %s4153 = smul.u32 36, %s19
      $region32: #{_forward_impl.1} parent=27 // pred_fallthru
        _
    $region28: #{_forward_impl.1} parent=5 // pred_fallthru
      _
    %p4154 = scmp.le.s32.totalorder 2, %s8
    // Predicated region
    $region33: #{_forward_impl.1} parent=5 // pred_check
      %p4155 = pneg %p4154
    $region34: #{_forward_impl.1} parent=5 // pred_check_branch
      %4157 = sbr.rel (%p4155) target = $region36
    $region35: #{_forward_impl.1} parent=5 // pred_region
      %s4158 = ssub.s32 %s8, 2
      // Predicated region
      $region37: #{_forward_impl.1} parent=35 // pred_check
        %p4159 = pneg %p112
      $region38: #{_forward_impl.1} parent=35 // pred_check_branch
        %4161 = sbr.rel (%p4159) target = $region40
      $region39: #{_forward_impl.1} parent=35 // pred_region
        %s4162 = smul.u32 36, %s22
        %p4163 = scmp.lt.s32.totalorder %s21, 1
        %s4164 = scalar_select %p4163, %s21, 1
        %p4165 = scmp.lt.s32.totalorder %s4162, 35
        %s4166 = scalar_select %p4165, %s4162, 35
        %p4167 = scmp.lt.s32.totalorder %s23, 0
        %s4168 = scalar_select %p4167, %s23, 0
        %s4169 = sadd.s32 %s4168, %s4166
        %s4170 = smul.addr %s4164, 36
        %s4171 = sadd.s32 %s4169, %s4170
        %s4172 = smul.addr %s4171, 8
        %s4173 = scalar_lea.vmem %s2, %s4172
      $region40: #{_forward_impl.1} parent=35 // pred_fallthru
        _
    $region36: #{_forward_impl.1} parent=5 // pred_fallthru
      _
  $region6: #{_forward_impl.1} parent=0 // loop_footer
    %s12 = sadd.s32 1, %s8
  $region7: #{_forward_impl.1} parent=0 // loop_footer_branch
    %7 = sbr.rel target = $region3
  $region8: #{_forward_impl.1} parent=0 // loop_exit
    _

</llo_original>
